<compile_context>
chip_gen: v5e
topology: v5e:2x2
jax: 0.10.0
libtpu: 0.0.40
codegen_flags: <defaults>
</compile_context>

<pallas_src>
import functools
import math

import jax
import jax.numpy as jnp
from jax.experimental import pallas as pl
from jax.experimental.pallas import tpu as pltpu


# ----------------------------- shared math helpers ----------------------------

def _layernorm(x, g, b, eps):
    """LayerNorm over last dim (biased variance, like PyTorch). f32 statistics."""
    mu = jnp.mean(x, axis=-1, keepdims=True)
    xc = x - mu
    var = jnp.mean(xc * xc, axis=-1, keepdims=True)
    return (xc * jax.lax.rsqrt(var + eps)) * g + b


def _gelu_exact(x):
    """Exact (erf-based) GELU, matching HF Bert default 'gelu'."""
    return 0.5 * x * (1.0 + jax.lax.erf(x * (1.0 / math.sqrt(2.0))))


# ----------------------------- fused decoder stack ----------------------------

def _decoder_stack_kernel(
        qe_ref, enc_ref, mask_ref,
        sa_qkv_w, sa_qkv_b, sa_out_w, sa_out_b, sa_ln_g, sa_ln_b,
        ca_qkv_w, ca_qkv_b, ca_out_w, ca_out_b, ca_ln_g, ca_ln_b,
        ff_in_w, ff_in_b, ff_out_w, ff_out_b, ff_ln_g, ff_ln_b,
        o_ref, hs_ref,
        *, nh, dh, scale, eps, mxu_dtype):
    """One grid step = one (batch element, decoder layer).
       hs_ref (VMEM scratch) carries the hidden state across the layer axis."""
    layer = pl.program_id(1)

    @pl.when(layer == 0)
    def _init():
        hs_ref[...] = qe_ref[...]          # LayerNorm'ed query embeddings (precomputed)

    def mha(x, kv, attn_mask, qkv_w, qkv_b, out_w, out_b, ln_g, ln_b):
        """Multi-head attention + output proj + residual + LayerNorm.
           Per-head stacked weights -> no sub-128-lane activation slices, no concat."""
        x_lo = x.astype(mxu_dtype)
        kv_lo = kv.astype(mxu_dtype)
        acc = jnp.zeros((x.shape[0], nh * dh), jnp.float32)
        for h in range(nh):                 # static unroll; nh is small
            q_h = jnp.dot(x_lo, qkv_w[0, h],
                          preferred_element_type=jnp.float32) + qkv_b[0, h]
            k_h = jnp.dot(kv_lo, qkv_w[0, nh + h],
                          preferred_element_type=jnp.float32) + qkv_b[0, nh + h]
            v_h = jnp.dot(kv_lo, qkv_w[0, 2 * nh + h],
                          preferred_element_type=jnp.float32) + qkv_b[0, 2 * nh + h]
            s = jax.lax.dot_general(
                q_h.astype(mxu_dtype), k_h.astype(mxu_dtype),
                (((1,), (1,)), ((), ())),
                preferred_element_type=jnp.float32) * scale            # [T, Skv]
            if attn_mask is not None:
                s = s + attn_mask            # [Tm, Skv] broadcasts over query rows
            s = s - jnp.max(s, axis=-1, keepdims=True)
            e = jnp.exp(s)
            # division moved to EUP via approximate reciprocal (free slot)
            p = e * pl.reciprocal(jnp.sum(e, axis=-1, keepdims=True), approx=True)
            ctx_h = jnp.dot(p.astype(mxu_dtype), v_h.astype(mxu_dtype),
                            preferred_element_type=jnp.float32)        # [T, dh]
            # per-head output projection accumulated in place of concat(ctx) @ Wo
            acc = acc + jnp.dot(ctx_h.astype(mxu_dtype), out_w[0, h],
                                preferred_element_type=jnp.float32)
        out = acc + out_b[0]
        return _layernorm(out + x, ln_g[0], ln_b[0], eps)

    def ffn(x):
        h1 = jnp.dot(x.astype(mxu_dtype), ff_in_w[0],
                     preferred_element_type=jnp.float32) + ff_in_b[0]
        h1 = _gelu_exact(h1)
        y = jnp.dot(h1.astype(mxu_dtype), ff_out_w[0],
                    preferred_element_type=jnp.float32) + ff_out_b[0]
        return _layernorm(y + x, ff_ln_g[0], ff_ln_b[0], eps)

    hs = hs_ref[...]                         # [T, H] f32
    enc = enc_ref[0]                         # [L, H] f32

    hs = mha(hs, hs, None, sa_qkv_w, sa_qkv_b, sa_out_w, sa_out_b, sa_ln_g, sa_ln_b)
    hs = mha(hs, enc, mask_ref[0], ca_qkv_w, ca_qkv_b, ca_out_w, ca_out_b, ca_ln_g, ca_ln_b)
    hs = ffn(hs)

    hs_ref[...] = hs                         # carry to the next layer (VMEM-resident)

    @pl.when(layer == pl.num_programs(1) - 1)
    def _finalize():
        o_ref[0] = hs                        # single HBM writeback per batch element


def decoder_stack(params, qe_ln, enc, cross_mask, nh, dh, scale, eps, mxu_dtype):
    """enc: [B, L, H]; cross_mask: [B, Tm, L] (Tm in {1, T}); qe_ln: [T, H]."""
    B, L, H = enc.shape
    T = qe_ln.shape[0]
    st = params["stack"]
    NL = st["sa_qkv_w"].shape[0]
    I = st["ff_in_w"].shape[2]
    Tm = cross_mask.shape[1]

    weight_order = ("sa_qkv_w", "sa_qkv_b", "sa_out_w", "sa_out_b", "sa_ln_g", "sa_ln_b",
                    "ca_qkv_w", "ca_qkv_b", "ca_out_w", "ca_out_b", "ca_ln_g", "ca_ln_b",
                    "ff_in_w", "ff_in_b", "ff_out_w", "ff_out_b", "ff_ln_g", "ff_ln_b")
    weight_args = [st[k] for k in weight_order]

    def layer_spec(arr):
        tail = arr.shape[1:]
        return pl.BlockSpec((1,) + tail,
                            lambda b, l, _n=len(tail): (l,) + (0,) * _n)

    in_specs = ([pl.BlockSpec((T, H), lambda b, l: (0, 0)),          # query embeddings (LN'ed)
                 pl.BlockSpec((1, L, H), lambda b, l: (b, 0, 0)),    # encoder states (resident per b)
                 pl.BlockSpec((1, Tm, L), lambda b, l: (b, 0, 0))]   # un-broadcast additive mask
                + [layer_spec(a) for a in weight_args])

    def attn_flops(tq, skv):
        return 2 * H * H * (tq + 2 * skv) + 4 * tq * skv * H + 2 * tq * H * H

    flops_step = attn_flops(T, T) + attn_flops(T, L) + 4 * T * H * I
    transc_step = nh * (T * T + T * L) + T * I
    weight_bytes = sum(int(a.nbytes) for a in weight_args)
    bytes_accessed = (int(qe_ln.nbytes) + int(enc.nbytes) + int(cross_mask.nbytes)
                      + B * weight_bytes + B * T * H * 4)
    cost = pl.CostEstimate(flops=int(B * NL * flops_step),
                           transcendentals=int(B * NL * transc_step),
                           bytes_accessed=int(bytes_accessed))

    return pl.pallas_call(
        functools.partial(_decoder_stack_kernel, nh=nh, dh=dh, scale=scale,
                          eps=eps, mxu_dtype=mxu_dtype),
        out_shape=jax.ShapeDtypeStruct((B, T, H), jnp.float32),
        grid=(B, NL),
        in_specs=in_specs,
        out_specs=pl.BlockSpec((1, T, H), lambda b, l: (b, 0, 0)),
        scratch_shapes=[pltpu.VMEM((T, H), jnp.float32)],   # hs resident across layers
        compiler_params=pltpu.CompilerParams(
            dimension_semantics=("parallel", "arbitrary")),
        cost_estimate=cost,
    )(qe_ln, enc, cross_mask, *weight_args)


# ----------------------------- fused output heads -----------------------------

def _head_kernel(hs_ref, enc_ref, hsw_ref, hsb_ref, m2w_ref, m2b_ref, w3_ref,
                 cls_ref, met_ref, *, k8, mxu_dtype):
    """[metric_1 | padded decoder2class] on hs, metric_2 on encoder states,
       tanh(m1 + m2), lane-padded metric_3 matmul.  Lane-dense stores."""
    hs = hs_ref[0]                                   # [T, H]
    enc = enc_ref[0]                                 # [L, H]
    T = hs.shape[0]
    L = enc.shape[0]

    y = jnp.dot(hs.astype(mxu_dtype), hsw_ref[...],
                preferred_element_type=jnp.float32) + hsb_ref[...]       # [T, 8H+CPAD]
    m1 = y[:, :k8]                                   # split at a 128-aligned boundary
    cls_ref[0] = y[:, k8:]                           # [T, CPAD] lane-dense store

    m2 = jnp.dot(enc.astype(mxu_dtype), m2w_ref[...],
                 preferred_element_type=jnp.float32) + m2b_ref[...]      # [L, 8H]

    # TODO(synk): tile over L (grid=(B, cdiv(L, tl))) at production sizes so this
    # [T, L, 8H] broadcast stays within VMEM (esp. v7x's 64 MiB).
    t = jnp.tanh(m1[:, None, :] + m2[None, :, :])    # [T, L, 8H] f32
    met_ref[0] = jnp.dot(t.reshape(T * L, k8).astype(mxu_dtype), w3_ref[...],
                         preferred_element_type=jnp.float32)             # [T*L, MPAD]


def head_block(params, hs, enc, mxu_dtype):
    B, T, H = hs.shape
    L = enc.shape[1]
    K8, CPAD, MPAD = params["k8"], params["cpad"], params["mpad"]

    flops = B * (2 * T * H * (K8 + CPAD) + 2 * L * H * K8 + 2 * T * L * K8 * MPAD)
    transc = B * T * L * K8
    bytes_accessed = (int(hs.nbytes) + int(enc.nbytes)
                      + B * (int(params["hs_head_w"].nbytes) + int(params["m2_w"].nbytes)
                             + int(params["m3_w_pad"].nbytes))
                      + B * T * CPAD * 4 + B * T * L * MPAD * 4)
    cost = pl.CostEstimate(flops=int(flops), transcendentals=int(transc),
                           bytes_accessed=int(bytes_accessed))

    return pl.pallas_call(
        functools.partial(_head_kernel, k8=K8, mxu_dtype=mxu_dtype),
        out_shape=(jax.ShapeDtypeStruct((B, T, CPAD), jnp.float32),
                   jax.ShapeDtypeStruct((B, T * L, MPAD), jnp.float32)),
        grid=(B,),
        in_specs=[
            pl.BlockSpec((1, T, H), lambda b: (b, 0, 0)),
            pl.BlockSpec((1, L, H), lambda b: (b, 0, 0)),
            pl.BlockSpec((H, K8 + CPAD), lambda b: (0, 0)),
            pl.BlockSpec((1, K8 + CPAD), lambda b: (0, 0)),
            pl.BlockSpec((H, K8), lambda b: (0, 0)),
            pl.BlockSpec((1, K8), lambda b: (0, 0)),
            pl.BlockSpec((K8, MPAD), lambda b: (0, 0)),
        ],
        out_specs=(pl.BlockSpec((1, T, CPAD), lambda b: (b, 0, 0)),
                   pl.BlockSpec((1, T * L, MPAD), lambda b: (b, 0, 0))),
        compiler_params=pltpu.CompilerParams(dimension_semantics=("parallel",)),
        cost_estimate=cost,
    )(hs, enc, params["hs_head_w"], params["hs_head_b"],
      params["m2_w"], params["m2_b"], params["m3_w_pad"])


# ----------------------------- parameters -------------------------------------

def init_params(key, cfg, num_triples, num_layers, num_classes):
    H, I = cfg["hidden_size"], cfg["intermediate_size"]
    nh = cfg["num_attention_heads"]
    dh = H // nh
    eps = cfg["layer_norm_eps"]
    mxu_dtype = cfg.get("mxu_dtype", jnp.float32)
    K8 = 8 * H
    CPAD = max(128, ((num_classes + 127) // 128) * 128)   # lane-padded classifier width
    MPAD = 128                                            # lane-padded metric_3 width

    keys = [key]

    def nxt():
        keys[0], sub = jax.random.split(keys[0])
        return sub

    def lin(fi, fo):
        # TODO(synk): orthogonal init (as in the PyTorch reference) if bit-exact init matters.
        return (0.02 * jax.random.normal(nxt(), (fi, fo), jnp.float32),
                jnp.zeros((fo,), jnp.float32))

    def attn_entry():
        qw, qb = lin(H, H)
        kw, kb = lin(H, H)
        vw, vb = lin(H, H)
        ow, ob = lin(H, H)
        # per-head layouts: [3*nh, H, dh] weights (q heads, then k heads, then v heads),
        # [3*nh, 1, dh] biases, [nh, dh, H] output projection.
        qkv_w = jnp.concatenate(
            [w.reshape(H, nh, dh).transpose(1, 0, 2) for w in (qw, kw, vw)], axis=0)
        qkv_b = jnp.concatenate(
            [b.reshape(nh, 1, dh) for b in (qb, kb, vb)], axis=0)
        return dict(qkv_w=qkv_w.astype(mxu_dtype), qkv_b=qkv_b,
                    out_w=ow.reshape(nh, dh, H).astype(mxu_dtype),
                    out_b=ob.reshape(1, H),
                    ln_g=jnp.ones((1, H), jnp.float32),
                    ln_b=jnp.zeros((1, H), jnp.float32))

    per_layer = []
    for _ in range(num_layers):
        sa = attn_entry()
        ca = attn_entry()
        iw, ib = lin(H, I)
        ow2, ob2 = lin(I, H)
        per_layer.append(dict(
            sa=sa, ca=ca,
            ff_in_w=iw.astype(mxu_dtype), ff_in_b=ib.reshape(1, I),
            ff_out_w=ow2.astype(mxu_dtype), ff_out_b=ob2.reshape(1, H),
            ff_ln_g=jnp.ones((1, H), jnp.float32),
            ff_ln_b=jnp.zeros((1, H), jnp.float32)))

    def sf(get):
        return jnp.stack([get(lp) for lp in per_layer], axis=0)

    stack = dict(
        sa_qkv_w=sf(lambda p: p["sa"]["qkv_w"]), sa_qkv_b=sf(lambda p: p["sa"]["qkv_b"]),
        sa_out_w=sf(lambda p: p["sa"]["out_w"]), sa_out_b=sf(lambda p: p["sa"]["out_b"]),
        sa_ln_g=sf(lambda p: p["sa"]["ln_g"]), sa_ln_b=sf(lambda p: p["sa"]["ln_b"]),
        ca_qkv_w=sf(lambda p: p["ca"]["qkv_w"]), ca_qkv_b=sf(lambda p: p["ca"]["qkv_b"]),
        ca_out_w=sf(lambda p: p["ca"]["out_w"]), ca_out_b=sf(lambda p: p["ca"]["out_b"]),
        ca_ln_g=sf(lambda p: p["ca"]["ln_g"]), ca_ln_b=sf(lambda p: p["ca"]["ln_b"]),
        ff_in_w=sf(lambda p: p["ff_in_w"]), ff_in_b=sf(lambda p: p["ff_in_b"]),
        ff_out_w=sf(lambda p: p["ff_out_w"]), ff_out_b=sf(lambda p: p["ff_out_b"]),
        ff_ln_g=sf(lambda p: p["ff_ln_g"]), ff_ln_b=sf(lambda p: p["ff_ln_b"]),
    )

    # Output heads.
    cls_w, cls_b = lin(H, num_classes)
    m1_w, m1_b = lin(H, K8)
    m2_w, m2_b = lin(H, K8)
    m3_wT = 0.02 * jax.random.normal(nxt(), (K8, 8), jnp.float32)   # no bias
    qe = 0.02 * jax.random.normal(nxt(), (num_triples, H), jnp.float32)

    # Query-embedding LayerNorm depends only on parameters (dropout is identity in
    # inference), so precompute it once here — no runtime dispatch for it at all.
    qe_ln = _layernorm(qe, jnp.ones((1, H), jnp.float32),
                       jnp.zeros((1, H), jnp.float32), eps)

    # Fuse decoder2class into the metric_1 projection (lane-padded) and pad metric_3's
    # output to 128 lanes so every head store is full-width (sliced back in the wrapper).
    cls_w_pad = jnp.zeros((H, CPAD), jnp.float32).at[:, :num_classes].set(cls_w)
    cls_b_pad = jnp.zeros((CPAD,), jnp.float32).at[:num_classes].set(cls_b)
    hs_head_w = jnp.concatenate([m1_w, cls_w_pad], axis=1).astype(mxu_dtype)   # [H, 8H+CPAD]
    hs_head_b = jnp.concatenate([m1_b, cls_b_pad], axis=0).reshape(1, -1)
    m3_w_pad = jnp.zeros((K8, MPAD), jnp.float32).at[:, :8].set(m3_wT).astype(mxu_dtype)

    return dict(stack=stack, query_embed_ln=qe_ln,
                hs_head_w=hs_head_w, hs_head_b=hs_head_b,
                m2_w=m2_w.astype(mxu_dtype), m2_b=m2_b.reshape(1, -1),
                m3_w_pad=m3_w_pad,
                num_classes=num_classes, cpad=CPAD, mpad=MPAD, k8=K8,
                num_layers=num_layers, mxu_dtype=mxu_dtype)


# ----------------------------- forward -----------------------------------------

def set_decoder_forward(params, encoder_hidden_states, encoder_attention_mask, cfg):
    B, L, H = encoder_hidden_states.shape
    qe_ln = params["query_embed_ln"]
    T = qe_ln.shape[0]
    nh = cfg["num_attention_heads"]
    dh = H // nh
    scale = 1.0 / math.sqrt(dh)
    eps = cfg["layer_norm_eps"]
    mxu_dtype = params["mxu_dtype"]

    # Additive encoder attention mask, kept UN-broadcast ([B, Tm, L]); the kernel
    # broadcasts over the query axis.  Self-attention has no mask (skipped entirely).
    m = encoder_attention_mask.astype(jnp.float32)
    if m.ndim == 3:
        if m.shape[1] not in (1, T):
            raise ValueError(
                f"3-D encoder_attention_mask second dim must be 1 or {T}, got {m.shape}")
        cross_mask = (1.0 - m) * -10000.0                    # [B, Tm, L]
    elif m.ndim == 2:
        cross_mask = (1.0 - m)[:, None, :] * -10000.0        # [B, 1, L]
    else:
        raise ValueError("encoder_attention_mask must be 2D or 3D")

    enc = encoder_hidden_states.astype(jnp.float32)

    # 1 fused pallas_call for the whole layer stack, 1 for the output heads.
    hs = decoder_stack(params, qe_ln, enc, cross_mask, nh, dh, scale, eps, mxu_dtype)
    cls_pad, met_pad = head_block(params, hs, enc, mxu_dtype)   # [B,T,CPAD], [B,T*L,MPAD]

    C = params["num_classes"]
    class_logits = cls_pad[:, :, :C]
    logits = met_pad[:, :, :8].reshape(B, T, L, 8)

    return (class_logits,
            logits[:, :, :, 0], logits[:, :, :, 1],
            logits[:, :, :, 2], logits[:, :, :, 3],
            logits[:, :, :, 4], logits[:, :, :, 5],
            logits[:, :, :, 6], logits[:, :, :, 7])


# ----------------------------------- main --------------------------------------

if __name__ == "__main__":
    cfg = dict(hidden_size=32, num_attention_heads=4, intermediate_size=64,
               layer_norm_eps=1e-12, hidden_dropout_prob=0.1,
               mxu_dtype=jnp.bfloat16)   # MXU operands bf16; stats/residuals stay f32
    num_generated_triples = 8
    num_layers = 2
    num_classes = 5
    bsz, enc_len = 2, 16

    key = jax.random.PRNGKey(0)
    k_params, k_enc = jax.random.split(key)
    params = init_params(k_params, cfg, num_generated_triples, num_layers, num_classes)

    encoder_hidden_states = jax.random.normal(
        k_enc, (bsz, enc_len, cfg["hidden_size"]), jnp.float32)
    encoder_attention_mask = jnp.ones((bsz, enc_len), jnp.float32)   # 2-D mask branch

    outs = set_decoder_forward(params, encoder_hidden_states, encoder_attention_mask, cfg)
    outs = jax.block_until_ready(outs)

    assert outs[0].shape == (bsz, num_generated_triples, num_classes)
    for o in outs[1:]:
        assert o.shape == (bsz, num_generated_triples, enc_len)
    assert all(bool(jnp.all(jnp.isfinite(o))) for o in outs)
    print("KERNEL_OK")
</pallas_src>

<mosaic_0001>
module attributes {stable_mosaic.version = 11 : i64} {
  func.func @_decoder_stack_kernel(%arg0: i32, %arg1: i32, %arg2: memref<8x32xf32, #tpu.memory_space<vmem>>, %arg3: memref<1x16x32xf32, #tpu.memory_space<vmem>>, %arg4: memref<1x1x16xf32, #tpu.memory_space<vmem>>, %arg5: memref<1x12x32x8xbf16, #tpu.memory_space<vmem>>, %arg6: memref<1x12x1x8xf32, #tpu.memory_space<vmem>>, %arg7: memref<1x4x8x32xbf16, #tpu.memory_space<vmem>>, %arg8: memref<1x1x32xf32, #tpu.memory_space<vmem>>, %arg9: memref<1x1x32xf32, #tpu.memory_space<vmem>>, %arg10: memref<1x1x32xf32, #tpu.memory_space<vmem>>, %arg11: memref<1x12x32x8xbf16, #tpu.memory_space<vmem>>, %arg12: memref<1x12x1x8xf32, #tpu.memory_space<vmem>>, %arg13: memref<1x4x8x32xbf16, #tpu.memory_space<vmem>>, %arg14: memref<1x1x32xf32, #tpu.memory_space<vmem>>, %arg15: memref<1x1x32xf32, #tpu.memory_space<vmem>>, %arg16: memref<1x1x32xf32, #tpu.memory_space<vmem>>, %arg17: memref<1x32x64xbf16, #tpu.memory_space<vmem>>, %arg18: memref<1x1x64xf32, #tpu.memory_space<vmem>>, %arg19: memref<1x64x32xbf16, #tpu.memory_space<vmem>>, %arg20: memref<1x1x32xf32, #tpu.memory_space<vmem>>, %arg21: memref<1x1x32xf32, #tpu.memory_space<vmem>>, %arg22: memref<1x1x32xf32, #tpu.memory_space<vmem>>, %arg23: memref<1x8x32xf32, #tpu.memory_space<vmem>>, %arg24: memref<8x32xf32, #tpu.memory_space<vmem>>) attributes {dimension_semantics = [#tpu.dimension_semantics<parallel>, #tpu.dimension_semantics<arbitrary>], iteration_bounds = array<i64: 2, 2>, scalar_prefetch = 0 : i64, scratch_operands = 1 : i64, tpu.core_type = #tpu.core_type<tc>, window_params = [{pipeline_mode = #tpu.pipeline_mode<synchronous>, transform_indices = @transform_0, window_bounds = array<i64: 8, 32>}, {transform_indices = @transform_1, window_bounds = array<i64: 1, 16, 32>}, {transform_indices = @transform_2, window_bounds = array<i64: 1, 1, 16>}, {transform_indices = @transform_3, window_bounds = array<i64: 1, 12, 32, 8>}, {transform_indices = @transform_4, window_bounds = array<i64: 1, 12, 1, 8>}, {transform_indices = @transform_5, window_bounds = array<i64: 1, 4, 8, 32>}, {transform_indices = @transform_6, window_bounds = array<i64: 1, 1, 32>}, {transform_indices = @transform_7, window_bounds = array<i64: 1, 1, 32>}, {transform_indices = @transform_8, window_bounds = array<i64: 1, 1, 32>}, {transform_indices = @transform_9, window_bounds = array<i64: 1, 12, 32, 8>}, {transform_indices = @transform_10, window_bounds = array<i64: 1, 12, 1, 8>}, {transform_indices = @transform_11, window_bounds = array<i64: 1, 4, 8, 32>}, {transform_indices = @transform_12, window_bounds = array<i64: 1, 1, 32>}, {transform_indices = @transform_13, window_bounds = array<i64: 1, 1, 32>}, {transform_indices = @transform_14, window_bounds = array<i64: 1, 1, 32>}, {transform_indices = @transform_15, window_bounds = array<i64: 1, 32, 64>}, {transform_indices = @transform_16, window_bounds = array<i64: 1, 1, 64>}, {transform_indices = @transform_17, window_bounds = array<i64: 1, 64, 32>}, {transform_indices = @transform_18, window_bounds = array<i64: 1, 1, 32>}, {transform_indices = @transform_19, window_bounds = array<i64: 1, 1, 32>}, {transform_indices = @transform_20, window_bounds = array<i64: 1, 1, 32>}, {transform_indices = @transform_21, window_bounds = array<i64: 1, 8, 32>}]} {
    %c0_i32 = arith.constant 0 : i32
    %0 = arith.cmpi eq, %arg1, %c0_i32 : i32
    %1 = arith.extui %0 : i1 to i32
    %c0_i32_0 = arith.constant 0 : i32
    %2 = arith.cmpi ne, %1, %c0_i32_0 : i32
    scf.if %2 {
      %c0_353 = arith.constant 0 : index
      %c0_354 = arith.constant 0 : index
      %485 = vector.load %arg2[%c0_353, %c0_354] : memref<8x32xf32, #tpu.memory_space<vmem>>, vector<8x32xf32>
      %c0_355 = arith.constant 0 : index
      %c0_356 = arith.constant 0 : index
      %486 = vector.load %arg24[%c0_355, %c0_356] : memref<8x32xf32, #tpu.memory_space<vmem>>, vector<8x32xf32>
      tpu.vector_store %arg24[%c0_355, %c0_356], %485 {strides = array<i32>} : memref<8x32xf32, #tpu.memory_space<vmem>>, vector<8x32xf32>,
    } else {
    }
    %c0 = arith.constant 0 : index
    %c0_1 = arith.constant 0 : index
    %3 = vector.load %arg24[%c0, %c0_1] : memref<8x32xf32, #tpu.memory_space<vmem>>, vector<8x32xf32>
    %c0_2 = arith.constant 0 : index
    %c0_3 = arith.constant 0 : index
    %c0_4 = arith.constant 0 : index
    %4 = vector.load %arg3[%c0_2, %c0_3, %c0_4] : memref<1x16x32xf32, #tpu.memory_space<vmem>>, vector<1x16x32xf32>
    %5 = vector.shape_cast %4 : vector<1x16x32xf32> to vector<16x32xf32>
    %6 = arith.truncf %3 : vector<8x32xf32> to vector<8x32xbf16>
    %7 = arith.truncf %3 : vector<8x32xf32> to vector<8x32xbf16>
    %cst = arith.constant 0.000000e+00 : f32
    %8 = vector.broadcast %cst : f32 to vector<8x32xf32>
    %c0_5 = arith.constant 0 : index
    %c0_6 = arith.constant 0 : index
    %c0_7 = arith.constant 0 : index
    %c0_8 = arith.constant 0 : index
    %9 = vector.load %arg5[%c0_5, %c0_6, %c0_7, %c0_8] : memref<1x12x32x8xbf16, #tpu.memory_space<vmem>>, vector<1x1x32x8xbf16>
    %10 = vector.shape_cast %9 : vector<1x1x32x8xbf16> to vector<32x8xbf16>
    %cst_9 = arith.constant dense<0.000000e+00> : vector<8x8xf32>
    %11 = tpu.matmul %6, %10, %cst_9 {dimension_numbers = #tpu.dot_dimension_numbers<[1], [0], [0], [1], [0, 0, 1, 1], [], []>} : vector<8x32xbf16>, vector<32x8xbf16>, vector<8x8xf32> -> vector<8x8xf32>
    %c0_10 = arith.constant 0 : index
    %c0_11 = arith.constant 0 : index
    %c0_12 = arith.constant 0 : index
    %c0_13 = arith.constant 0 : index
    %12 = vector.load %arg6[%c0_10, %c0_11, %c0_12, %c0_13] : memref<1x12x1x8xf32, #tpu.memory_space<vmem>>, vector<1x1x1x8xf32>
    %13 = vector.shape_cast %12 : vector<1x1x1x8xf32> to vector<1x8xf32>
    %14 = vector.broadcast %13 : vector<1x8xf32> to vector<8x8xf32>
    %15 = arith.addf %11, %14 : vector<8x8xf32>
    %c0_14 = arith.constant 0 : index
    %c4 = arith.constant 4 : index
    %c0_15 = arith.constant 0 : index
    %c0_16 = arith.constant 0 : index
    %16 = vector.load %arg5[%c0_14, %c4, %c0_15, %c0_16] : memref<1x12x32x8xbf16, #tpu.memory_space<vmem>>, vector<1x1x32x8xbf16>
    %17 = vector.shape_cast %16 : vector<1x1x32x8xbf16> to vector<32x8xbf16>
    %cst_17 = arith.constant dense<0.000000e+00> : vector<8x8xf32>
    %18 = tpu.matmul %7, %17, %cst_17 {dimension_numbers = #tpu.dot_dimension_numbers<[1], [0], [0], [1], [0, 0, 1, 1], [], []>} : vector<8x32xbf16>, vector<32x8xbf16>, vector<8x8xf32> -> vector<8x8xf32>
    %c0_18 = arith.constant 0 : index
    %c4_19 = arith.constant 4 : index
    %c0_20 = arith.constant 0 : index
    %c0_21 = arith.constant 0 : index
    %19 = vector.load %arg6[%c0_18, %c4_19, %c0_20, %c0_21] : memref<1x12x1x8xf32, #tpu.memory_space<vmem>>, vector<1x1x1x8xf32>
    %20 = vector.shape_cast %19 : vector<1x1x1x8xf32> to vector<1x8xf32>
    %21 = vector.broadcast %20 : vector<1x8xf32> to vector<8x8xf32>
    %22 = arith.addf %18, %21 : vector<8x8xf32>
    %c0_22 = arith.constant 0 : index
    %c8 = arith.constant 8 : index
    %c0_23 = arith.constant 0 : index
    %c0_24 = arith.constant 0 : index
    %23 = vector.load %arg5[%c0_22, %c8, %c0_23, %c0_24] : memref<1x12x32x8xbf16, #tpu.memory_space<vmem>>, vector<1x1x32x8xbf16>
    %24 = vector.shape_cast %23 : vector<1x1x32x8xbf16> to vector<32x8xbf16>
    %cst_25 = arith.constant dense<0.000000e+00> : vector<8x8xf32>
    %25 = tpu.matmul %7, %24, %cst_25 {dimension_numbers = #tpu.dot_dimension_numbers<[1], [0], [0], [1], [0, 0, 1, 1], [], []>} : vector<8x32xbf16>, vector<32x8xbf16>, vector<8x8xf32> -> vector<8x8xf32>
    %c0_26 = arith.constant 0 : index
    %c8_27 = arith.constant 8 : index
    %c0_28 = arith.constant 0 : index
    %c0_29 = arith.constant 0 : index
    %26 = vector.load %arg6[%c0_26, %c8_27, %c0_28, %c0_29] : memref<1x12x1x8xf32, #tpu.memory_space<vmem>>, vector<1x1x1x8xf32>
    %27 = vector.shape_cast %26 : vector<1x1x1x8xf32> to vector<1x8xf32>
    %28 = vector.broadcast %27 : vector<1x8xf32> to vector<8x8xf32>
    %29 = arith.addf %25, %28 : vector<8x8xf32>
    %30 = arith.truncf %15 : vector<8x8xf32> to vector<8x8xbf16>
    %31 = arith.truncf %22 : vector<8x8xf32> to vector<8x8xbf16>
    %cst_30 = arith.constant dense<0.000000e+00> : vector<8x8xf32>
    %32 = tpu.matmul %30, %31, %cst_30 {dimension_numbers = #tpu.dot_dimension_numbers<[1], [1], [0], [0], [0, 0, 1, 0], [], []>} : vector<8x8xbf16>, vector<8x8xbf16>, vector<8x8xf32> -> vector<8x8xf32>
    %cst_31 = arith.constant 0.353553385 : f32
    %33 = vector.broadcast %cst_31 : f32 to vector<8x8xf32>
    %34 = arith.mulf %32, %33 : vector<8x8xf32>
    %cst_32 = arith.constant dense<0xFF800000> : vector<8xf32>
    %35 = vector.multi_reduction <maximumf>, %34, %cst_32 [1] : vector<8x8xf32> to vector<8xf32>
    %36 = vector.shape_cast %35 : vector<8xf32> to vector<8x1xf32>
    %37 = vector.broadcast %36 : vector<8x1xf32> to vector<8x8xf32>
    %38 = arith.subf %34, %37 : vector<8x8xf32>
    %39 = math.exp %38 : vector<8x8xf32>
    %cst_33 = arith.constant dense<0.000000e+00> : vector<8xf32>
    %40 = vector.multi_reduction <add>, %39, %cst_33 [1] : vector<8x8xf32> to vector<8xf32>
    %41 = vector.shape_cast %40 : vector<8xf32> to vector<8x1xf32>
    %42 = tpu.reciprocal %41 {approx = true} : vector<8x1xf32> -> vector<8x1xf32>
    %43 = vector.broadcast %42 : vector<8x1xf32> to vector<8x8xf32>
    %44 = arith.mulf %39, %43 : vector<8x8xf32>
    %45 = arith.truncf %44 : vector<8x8xf32> to vector<8x8xbf16>
    %46 = arith.truncf %29 : vector<8x8xf32> to vector<8x8xbf16>
    %cst_34 = arith.constant dense<0.000000e+00> : vector<8x8xf32>
    %47 = tpu.matmul %45, %46, %cst_34 {dimension_numbers = #tpu.dot_dimension_numbers<[1], [0], [0], [1], [0, 0, 1, 1], [], []>} : vector<8x8xbf16>, vector<8x8xbf16>, vector<8x8xf32> -> vector<8x8xf32>
    %48 = arith.truncf %47 : vector<8x8xf32> to vector<8x8xbf16>
    %c0_35 = arith.constant 0 : index
    %c0_36 = arith.constant 0 : index
    %c0_37 = arith.constant 0 : index
    %c0_38 = arith.constant 0 : index
    %49 = vector.load %arg7[%c0_35, %c0_36, %c0_37, %c0_38] : memref<1x4x8x32xbf16, #tpu.memory_space<vmem>>, vector<1x1x8x32xbf16>
    %50 = vector.shape_cast %49 : vector<1x1x8x32xbf16> to vector<8x32xbf16>
    %cst_39 = arith.constant dense<0.000000e+00> : vector<8x32xf32>
    %51 = tpu.matmul %48, %50, %cst_39 {dimension_numbers = #tpu.dot_dimension_numbers<[1], [0], [0], [1], [0, 0, 1, 1], [], []>} : vector<8x8xbf16>, vector<8x32xbf16>, vector<8x32xf32> -> vector<8x32xf32>
    %52 = arith.addf %8, %51 : vector<8x32xf32>
    %c0_40 = arith.constant 0 : index
    %c1 = arith.constant 1 : index
    %c0_41 = arith.constant 0 : index
    %c0_42 = arith.constant 0 : index
    %53 = vector.load %arg5[%c0_40, %c1, %c0_41, %c0_42] : memref<1x12x32x8xbf16, #tpu.memory_space<vmem>>, vector<1x1x32x8xbf16>
    %54 = vector.shape_cast %53 : vector<1x1x32x8xbf16> to vector<32x8xbf16>
    %cst_43 = arith.constant dense<0.000000e+00> : vector<8x8xf32>
    %55 = tpu.matmul %6, %54, %cst_43 {dimension_numbers = #tpu.dot_dimension_numbers<[1], [0], [0], [1], [0, 0, 1, 1], [], []>} : vector<8x32xbf16>, vector<32x8xbf16>, vector<8x8xf32> -> vector<8x8xf32>
    %c0_44 = arith.constant 0 : index
    %c1_45 = arith.constant 1 : index
    %c0_46 = arith.constant 0 : index
    %c0_47 = arith.constant 0 : index
    %56 = vector.load %arg6[%c0_44, %c1_45, %c0_46, %c0_47] : memref<1x12x1x8xf32, #tpu.memory_space<vmem>>, vector<1x1x1x8xf32>
    %57 = vector.shape_cast %56 : vector<1x1x1x8xf32> to vector<1x8xf32>
    %58 = vector.broadcast %57 : vector<1x8xf32> to vector<8x8xf32>
    %59 = arith.addf %55, %58 : vector<8x8xf32>
    %c0_48 = arith.constant 0 : index
    %c5 = arith.constant 5 : index
    %c0_49 = arith.constant 0 : index
    %c0_50 = arith.constant 0 : index
    %60 = vector.load %arg5[%c0_48, %c5, %c0_49, %c0_50] : memref<1x12x32x8xbf16, #tpu.memory_space<vmem>>, vector<1x1x32x8xbf16>
    %61 = vector.shape_cast %60 : vector<1x1x32x8xbf16> to vector<32x8xbf16>
    %cst_51 = arith.constant dense<0.000000e+00> : vector<8x8xf32>
    %62 = tpu.matmul %7, %61, %cst_51 {dimension_numbers = #tpu.dot_dimension_numbers<[1], [0], [0], [1], [0, 0, 1, 1], [], []>} : vector<8x32xbf16>, vector<32x8xbf16>, vector<8x8xf32> -> vector<8x8xf32>
    %c0_52 = arith.constant 0 : index
    %c5_53 = arith.constant 5 : index
    %c0_54 = arith.constant 0 : index
    %c0_55 = arith.constant 0 : index
    %63 = vector.load %arg6[%c0_52, %c5_53, %c0_54, %c0_55] : memref<1x12x1x8xf32, #tpu.memory_space<vmem>>, vector<1x1x1x8xf32>
    %64 = vector.shape_cast %63 : vector<1x1x1x8xf32> to vector<1x8xf32>
    %65 = vector.broadcast %64 : vector<1x8xf32> to vector<8x8xf32>
    %66 = arith.addf %62, %65 : vector<8x8xf32>
    %c0_56 = arith.constant 0 : index
    %c9 = arith.constant 9 : index
    %c0_57 = arith.constant 0 : index
    %c0_58 = arith.constant 0 : index
    %67 = vector.load %arg5[%c0_56, %c9, %c0_57, %c0_58] : memref<1x12x32x8xbf16, #tpu.memory_space<vmem>>, vector<1x1x32x8xbf16>
    %68 = vector.shape_cast %67 : vector<1x1x32x8xbf16> to vector<32x8xbf16>
    %cst_59 = arith.constant dense<0.000000e+00> : vector<8x8xf32>
    %69 = tpu.matmul %7, %68, %cst_59 {dimension_numbers = #tpu.dot_dimension_numbers<[1], [0], [0], [1], [0, 0, 1, 1], [], []>} : vector<8x32xbf16>, vector<32x8xbf16>, vector<8x8xf32> -> vector<8x8xf32>
    %c0_60 = arith.constant 0 : index
    %c9_61 = arith.constant 9 : index
    %c0_62 = arith.constant 0 : index
    %c0_63 = arith.constant 0 : index
    %70 = vector.load %arg6[%c0_60, %c9_61, %c0_62, %c0_63] : memref<1x12x1x8xf32, #tpu.memory_space<vmem>>, vector<1x1x1x8xf32>
    %71 = vector.shape_cast %70 : vector<1x1x1x8xf32> to vector<1x8xf32>
    %72 = vector.broadcast %71 : vector<1x8xf32> to vector<8x8xf32>
    %73 = arith.addf %69, %72 : vector<8x8xf32>
    %74 = arith.truncf %59 : vector<8x8xf32> to vector<8x8xbf16>
    %75 = arith.truncf %66 : vector<8x8xf32> to vector<8x8xbf16>
    %cst_64 = arith.constant dense<0.000000e+00> : vector<8x8xf32>
    %76 = tpu.matmul %74, %75, %cst_64 {dimension_numbers = #tpu.dot_dimension_numbers<[1], [1], [0], [0], [0, 0, 1, 0], [], []>} : vector<8x8xbf16>, vector<8x8xbf16>, vector<8x8xf32> -> vector<8x8xf32>
    %cst_65 = arith.constant 0.353553385 : f32
    %77 = vector.broadcast %cst_65 : f32 to vector<8x8xf32>
    %78 = arith.mulf %76, %77 : vector<8x8xf32>
    %cst_66 = arith.constant dense<0xFF800000> : vector<8xf32>
    %79 = vector.multi_reduction <maximumf>, %78, %cst_66 [1] : vector<8x8xf32> to vector<8xf32>
    %80 = vector.shape_cast %79 : vector<8xf32> to vector<8x1xf32>
    %81 = vector.broadcast %80 : vector<8x1xf32> to vector<8x8xf32>
    %82 = arith.subf %78, %81 : vector<8x8xf32>
    %83 = math.exp %82 : vector<8x8xf32>
    %cst_67 = arith.constant dense<0.000000e+00> : vector<8xf32>
    %84 = vector.multi_reduction <add>, %83, %cst_67 [1] : vector<8x8xf32> to vector<8xf32>
    %85 = vector.shape_cast %84 : vector<8xf32> to vector<8x1xf32>
    %86 = tpu.reciprocal %85 {approx = true} : vector<8x1xf32> -> vector<8x1xf32>
    %87 = vector.broadcast %86 : vector<8x1xf32> to vector<8x8xf32>
    %88 = arith.mulf %83, %87 : vector<8x8xf32>
    %89 = arith.truncf %88 : vector<8x8xf32> to vector<8x8xbf16>
    %90 = arith.truncf %73 : vector<8x8xf32> to vector<8x8xbf16>
    %cst_68 = arith.constant dense<0.000000e+00> : vector<8x8xf32>
    %91 = tpu.matmul %89, %90, %cst_68 {dimension_numbers = #tpu.dot_dimension_numbers<[1], [0], [0], [1], [0, 0, 1, 1], [], []>} : vector<8x8xbf16>, vector<8x8xbf16>, vector<8x8xf32> -> vector<8x8xf32>
    %92 = arith.truncf %91 : vector<8x8xf32> to vector<8x8xbf16>
    %c0_69 = arith.constant 0 : index
    %c1_70 = arith.constant 1 : index
    %c0_71 = arith.constant 0 : index
    %c0_72 = arith.constant 0 : index
    %93 = vector.load %arg7[%c0_69, %c1_70, %c0_71, %c0_72] : memref<1x4x8x32xbf16, #tpu.memory_space<vmem>>, vector<1x1x8x32xbf16>
    %94 = vector.shape_cast %93 : vector<1x1x8x32xbf16> to vector<8x32xbf16>
    %cst_73 = arith.constant dense<0.000000e+00> : vector<8x32xf32>
    %95 = tpu.matmul %92, %94, %cst_73 {dimension_numbers = #tpu.dot_dimension_numbers<[1], [0], [0], [1], [0, 0, 1, 1], [], []>} : vector<8x8xbf16>, vector<8x32xbf16>, vector<8x32xf32> -> vector<8x32xf32>
    %96 = arith.addf %52, %95 : vector<8x32xf32>
    %c0_74 = arith.constant 0 : index
    %c2 = arith.constant 2 : index
    %c0_75 = arith.constant 0 : index
    %c0_76 = arith.constant 0 : index
    %97 = vector.load %arg5[%c0_74, %c2, %c0_75, %c0_76] : memref<1x12x32x8xbf16, #tpu.memory_space<vmem>>, vector<1x1x32x8xbf16>
    %98 = vector.shape_cast %97 : vector<1x1x32x8xbf16> to vector<32x8xbf16>
    %cst_77 = arith.constant dense<0.000000e+00> : vector<8x8xf32>
    %99 = tpu.matmul %6, %98, %cst_77 {dimension_numbers = #tpu.dot_dimension_numbers<[1], [0], [0], [1], [0, 0, 1, 1], [], []>} : vector<8x32xbf16>, vector<32x8xbf16>, vector<8x8xf32> -> vector<8x8xf32>
    %c0_78 = arith.constant 0 : index
    %c2_79 = arith.constant 2 : index
    %c0_80 = arith.constant 0 : index
    %c0_81 = arith.constant 0 : index
    %100 = vector.load %arg6[%c0_78, %c2_79, %c0_80, %c0_81] : memref<1x12x1x8xf32, #tpu.memory_space<vmem>>, vector<1x1x1x8xf32>
    %101 = vector.shape_cast %100 : vector<1x1x1x8xf32> to vector<1x8xf32>
    %102 = vector.broadcast %101 : vector<1x8xf32> to vector<8x8xf32>
    %103 = arith.addf %99, %102 : vector<8x8xf32>
    %c0_82 = arith.constant 0 : index
    %c6 = arith.constant 6 : index
    %c0_83 = arith.constant 0 : index
    %c0_84 = arith.constant 0 : index
    %104 = vector.load %arg5[%c0_82, %c6, %c0_83, %c0_84] : memref<1x12x32x8xbf16, #tpu.memory_space<vmem>>, vector<1x1x32x8xbf16>
    %105 = vector.shape_cast %104 : vector<1x1x32x8xbf16> to vector<32x8xbf16>
    %cst_85 = arith.constant dense<0.000000e+00> : vector<8x8xf32>
    %106 = tpu.matmul %7, %105, %cst_85 {dimension_numbers = #tpu.dot_dimension_numbers<[1], [0], [0], [1], [0, 0, 1, 1], [], []>} : vector<8x32xbf16>, vector<32x8xbf16>, vector<8x8xf32> -> vector<8x8xf32>
    %c0_86 = arith.constant 0 : index
    %c6_87 = arith.constant 6 : index
    %c0_88 = arith.constant 0 : index
    %c0_89 = arith.constant 0 : index
    %107 = vector.load %arg6[%c0_86, %c6_87, %c0_88, %c0_89] : memref<1x12x1x8xf32, #tpu.memory_space<vmem>>, vector<1x1x1x8xf32>
    %108 = vector.shape_cast %107 : vector<1x1x1x8xf32> to vector<1x8xf32>
    %109 = vector.broadcast %108 : vector<1x8xf32> to vector<8x8xf32>
    %110 = arith.addf %106, %109 : vector<8x8xf32>
    %c0_90 = arith.constant 0 : index
    %c10 = arith.constant 10 : index
    %c0_91 = arith.constant 0 : index
    %c0_92 = arith.constant 0 : index
    %111 = vector.load %arg5[%c0_90, %c10, %c0_91, %c0_92] : memref<1x12x32x8xbf16, #tpu.memory_space<vmem>>, vector<1x1x32x8xbf16>
    %112 = vector.shape_cast %111 : vector<1x1x32x8xbf16> to vector<32x8xbf16>
    %cst_93 = arith.constant dense<0.000000e+00> : vector<8x8xf32>
    %113 = tpu.matmul %7, %112, %cst_93 {dimension_numbers = #tpu.dot_dimension_numbers<[1], [0], [0], [1], [0, 0, 1, 1], [], []>} : vector<8x32xbf16>, vector<32x8xbf16>, vector<8x8xf32> -> vector<8x8xf32>
    %c0_94 = arith.constant 0 : index
    %c10_95 = arith.constant 10 : index
    %c0_96 = arith.constant 0 : index
    %c0_97 = arith.constant 0 : index
    %114 = vector.load %arg6[%c0_94, %c10_95, %c0_96, %c0_97] : memref<1x12x1x8xf32, #tpu.memory_space<vmem>>, vector<1x1x1x8xf32>
    %115 = vector.shape_cast %114 : vector<1x1x1x8xf32> to vector<1x8xf32>
    %116 = vector.broadcast %115 : vector<1x8xf32> to vector<8x8xf32>
    %117 = arith.addf %113, %116 : vector<8x8xf32>
    %118 = arith.truncf %103 : vector<8x8xf32> to vector<8x8xbf16>
    %119 = arith.truncf %110 : vector<8x8xf32> to vector<8x8xbf16>
    %cst_98 = arith.constant dense<0.000000e+00> : vector<8x8xf32>
    %120 = tpu.matmul %118, %119, %cst_98 {dimension_numbers = #tpu.dot_dimension_numbers<[1], [1], [0], [0], [0, 0, 1, 0], [], []>} : vector<8x8xbf16>, vector<8x8xbf16>, vector<8x8xf32> -> vector<8x8xf32>
    %cst_99 = arith.constant 0.353553385 : f32
    %121 = vector.broadcast %cst_99 : f32 to vector<8x8xf32>
    %122 = arith.mulf %120, %121 : vector<8x8xf32>
    %cst_100 = arith.constant dense<0xFF800000> : vector<8xf32>
    %123 = vector.multi_reduction <maximumf>, %122, %cst_100 [1] : vector<8x8xf32> to vector<8xf32>
    %124 = vector.shape_cast %123 : vector<8xf32> to vector<8x1xf32>
    %125 = vector.broadcast %124 : vector<8x1xf32> to vector<8x8xf32>
    %126 = arith.subf %122, %125 : vector<8x8xf32>
    %127 = math.exp %126 : vector<8x8xf32>
    %cst_101 = arith.constant dense<0.000000e+00> : vector<8xf32>
    %128 = vector.multi_reduction <add>, %127, %cst_101 [1] : vector<8x8xf32> to vector<8xf32>
    %129 = vector.shape_cast %128 : vector<8xf32> to vector<8x1xf32>
    %130 = tpu.reciprocal %129 {approx = true} : vector<8x1xf32> -> vector<8x1xf32>
    %131 = vector.broadcast %130 : vector<8x1xf32> to vector<8x8xf32>
    %132 = arith.mulf %127, %131 : vector<8x8xf32>
    %133 = arith.truncf %132 : vector<8x8xf32> to vector<8x8xbf16>
    %134 = arith.truncf %117 : vector<8x8xf32> to vector<8x8xbf16>
    %cst_102 = arith.constant dense<0.000000e+00> : vector<8x8xf32>
    %135 = tpu.matmul %133, %134, %cst_102 {dimension_numbers = #tpu.dot_dimension_numbers<[1], [0], [0], [1], [0, 0, 1, 1], [], []>} : vector<8x8xbf16>, vector<8x8xbf16>, vector<8x8xf32> -> vector<8x8xf32>
    %136 = arith.truncf %135 : vector<8x8xf32> to vector<8x8xbf16>
    %c0_103 = arith.constant 0 : index
    %c2_104 = arith.constant 2 : index
    %c0_105 = arith.constant 0 : index
    %c0_106 = arith.constant 0 : index
    %137 = vector.load %arg7[%c0_103, %c2_104, %c0_105, %c0_106] : memref<1x4x8x32xbf16, #tpu.memory_space<vmem>>, vector<1x1x8x32xbf16>
    %138 = vector.shape_cast %137 : vector<1x1x8x32xbf16> to vector<8x32xbf16>
    %cst_107 = arith.constant dense<0.000000e+00> : vector<8x32xf32>
    %139 = tpu.matmul %136, %138, %cst_107 {dimension_numbers = #tpu.dot_dimension_numbers<[1], [0], [0], [1], [0, 0, 1, 1], [], []>} : vector<8x8xbf16>, vector<8x32xbf16>, vector<8x32xf32> -> vector<8x32xf32>
    %140 = arith.addf %96, %139 : vector<8x32xf32>
    %c0_108 = arith.constant 0 : index
    %c3 = arith.constant 3 : index
    %c0_109 = arith.constant 0 : index
    %c0_110 = arith.constant 0 : index
    %141 = vector.load %arg5[%c0_108, %c3, %c0_109, %c0_110] : memref<1x12x32x8xbf16, #tpu.memory_space<vmem>>, vector<1x1x32x8xbf16>
    %142 = vector.shape_cast %141 : vector<1x1x32x8xbf16> to vector<32x8xbf16>
    %cst_111 = arith.constant dense<0.000000e+00> : vector<8x8xf32>
    %143 = tpu.matmul %6, %142, %cst_111 {dimension_numbers = #tpu.dot_dimension_numbers<[1], [0], [0], [1], [0, 0, 1, 1], [], []>} : vector<8x32xbf16>, vector<32x8xbf16>, vector<8x8xf32> -> vector<8x8xf32>
    %c0_112 = arith.constant 0 : index
    %c3_113 = arith.constant 3 : index
    %c0_114 = arith.constant 0 : index
    %c0_115 = arith.constant 0 : index
    %144 = vector.load %arg6[%c0_112, %c3_113, %c0_114, %c0_115] : memref<1x12x1x8xf32, #tpu.memory_space<vmem>>, vector<1x1x1x8xf32>
    %145 = vector.shape_cast %144 : vector<1x1x1x8xf32> to vector<1x8xf32>
    %146 = vector.broadcast %145 : vector<1x8xf32> to vector<8x8xf32>
    %147 = arith.addf %143, %146 : vector<8x8xf32>
    %c0_116 = arith.constant 0 : index
    %c7 = arith.constant 7 : index
    %c0_117 = arith.constant 0 : index
    %c0_118 = arith.constant 0 : index
    %148 = vector.load %arg5[%c0_116, %c7, %c0_117, %c0_118] : memref<1x12x32x8xbf16, #tpu.memory_space<vmem>>, vector<1x1x32x8xbf16>
    %149 = vector.shape_cast %148 : vector<1x1x32x8xbf16> to vector<32x8xbf16>
    %cst_119 = arith.constant dense<0.000000e+00> : vector<8x8xf32>
    %150 = tpu.matmul %7, %149, %cst_119 {dimension_numbers = #tpu.dot_dimension_numbers<[1], [0], [0], [1], [0, 0, 1, 1], [], []>} : vector<8x32xbf16>, vector<32x8xbf16>, vector<8x8xf32> -> vector<8x8xf32>
    %c0_120 = arith.constant 0 : index
    %c7_121 = arith.constant 7 : index
    %c0_122 = arith.constant 0 : index
    %c0_123 = arith.constant 0 : index
    %151 = vector.load %arg6[%c0_120, %c7_121, %c0_122, %c0_123] : memref<1x12x1x8xf32, #tpu.memory_space<vmem>>, vector<1x1x1x8xf32>
    %152 = vector.shape_cast %151 : vector<1x1x1x8xf32> to vector<1x8xf32>
    %153 = vector.broadcast %152 : vector<1x8xf32> to vector<8x8xf32>
    %154 = arith.addf %150, %153 : vector<8x8xf32>
    %c0_124 = arith.constant 0 : index
    %c11 = arith.constant 11 : index
    %c0_125 = arith.constant 0 : index
    %c0_126 = arith.constant 0 : index
    %155 = vector.load %arg5[%c0_124, %c11, %c0_125, %c0_126] : memref<1x12x32x8xbf16, #tpu.memory_space<vmem>>, vector<1x1x32x8xbf16>
    %156 = vector.shape_cast %155 : vector<1x1x32x8xbf16> to vector<32x8xbf16>
    %cst_127 = arith.constant dense<0.000000e+00> : vector<8x8xf32>
    %157 = tpu.matmul %7, %156, %cst_127 {dimension_numbers = #tpu.dot_dimension_numbers<[1], [0], [0], [1], [0, 0, 1, 1], [], []>} : vector<8x32xbf16>, vector<32x8xbf16>, vector<8x8xf32> -> vector<8x8xf32>
    %c0_128 = arith.constant 0 : index
    %c11_129 = arith.constant 11 : index
    %c0_130 = arith.constant 0 : index
    %c0_131 = arith.constant 0 : index
    %158 = vector.load %arg6[%c0_128, %c11_129, %c0_130, %c0_131] : memref<1x12x1x8xf32, #tpu.memory_space<vmem>>, vector<1x1x1x8xf32>
    %159 = vector.shape_cast %158 : vector<1x1x1x8xf32> to vector<1x8xf32>
    %160 = vector.broadcast %159 : vector<1x8xf32> to vector<8x8xf32>
    %161 = arith.addf %157, %160 : vector<8x8xf32>
    %162 = arith.truncf %147 : vector<8x8xf32> to vector<8x8xbf16>
    %163 = arith.truncf %154 : vector<8x8xf32> to vector<8x8xbf16>
    %cst_132 = arith.constant dense<0.000000e+00> : vector<8x8xf32>
    %164 = tpu.matmul %162, %163, %cst_132 {dimension_numbers = #tpu.dot_dimension_numbers<[1], [1], [0], [0], [0, 0, 1, 0], [], []>} : vector<8x8xbf16>, vector<8x8xbf16>, vector<8x8xf32> -> vector<8x8xf32>
    %cst_133 = arith.constant 0.353553385 : f32
    %165 = vector.broadcast %cst_133 : f32 to vector<8x8xf32>
    %166 = arith.mulf %164, %165 : vector<8x8xf32>
    %cst_134 = arith.constant dense<0xFF800000> : vector<8xf32>
    %167 = vector.multi_reduction <maximumf>, %166, %cst_134 [1] : vector<8x8xf32> to vector<8xf32>
    %168 = vector.shape_cast %167 : vector<8xf32> to vector<8x1xf32>
    %169 = vector.broadcast %168 : vector<8x1xf32> to vector<8x8xf32>
    %170 = arith.subf %166, %169 : vector<8x8xf32>
    %171 = math.exp %170 : vector<8x8xf32>
    %cst_135 = arith.constant dense<0.000000e+00> : vector<8xf32>
    %172 = vector.multi_reduction <add>, %171, %cst_135 [1] : vector<8x8xf32> to vector<8xf32>
    %173 = vector.shape_cast %172 : vector<8xf32> to vector<8x1xf32>
    %174 = tpu.reciprocal %173 {approx = true} : vector<8x1xf32> -> vector<8x1xf32>
    %175 = vector.broadcast %174 : vector<8x1xf32> to vector<8x8xf32>
    %176 = arith.mulf %171, %175 : vector<8x8xf32>
    %177 = arith.truncf %176 : vector<8x8xf32> to vector<8x8xbf16>
    %178 = arith.truncf %161 : vector<8x8xf32> to vector<8x8xbf16>
    %cst_136 = arith.constant dense<0.000000e+00> : vector<8x8xf32>
    %179 = tpu.matmul %177, %178, %cst_136 {dimension_numbers = #tpu.dot_dimension_numbers<[1], [0], [0], [1], [0, 0, 1, 1], [], []>} : vector<8x8xbf16>, vector<8x8xbf16>, vector<8x8xf32> -> vector<8x8xf32>
    %180 = arith.truncf %179 : vector<8x8xf32> to vector<8x8xbf16>
    %c0_137 = arith.constant 0 : index
    %c3_138 = arith.constant 3 : index
    %c0_139 = arith.constant 0 : index
    %c0_140 = arith.constant 0 : index
    %181 = vector.load %arg7[%c0_137, %c3_138, %c0_139, %c0_140] : memref<1x4x8x32xbf16, #tpu.memory_space<vmem>>, vector<1x1x8x32xbf16>
    %182 = vector.shape_cast %181 : vector<1x1x8x32xbf16> to vector<8x32xbf16>
    %cst_141 = arith.constant dense<0.000000e+00> : vector<8x32xf32>
    %183 = tpu.matmul %180, %182, %cst_141 {dimension_numbers = #tpu.dot_dimension_numbers<[1], [0], [0], [1], [0, 0, 1, 1], [], []>} : vector<8x8xbf16>, vector<8x32xbf16>, vector<8x32xf32> -> vector<8x32xf32>
    %184 = arith.addf %140, %183 : vector<8x32xf32>
    %c0_142 = arith.constant 0 : index
    %c0_143 = arith.constant 0 : index
    %c0_144 = arith.constant 0 : index
    %185 = vector.load %arg8[%c0_142, %c0_143, %c0_144] : memref<1x1x32xf32, #tpu.memory_space<vmem>>, vector<1x1x32xf32>
    %186 = vector.shape_cast %185 : vector<1x1x32xf32> to vector<1x32xf32>
    %187 = vector.broadcast %186 : vector<1x32xf32> to vector<8x32xf32>
    %188 = arith.addf %184, %187 : vector<8x32xf32>
    %189 = arith.addf %188, %3 : vector<8x32xf32>
    %c0_145 = arith.constant 0 : index
    %c0_146 = arith.constant 0 : index
    %c0_147 = arith.constant 0 : index
    %190 = vector.load %arg9[%c0_145, %c0_146, %c0_147] : memref<1x1x32xf32, #tpu.memory_space<vmem>>, vector<1x1x32xf32>
    %191 = vector.shape_cast %190 : vector<1x1x32xf32> to vector<1x32xf32>
    %c0_148 = arith.constant 0 : index
    %c0_149 = arith.constant 0 : index
    %c0_150 = arith.constant 0 : index
    %192 = vector.load %arg10[%c0_148, %c0_149, %c0_150] : memref<1x1x32xf32, #tpu.memory_space<vmem>>, vector<1x1x32xf32>
    %193 = vector.shape_cast %192 : vector<1x1x32xf32> to vector<1x32xf32>
    %cst_151 = arith.constant dense<0.000000e+00> : vector<8xf32>
    %194 = vector.multi_reduction <add>, %189, %cst_151 [1] : vector<8x32xf32> to vector<8xf32>
    %195 = vector.shape_cast %194 : vector<8xf32> to vector<8x1xf32>
    %cst_152 = arith.constant 3.200000e+01 : f32
    %196 = vector.broadcast %cst_152 : f32 to vector<8x1xf32>
    %197 = arith.divf %195, %196 : vector<8x1xf32>
    %198 = vector.broadcast %197 : vector<8x1xf32> to vector<8x32xf32>
    %199 = arith.subf %189, %198 : vector<8x32xf32>
    %200 = arith.mulf %199, %199 : vector<8x32xf32>
    %cst_153 = arith.constant dense<0.000000e+00> : vector<8xf32>
    %201 = vector.multi_reduction <add>, %200, %cst_153 [1] : vector<8x32xf32> to vector<8xf32>
    %202 = vector.shape_cast %201 : vector<8xf32> to vector<8x1xf32>
    %cst_154 = arith.constant 3.200000e+01 : f32
    %203 = vector.broadcast %cst_154 : f32 to vector<8x1xf32>
    %204 = arith.divf %202, %203 : vector<8x1xf32>
    %cst_155 = arith.constant 9.99999996E-13 : f32
    %205 = vector.broadcast %cst_155 : f32 to vector<8x1xf32>
    %206 = arith.addf %204, %205 : vector<8x1xf32>
    %207 = math.rsqrt %206 : vector<8x1xf32>
    %208 = vector.broadcast %207 : vector<8x1xf32> to vector<8x32xf32>
    %209 = arith.mulf %199, %208 : vector<8x32xf32>
    %210 = vector.broadcast %191 : vector<1x32xf32> to vector<8x32xf32>
    %211 = arith.mulf %209, %210 : vector<8x32xf32>
    %212 = vector.broadcast %193 : vector<1x32xf32> to vector<8x32xf32>
    %213 = arith.addf %211, %212 : vector<8x32xf32>
    %c0_156 = arith.constant 0 : index
    %c0_157 = arith.constant 0 : index
    %c0_158 = arith.constant 0 : index
    %214 = vector.load %arg4[%c0_156, %c0_157, %c0_158] : memref<1x1x16xf32, #tpu.memory_space<vmem>>, vector<1x1x16xf32>
    %215 = vector.shape_cast %214 : vector<1x1x16xf32> to vector<1x16xf32>
    %216 = arith.truncf %213 : vector<8x32xf32> to vector<8x32xbf16>
    %217 = arith.truncf %5 : vector<16x32xf32> to vector<16x32xbf16>
    %cst_159 = arith.constant 0.000000e+00 : f32
    %218 = vector.broadcast %cst_159 : f32 to vector<8x32xf32>
    %c0_160 = arith.constant 0 : index
    %c0_161 = arith.constant 0 : index
    %c0_162 = arith.constant 0 : index
    %c0_163 = arith.constant 0 : index
    %219 = vector.load %arg11[%c0_160, %c0_161, %c0_162, %c0_163] : memref<1x12x32x8xbf16, #tpu.memory_space<vmem>>, vector<1x1x32x8xbf16>
    %220 = vector.shape_cast %219 : vector<1x1x32x8xbf16> to vector<32x8xbf16>
    %cst_164 = arith.constant dense<0.000000e+00> : vector<8x8xf32>
    %221 = tpu.matmul %216, %220, %cst_164 {dimension_numbers = #tpu.dot_dimension_numbers<[1], [0], [0], [1], [0, 0, 1, 1], [], []>} : vector<8x32xbf16>, vector<32x8xbf16>, vector<8x8xf32> -> vector<8x8xf32>
    %c0_165 = arith.constant 0 : index
    %c0_166 = arith.constant 0 : index
    %c0_167 = arith.constant 0 : index
    %c0_168 = arith.constant 0 : index
    %222 = vector.load %arg12[%c0_165, %c0_166, %c0_167, %c0_168] : memref<1x12x1x8xf32, #tpu.memory_space<vmem>>, vector<1x1x1x8xf32>
    %223 = vector.shape_cast %222 : vector<1x1x1x8xf32> to vector<1x8xf32>
    %224 = vector.broadcast %223 : vector<1x8xf32> to vector<8x8xf32>
    %225 = arith.addf %221, %224 : vector<8x8xf32>
    %c0_169 = arith.constant 0 : index
    %c4_170 = arith.constant 4 : index
    %c0_171 = arith.constant 0 : index
    %c0_172 = arith.constant 0 : index
    %226 = vector.load %arg11[%c0_169, %c4_170, %c0_171, %c0_172] : memref<1x12x32x8xbf16, #tpu.memory_space<vmem>>, vector<1x1x32x8xbf16>
    %227 = vector.shape_cast %226 : vector<1x1x32x8xbf16> to vector<32x8xbf16>
    %cst_173 = arith.constant dense<0.000000e+00> : vector<16x8xf32>
    %228 = tpu.matmul %217, %227, %cst_173 {dimension_numbers = #tpu.dot_dimension_numbers<[1], [0], [0], [1], [0, 0, 1, 1], [], []>} : vector<16x32xbf16>, vector<32x8xbf16>, vector<16x8xf32> -> vector<16x8xf32>
    %c0_174 = arith.constant 0 : index
    %c4_175 = arith.constant 4 : index
    %c0_176 = arith.constant 0 : index
    %c0_177 = arith.constant 0 : index
    %229 = vector.load %arg12[%c0_174, %c4_175, %c0_176, %c0_177] : memref<1x12x1x8xf32, #tpu.memory_space<vmem>>, vector<1x1x1x8xf32>
    %230 = vector.shape_cast %229 : vector<1x1x1x8xf32> to vector<1x8xf32>
    %231 = vector.broadcast %230 : vector<1x8xf32> to vector<16x8xf32>
    %232 = arith.addf %228, %231 : vector<16x8xf32>
    %c0_178 = arith.constant 0 : index
    %c8_179 = arith.constant 8 : index
    %c0_180 = arith.constant 0 : index
    %c0_181 = arith.constant 0 : index
    %233 = vector.load %arg11[%c0_178, %c8_179, %c0_180, %c0_181] : memref<1x12x32x8xbf16, #tpu.memory_space<vmem>>, vector<1x1x32x8xbf16>
    %234 = vector.shape_cast %233 : vector<1x1x32x8xbf16> to vector<32x8xbf16>
    %cst_182 = arith.constant dense<0.000000e+00> : vector<16x8xf32>
    %235 = tpu.matmul %217, %234, %cst_182 {dimension_numbers = #tpu.dot_dimension_numbers<[1], [0], [0], [1], [0, 0, 1, 1], [], []>} : vector<16x32xbf16>, vector<32x8xbf16>, vector<16x8xf32> -> vector<16x8xf32>
    %c0_183 = arith.constant 0 : index
    %c8_184 = arith.constant 8 : index
    %c0_185 = arith.constant 0 : index
    %c0_186 = arith.constant 0 : index
    %236 = vector.load %arg12[%c0_183, %c8_184, %c0_185, %c0_186] : memref<1x12x1x8xf32, #tpu.memory_space<vmem>>, vector<1x1x1x8xf32>
    %237 = vector.shape_cast %236 : vector<1x1x1x8xf32> to vector<1x8xf32>
    %238 = vector.broadcast %237 : vector<1x8xf32> to vector<16x8xf32>
    %239 = arith.addf %235, %238 : vector<16x8xf32>
    %240 = arith.truncf %225 : vector<8x8xf32> to vector<8x8xbf16>
    %241 = arith.truncf %232 : vector<16x8xf32> to vector<16x8xbf16>
    %cst_187 = arith.constant dense<0.000000e+00> : vector<8x16xf32>
    %242 = tpu.matmul %240, %241, %cst_187 {dimension_numbers = #tpu.dot_dimension_numbers<[1], [1], [0], [0], [0, 0, 1, 0], [], []>} : vector<8x8xbf16>, vector<16x8xbf16>, vector<8x16xf32> -> vector<8x16xf32>
    %cst_188 = arith.constant 0.353553385 : f32
    %243 = vector.broadcast %cst_188 : f32 to vector<8x16xf32>
    %244 = arith.mulf %242, %243 : vector<8x16xf32>
    %245 = vector.broadcast %215 : vector<1x16xf32> to vector<8x16xf32>
    %246 = arith.addf %244, %245 : vector<8x16xf32>
    %cst_189 = arith.constant dense<0xFF800000> : vector<8xf32>
    %247 = vector.multi_reduction <maximumf>, %246, %cst_189 [1] : vector<8x16xf32> to vector<8xf32>
    %248 = vector.shape_cast %247 : vector<8xf32> to vector<8x1xf32>
    %249 = vector.broadcast %248 : vector<8x1xf32> to vector<8x16xf32>
    %250 = arith.subf %246, %249 : vector<8x16xf32>
    %251 = math.exp %250 : vector<8x16xf32>
    %cst_190 = arith.constant dense<0.000000e+00> : vector<8xf32>
    %252 = vector.multi_reduction <add>, %251, %cst_190 [1] : vector<8x16xf32> to vector<8xf32>
    %253 = vector.shape_cast %252 : vector<8xf32> to vector<8x1xf32>
    %254 = tpu.reciprocal %253 {approx = true} : vector<8x1xf32> -> vector<8x1xf32>
    %255 = vector.broadcast %254 : vector<8x1xf32> to vector<8x16xf32>
    %256 = arith.mulf %251, %255 : vector<8x16xf32>
    %257 = arith.truncf %256 : vector<8x16xf32> to vector<8x16xbf16>
    %258 = arith.truncf %239 : vector<16x8xf32> to vector<16x8xbf16>
    %cst_191 = arith.constant dense<0.000000e+00> : vector<8x8xf32>
    %259 = tpu.matmul %257, %258, %cst_191 {dimension_numbers = #tpu.dot_dimension_numbers<[1], [0], [0], [1], [0, 0, 1, 1], [], []>} : vector<8x16xbf16>, vector<16x8xbf16>, vector<8x8xf32> -> vector<8x8xf32>
    %260 = arith.truncf %259 : vector<8x8xf32> to vector<8x8xbf16>
    %c0_192 = arith.constant 0 : index
    %c0_193 = arith.constant 0 : index
    %c0_194 = arith.constant 0 : index
    %c0_195 = arith.constant 0 : index
    %261 = vector.load %arg13[%c0_192, %c0_193, %c0_194, %c0_195] : memref<1x4x8x32xbf16, #tpu.memory_space<vmem>>, vector<1x1x8x32xbf16>
    %262 = vector.shape_cast %261 : vector<1x1x8x32xbf16> to vector<8x32xbf16>
    %cst_196 = arith.constant dense<0.000000e+00> : vector<8x32xf32>
    %263 = tpu.matmul %260, %262, %cst_196 {dimension_numbers = #tpu.dot_dimension_numbers<[1], [0], [0], [1], [0, 0, 1, 1], [], []>} : vector<8x8xbf16>, vector<8x32xbf16>, vector<8x32xf32> -> vector<8x32xf32>
    %264 = arith.addf %218, %263 : vector<8x32xf32>
    %c0_197 = arith.constant 0 : index
    %c1_198 = arith.constant 1 : index
    %c0_199 = arith.constant 0 : index
    %c0_200 = arith.constant 0 : index
    %265 = vector.load %arg11[%c0_197, %c1_198, %c0_199, %c0_200] : memref<1x12x32x8xbf16, #tpu.memory_space<vmem>>, vector<1x1x32x8xbf16>
    %266 = vector.shape_cast %265 : vector<1x1x32x8xbf16> to vector<32x8xbf16>
    %cst_201 = arith.constant dense<0.000000e+00> : vector<8x8xf32>
    %267 = tpu.matmul %216, %266, %cst_201 {dimension_numbers = #tpu.dot_dimension_numbers<[1], [0], [0], [1], [0, 0, 1, 1], [], []>} : vector<8x32xbf16>, vector<32x8xbf16>, vector<8x8xf32> -> vector<8x8xf32>
    %c0_202 = arith.constant 0 : index
    %c1_203 = arith.constant 1 : index
    %c0_204 = arith.constant 0 : index
    %c0_205 = arith.constant 0 : index
    %268 = vector.load %arg12[%c0_202, %c1_203, %c0_204, %c0_205] : memref<1x12x1x8xf32, #tpu.memory_space<vmem>>, vector<1x1x1x8xf32>
    %269 = vector.shape_cast %268 : vector<1x1x1x8xf32> to vector<1x8xf32>
    %270 = vector.broadcast %269 : vector<1x8xf32> to vector<8x8xf32>
    %271 = arith.addf %267, %270 : vector<8x8xf32>
    %c0_206 = arith.constant 0 : index
    %c5_207 = arith.constant 5 : index
    %c0_208 = arith.constant 0 : index
    %c0_209 = arith.constant 0 : index
    %272 = vector.load %arg11[%c0_206, %c5_207, %c0_208, %c0_209] : memref<1x12x32x8xbf16, #tpu.memory_space<vmem>>, vector<1x1x32x8xbf16>
    %273 = vector.shape_cast %272 : vector<1x1x32x8xbf16> to vector<32x8xbf16>
    %cst_210 = arith.constant dense<0.000000e+00> : vector<16x8xf32>
    %274 = tpu.matmul %217, %273, %cst_210 {dimension_numbers = #tpu.dot_dimension_numbers<[1], [0], [0], [1], [0, 0, 1, 1], [], []>} : vector<16x32xbf16>, vector<32x8xbf16>, vector<16x8xf32> -> vector<16x8xf32>
    %c0_211 = arith.constant 0 : index
    %c5_212 = arith.constant 5 : index
    %c0_213 = arith.constant 0 : index
    %c0_214 = arith.constant 0 : index
    %275 = vector.load %arg12[%c0_211, %c5_212, %c0_213, %c0_214] : memref<1x12x1x8xf32, #tpu.memory_space<vmem>>, vector<1x1x1x8xf32>
    %276 = vector.shape_cast %275 : vector<1x1x1x8xf32> to vector<1x8xf32>
    %277 = vector.broadcast %276 : vector<1x8xf32> to vector<16x8xf32>
    %278 = arith.addf %274, %277 : vector<16x8xf32>
    %c0_215 = arith.constant 0 : index
    %c9_216 = arith.constant 9 : index
    %c0_217 = arith.constant 0 : index
    %c0_218 = arith.constant 0 : index
    %279 = vector.load %arg11[%c0_215, %c9_216, %c0_217, %c0_218] : memref<1x12x32x8xbf16, #tpu.memory_space<vmem>>, vector<1x1x32x8xbf16>
    %280 = vector.shape_cast %279 : vector<1x1x32x8xbf16> to vector<32x8xbf16>
    %cst_219 = arith.constant dense<0.000000e+00> : vector<16x8xf32>
    %281 = tpu.matmul %217, %280, %cst_219 {dimension_numbers = #tpu.dot_dimension_numbers<[1], [0], [0], [1], [0, 0, 1, 1], [], []>} : vector<16x32xbf16>, vector<32x8xbf16>, vector<16x8xf32> -> vector<16x8xf32>
    %c0_220 = arith.constant 0 : index
    %c9_221 = arith.constant 9 : index
    %c0_222 = arith.constant 0 : index
    %c0_223 = arith.constant 0 : index
    %282 = vector.load %arg12[%c0_220, %c9_221, %c0_222, %c0_223] : memref<1x12x1x8xf32, #tpu.memory_space<vmem>>, vector<1x1x1x8xf32>
    %283 = vector.shape_cast %282 : vector<1x1x1x8xf32> to vector<1x8xf32>
    %284 = vector.broadcast %283 : vector<1x8xf32> to vector<16x8xf32>
    %285 = arith.addf %281, %284 : vector<16x8xf32>
    %286 = arith.truncf %271 : vector<8x8xf32> to vector<8x8xbf16>
    %287 = arith.truncf %278 : vector<16x8xf32> to vector<16x8xbf16>
    %cst_224 = arith.constant dense<0.000000e+00> : vector<8x16xf32>
    %288 = tpu.matmul %286, %287, %cst_224 {dimension_numbers = #tpu.dot_dimension_numbers<[1], [1], [0], [0], [0, 0, 1, 0], [], []>} : vector<8x8xbf16>, vector<16x8xbf16>, vector<8x16xf32> -> vector<8x16xf32>
    %cst_225 = arith.constant 0.353553385 : f32
    %289 = vector.broadcast %cst_225 : f32 to vector<8x16xf32>
    %290 = arith.mulf %288, %289 : vector<8x16xf32>
    %291 = vector.broadcast %215 : vector<1x16xf32> to vector<8x16xf32>
    %292 = arith.addf %290, %291 : vector<8x16xf32>
    %cst_226 = arith.constant dense<0xFF800000> : vector<8xf32>
    %293 = vector.multi_reduction <maximumf>, %292, %cst_226 [1] : vector<8x16xf32> to vector<8xf32>
    %294 = vector.shape_cast %293 : vector<8xf32> to vector<8x1xf32>
    %295 = vector.broadcast %294 : vector<8x1xf32> to vector<8x16xf32>
    %296 = arith.subf %292, %295 : vector<8x16xf32>
    %297 = math.exp %296 : vector<8x16xf32>
    %cst_227 = arith.constant dense<0.000000e+00> : vector<8xf32>
    %298 = vector.multi_reduction <add>, %297, %cst_227 [1] : vector<8x16xf32> to vector<8xf32>
    %299 = vector.shape_cast %298 : vector<8xf32> to vector<8x1xf32>
    %300 = tpu.reciprocal %299 {approx = true} : vector<8x1xf32> -> vector<8x1xf32>
    %301 = vector.broadcast %300 : vector<8x1xf32> to vector<8x16xf32>
    %302 = arith.mulf %297, %301 : vector<8x16xf32>
    %303 = arith.truncf %302 : vector<8x16xf32> to vector<8x16xbf16>
    %304 = arith.truncf %285 : vector<16x8xf32> to vector<16x8xbf16>
    %cst_228 = arith.constant dense<0.000000e+00> : vector<8x8xf32>
    %305 = tpu.matmul %303, %304, %cst_228 {dimension_numbers = #tpu.dot_dimension_numbers<[1], [0], [0], [1], [0, 0, 1, 1], [], []>} : vector<8x16xbf16>, vector<16x8xbf16>, vector<8x8xf32> -> vector<8x8xf32>
    %306 = arith.truncf %305 : vector<8x8xf32> to vector<8x8xbf16>
    %c0_229 = arith.constant 0 : index
    %c1_230 = arith.constant 1 : index
    %c0_231 = arith.constant 0 : index
    %c0_232 = arith.constant 0 : index
    %307 = vector.load %arg13[%c0_229, %c1_230, %c0_231, %c0_232] : memref<1x4x8x32xbf16, #tpu.memory_space<vmem>>, vector<1x1x8x32xbf16>
    %308 = vector.shape_cast %307 : vector<1x1x8x32xbf16> to vector<8x32xbf16>
    %cst_233 = arith.constant dense<0.000000e+00> : vector<8x32xf32>
    %309 = tpu.matmul %306, %308, %cst_233 {dimension_numbers = #tpu.dot_dimension_numbers<[1], [0], [0], [1], [0, 0, 1, 1], [], []>} : vector<8x8xbf16>, vector<8x32xbf16>, vector<8x32xf32> -> vector<8x32xf32>
    %310 = arith.addf %264, %309 : vector<8x32xf32>
    %c0_234 = arith.constant 0 : index
    %c2_235 = arith.constant 2 : index
    %c0_236 = arith.constant 0 : index
    %c0_237 = arith.constant 0 : index
    %311 = vector.load %arg11[%c0_234, %c2_235, %c0_236, %c0_237] : memref<1x12x32x8xbf16, #tpu.memory_space<vmem>>, vector<1x1x32x8xbf16>
    %312 = vector.shape_cast %311 : vector<1x1x32x8xbf16> to vector<32x8xbf16>
    %cst_238 = arith.constant dense<0.000000e+00> : vector<8x8xf32>
    %313 = tpu.matmul %216, %312, %cst_238 {dimension_numbers = #tpu.dot_dimension_numbers<[1], [0], [0], [1], [0, 0, 1, 1], [], []>} : vector<8x32xbf16>, vector<32x8xbf16>, vector<8x8xf32> -> vector<8x8xf32>
    %c0_239 = arith.constant 0 : index
    %c2_240 = arith.constant 2 : index
    %c0_241 = arith.constant 0 : index
    %c0_242 = arith.constant 0 : index
    %314 = vector.load %arg12[%c0_239, %c2_240, %c0_241, %c0_242] : memref<1x12x1x8xf32, #tpu.memory_space<vmem>>, vector<1x1x1x8xf32>
    %315 = vector.shape_cast %314 : vector<1x1x1x8xf32> to vector<1x8xf32>
    %316 = vector.broadcast %315 : vector<1x8xf32> to vector<8x8xf32>
    %317 = arith.addf %313, %316 : vector<8x8xf32>
    %c0_243 = arith.constant 0 : index
    %c6_244 = arith.constant 6 : index
    %c0_245 = arith.constant 0 : index
    %c0_246 = arith.constant 0 : index
    %318 = vector.load %arg11[%c0_243, %c6_244, %c0_245, %c0_246] : memref<1x12x32x8xbf16, #tpu.memory_space<vmem>>, vector<1x1x32x8xbf16>
    %319 = vector.shape_cast %318 : vector<1x1x32x8xbf16> to vector<32x8xbf16>
    %cst_247 = arith.constant dense<0.000000e+00> : vector<16x8xf32>
    %320 = tpu.matmul %217, %319, %cst_247 {dimension_numbers = #tpu.dot_dimension_numbers<[1], [0], [0], [1], [0, 0, 1, 1], [], []>} : vector<16x32xbf16>, vector<32x8xbf16>, vector<16x8xf32> -> vector<16x8xf32>
    %c0_248 = arith.constant 0 : index
    %c6_249 = arith.constant 6 : index
    %c0_250 = arith.constant 0 : index
    %c0_251 = arith.constant 0 : index
    %321 = vector.load %arg12[%c0_248, %c6_249, %c0_250, %c0_251] : memref<1x12x1x8xf32, #tpu.memory_space<vmem>>, vector<1x1x1x8xf32>
    %322 = vector.shape_cast %321 : vector<1x1x1x8xf32> to vector<1x8xf32>
    %323 = vector.broadcast %322 : vector<1x8xf32> to vector<16x8xf32>
    %324 = arith.addf %320, %323 : vector<16x8xf32>
    %c0_252 = arith.constant 0 : index
    %c10_253 = arith.constant 10 : index
    %c0_254 = arith.constant 0 : index
    %c0_255 = arith.constant 0 : index
    %325 = vector.load %arg11[%c0_252, %c10_253, %c0_254, %c0_255] : memref<1x12x32x8xbf16, #tpu.memory_space<vmem>>, vector<1x1x32x8xbf16>
    %326 = vector.shape_cast %325 : vector<1x1x32x8xbf16> to vector<32x8xbf16>
    %cst_256 = arith.constant dense<0.000000e+00> : vector<16x8xf32>
    %327 = tpu.matmul %217, %326, %cst_256 {dimension_numbers = #tpu.dot_dimension_numbers<[1], [0], [0], [1], [0, 0, 1, 1], [], []>} : vector<16x32xbf16>, vector<32x8xbf16>, vector<16x8xf32> -> vector<16x8xf32>
    %c0_257 = arith.constant 0 : index
    %c10_258 = arith.constant 10 : index
    %c0_259 = arith.constant 0 : index
    %c0_260 = arith.constant 0 : index
    %328 = vector.load %arg12[%c0_257, %c10_258, %c0_259, %c0_260] : memref<1x12x1x8xf32, #tpu.memory_space<vmem>>, vector<1x1x1x8xf32>
    %329 = vector.shape_cast %328 : vector<1x1x1x8xf32> to vector<1x8xf32>
    %330 = vector.broadcast %329 : vector<1x8xf32> to vector<16x8xf32>
    %331 = arith.addf %327, %330 : vector<16x8xf32>
    %332 = arith.truncf %317 : vector<8x8xf32> to vector<8x8xbf16>
    %333 = arith.truncf %324 : vector<16x8xf32> to vector<16x8xbf16>
    %cst_261 = arith.constant dense<0.000000e+00> : vector<8x16xf32>
    %334 = tpu.matmul %332, %333, %cst_261 {dimension_numbers = #tpu.dot_dimension_numbers<[1], [1], [0], [0], [0, 0, 1, 0], [], []>} : vector<8x8xbf16>, vector<16x8xbf16>, vector<8x16xf32> -> vector<8x16xf32>
    %cst_262 = arith.constant 0.353553385 : f32
    %335 = vector.broadcast %cst_262 : f32 to vector<8x16xf32>
    %336 = arith.mulf %334, %335 : vector<8x16xf32>
    %337 = vector.broadcast %215 : vector<1x16xf32> to vector<8x16xf32>
    %338 = arith.addf %336, %337 : vector<8x16xf32>
    %cst_263 = arith.constant dense<0xFF800000> : vector<8xf32>
    %339 = vector.multi_reduction <maximumf>, %338, %cst_263 [1] : vector<8x16xf32> to vector<8xf32>
    %340 = vector.shape_cast %339 : vector<8xf32> to vector<8x1xf32>
    %341 = vector.broadcast %340 : vector<8x1xf32> to vector<8x16xf32>
    %342 = arith.subf %338, %341 : vector<8x16xf32>
    %343 = math.exp %342 : vector<8x16xf32>
    %cst_264 = arith.constant dense<0.000000e+00> : vector<8xf32>
    %344 = vector.multi_reduction <add>, %343, %cst_264 [1] : vector<8x16xf32> to vector<8xf32>
    %345 = vector.shape_cast %344 : vector<8xf32> to vector<8x1xf32>
    %346 = tpu.reciprocal %345 {approx = true} : vector<8x1xf32> -> vector<8x1xf32>
    %347 = vector.broadcast %346 : vector<8x1xf32> to vector<8x16xf32>
    %348 = arith.mulf %343, %347 : vector<8x16xf32>
    %349 = arith.truncf %348 : vector<8x16xf32> to vector<8x16xbf16>
    %350 = arith.truncf %331 : vector<16x8xf32> to vector<16x8xbf16>
    %cst_265 = arith.constant dense<0.000000e+00> : vector<8x8xf32>
    %351 = tpu.matmul %349, %350, %cst_265 {dimension_numbers = #tpu.dot_dimension_numbers<[1], [0], [0], [1], [0, 0, 1, 1], [], []>} : vector<8x16xbf16>, vector<16x8xbf16>, vector<8x8xf32> -> vector<8x8xf32>
    %352 = arith.truncf %351 : vector<8x8xf32> to vector<8x8xbf16>
    %c0_266 = arith.constant 0 : index
    %c2_267 = arith.constant 2 : index
    %c0_268 = arith.constant 0 : index
    %c0_269 = arith.constant 0 : index
    %353 = vector.load %arg13[%c0_266, %c2_267, %c0_268, %c0_269] : memref<1x4x8x32xbf16, #tpu.memory_space<vmem>>, vector<1x1x8x32xbf16>
    %354 = vector.shape_cast %353 : vector<1x1x8x32xbf16> to vector<8x32xbf16>
    %cst_270 = arith.constant dense<0.000000e+00> : vector<8x32xf32>
    %355 = tpu.matmul %352, %354, %cst_270 {dimension_numbers = #tpu.dot_dimension_numbers<[1], [0], [0], [1], [0, 0, 1, 1], [], []>} : vector<8x8xbf16>, vector<8x32xbf16>, vector<8x32xf32> -> vector<8x32xf32>
    %356 = arith.addf %310, %355 : vector<8x32xf32>
    %c0_271 = arith.constant 0 : index
    %c3_272 = arith.constant 3 : index
    %c0_273 = arith.constant 0 : index
    %c0_274 = arith.constant 0 : index
    %357 = vector.load %arg11[%c0_271, %c3_272, %c0_273, %c0_274] : memref<1x12x32x8xbf16, #tpu.memory_space<vmem>>, vector<1x1x32x8xbf16>
    %358 = vector.shape_cast %357 : vector<1x1x32x8xbf16> to vector<32x8xbf16>
    %cst_275 = arith.constant dense<0.000000e+00> : vector<8x8xf32>
    %359 = tpu.matmul %216, %358, %cst_275 {dimension_numbers = #tpu.dot_dimension_numbers<[1], [0], [0], [1], [0, 0, 1, 1], [], []>} : vector<8x32xbf16>, vector<32x8xbf16>, vector<8x8xf32> -> vector<8x8xf32>
    %c0_276 = arith.constant 0 : index
    %c3_277 = arith.constant 3 : index
    %c0_278 = arith.constant 0 : index
    %c0_279 = arith.constant 0 : index
    %360 = vector.load %arg12[%c0_276, %c3_277, %c0_278, %c0_279] : memref<1x12x1x8xf32, #tpu.memory_space<vmem>>, vector<1x1x1x8xf32>
    %361 = vector.shape_cast %360 : vector<1x1x1x8xf32> to vector<1x8xf32>
    %362 = vector.broadcast %361 : vector<1x8xf32> to vector<8x8xf32>
    %363 = arith.addf %359, %362 : vector<8x8xf32>
    %c0_280 = arith.constant 0 : index
    %c7_281 = arith.constant 7 : index
    %c0_282 = arith.constant 0 : index
    %c0_283 = arith.constant 0 : index
    %364 = vector.load %arg11[%c0_280, %c7_281, %c0_282, %c0_283] : memref<1x12x32x8xbf16, #tpu.memory_space<vmem>>, vector<1x1x32x8xbf16>
    %365 = vector.shape_cast %364 : vector<1x1x32x8xbf16> to vector<32x8xbf16>
    %cst_284 = arith.constant dense<0.000000e+00> : vector<16x8xf32>
    %366 = tpu.matmul %217, %365, %cst_284 {dimension_numbers = #tpu.dot_dimension_numbers<[1], [0], [0], [1], [0, 0, 1, 1], [], []>} : vector<16x32xbf16>, vector<32x8xbf16>, vector<16x8xf32> -> vector<16x8xf32>
    %c0_285 = arith.constant 0 : index
    %c7_286 = arith.constant 7 : index
    %c0_287 = arith.constant 0 : index
    %c0_288 = arith.constant 0 : index
    %367 = vector.load %arg12[%c0_285, %c7_286, %c0_287, %c0_288] : memref<1x12x1x8xf32, #tpu.memory_space<vmem>>, vector<1x1x1x8xf32>
    %368 = vector.shape_cast %367 : vector<1x1x1x8xf32> to vector<1x8xf32>
    %369 = vector.broadcast %368 : vector<1x8xf32> to vector<16x8xf32>
    %370 = arith.addf %366, %369 : vector<16x8xf32>
    %c0_289 = arith.constant 0 : index
    %c11_290 = arith.constant 11 : index
    %c0_291 = arith.constant 0 : index
    %c0_292 = arith.constant 0 : index
    %371 = vector.load %arg11[%c0_289, %c11_290, %c0_291, %c0_292] : memref<1x12x32x8xbf16, #tpu.memory_space<vmem>>, vector<1x1x32x8xbf16>
    %372 = vector.shape_cast %371 : vector<1x1x32x8xbf16> to vector<32x8xbf16>
    %cst_293 = arith.constant dense<0.000000e+00> : vector<16x8xf32>
    %373 = tpu.matmul %217, %372, %cst_293 {dimension_numbers = #tpu.dot_dimension_numbers<[1], [0], [0], [1], [0, 0, 1, 1], [], []>} : vector<16x32xbf16>, vector<32x8xbf16>, vector<16x8xf32> -> vector<16x8xf32>
    %c0_294 = arith.constant 0 : index
    %c11_295 = arith.constant 11 : index
    %c0_296 = arith.constant 0 : index
    %c0_297 = arith.constant 0 : index
    %374 = vector.load %arg12[%c0_294, %c11_295, %c0_296, %c0_297] : memref<1x12x1x8xf32, #tpu.memory_space<vmem>>, vector<1x1x1x8xf32>
    %375 = vector.shape_cast %374 : vector<1x1x1x8xf32> to vector<1x8xf32>
    %376 = vector.broadcast %375 : vector<1x8xf32> to vector<16x8xf32>
    %377 = arith.addf %373, %376 : vector<16x8xf32>
    %378 = arith.truncf %363 : vector<8x8xf32> to vector<8x8xbf16>
    %379 = arith.truncf %370 : vector<16x8xf32> to vector<16x8xbf16>
    %cst_298 = arith.constant dense<0.000000e+00> : vector<8x16xf32>
    %380 = tpu.matmul %378, %379, %cst_298 {dimension_numbers = #tpu.dot_dimension_numbers<[1], [1], [0], [0], [0, 0, 1, 0], [], []>} : vector<8x8xbf16>, vector<16x8xbf16>, vector<8x16xf32> -> vector<8x16xf32>
    %cst_299 = arith.constant 0.353553385 : f32
    %381 = vector.broadcast %cst_299 : f32 to vector<8x16xf32>
    %382 = arith.mulf %380, %381 : vector<8x16xf32>
    %383 = vector.broadcast %215 : vector<1x16xf32> to vector<8x16xf32>
    %384 = arith.addf %382, %383 : vector<8x16xf32>
    %cst_300 = arith.constant dense<0xFF800000> : vector<8xf32>
    %385 = vector.multi_reduction <maximumf>, %384, %cst_300 [1] : vector<8x16xf32> to vector<8xf32>
    %386 = vector.shape_cast %385 : vector<8xf32> to vector<8x1xf32>
    %387 = vector.broadcast %386 : vector<8x1xf32> to vector<8x16xf32>
    %388 = arith.subf %384, %387 : vector<8x16xf32>
    %389 = math.exp %388 : vector<8x16xf32>
    %cst_301 = arith.constant dense<0.000000e+00> : vector<8xf32>
    %390 = vector.multi_reduction <add>, %389, %cst_301 [1] : vector<8x16xf32> to vector<8xf32>
    %391 = vector.shape_cast %390 : vector<8xf32> to vector<8x1xf32>
    %392 = tpu.reciprocal %391 {approx = true} : vector<8x1xf32> -> vector<8x1xf32>
    %393 = vector.broadcast %392 : vector<8x1xf32> to vector<8x16xf32>
    %394 = arith.mulf %389, %393 : vector<8x16xf32>
    %395 = arith.truncf %394 : vector<8x16xf32> to vector<8x16xbf16>
    %396 = arith.truncf %377 : vector<16x8xf32> to vector<16x8xbf16>
    %cst_302 = arith.constant dense<0.000000e+00> : vector<8x8xf32>
    %397 = tpu.matmul %395, %396, %cst_302 {dimension_numbers = #tpu.dot_dimension_numbers<[1], [0], [0], [1], [0, 0, 1, 1], [], []>} : vector<8x16xbf16>, vector<16x8xbf16>, vector<8x8xf32> -> vector<8x8xf32>
    %398 = arith.truncf %397 : vector<8x8xf32> to vector<8x8xbf16>
    %c0_303 = arith.constant 0 : index
    %c3_304 = arith.constant 3 : index
    %c0_305 = arith.constant 0 : index
    %c0_306 = arith.constant 0 : index
    %399 = vector.load %arg13[%c0_303, %c3_304, %c0_305, %c0_306] : memref<1x4x8x32xbf16, #tpu.memory_space<vmem>>, vector<1x1x8x32xbf16>
    %400 = vector.shape_cast %399 : vector<1x1x8x32xbf16> to vector<8x32xbf16>
    %cst_307 = arith.constant dense<0.000000e+00> : vector<8x32xf32>
    %401 = tpu.matmul %398, %400, %cst_307 {dimension_numbers = #tpu.dot_dimension_numbers<[1], [0], [0], [1], [0, 0, 1, 1], [], []>} : vector<8x8xbf16>, vector<8x32xbf16>, vector<8x32xf32> -> vector<8x32xf32>
    %402 = arith.addf %356, %401 : vector<8x32xf32>
    %c0_308 = arith.constant 0 : index
    %c0_309 = arith.constant 0 : index
    %c0_310 = arith.constant 0 : index
    %403 = vector.load %arg14[%c0_308, %c0_309, %c0_310] : memref<1x1x32xf32, #tpu.memory_space<vmem>>, vector<1x1x32xf32>
    %404 = vector.shape_cast %403 : vector<1x1x32xf32> to vector<1x32xf32>
    %405 = vector.broadcast %404 : vector<1x32xf32> to vector<8x32xf32>
    %406 = arith.addf %402, %405 : vector<8x32xf32>
    %407 = arith.addf %406, %213 : vector<8x32xf32>
    %c0_311 = arith.constant 0 : index
    %c0_312 = arith.constant 0 : index
    %c0_313 = arith.constant 0 : index
    %408 = vector.load %arg15[%c0_311, %c0_312, %c0_313] : memref<1x1x32xf32, #tpu.memory_space<vmem>>, vector<1x1x32xf32>
    %409 = vector.shape_cast %408 : vector<1x1x32xf32> to vector<1x32xf32>
    %c0_314 = arith.constant 0 : index
    %c0_315 = arith.constant 0 : index
    %c0_316 = arith.constant 0 : index
    %410 = vector.load %arg16[%c0_314, %c0_315, %c0_316] : memref<1x1x32xf32, #tpu.memory_space<vmem>>, vector<1x1x32xf32>
    %411 = vector.shape_cast %410 : vector<1x1x32xf32> to vector<1x32xf32>
    %cst_317 = arith.constant dense<0.000000e+00> : vector<8xf32>
    %412 = vector.multi_reduction <add>, %407, %cst_317 [1] : vector<8x32xf32> to vector<8xf32>
    %413 = vector.shape_cast %412 : vector<8xf32> to vector<8x1xf32>
    %cst_318 = arith.constant 3.200000e+01 : f32
    %414 = vector.broadcast %cst_318 : f32 to vector<8x1xf32>
    %415 = arith.divf %413, %414 : vector<8x1xf32>
    %416 = vector.broadcast %415 : vector<8x1xf32> to vector<8x32xf32>
    %417 = arith.subf %407, %416 : vector<8x32xf32>
    %418 = arith.mulf %417, %417 : vector<8x32xf32>
    %cst_319 = arith.constant dense<0.000000e+00> : vector<8xf32>
    %419 = vector.multi_reduction <add>, %418, %cst_319 [1] : vector<8x32xf32> to vector<8xf32>
    %420 = vector.shape_cast %419 : vector<8xf32> to vector<8x1xf32>
    %cst_320 = arith.constant 3.200000e+01 : f32
    %421 = vector.broadcast %cst_320 : f32 to vector<8x1xf32>
    %422 = arith.divf %420, %421 : vector<8x1xf32>
    %cst_321 = arith.constant 9.99999996E-13 : f32
    %423 = vector.broadcast %cst_321 : f32 to vector<8x1xf32>
    %424 = arith.addf %422, %423 : vector<8x1xf32>
    %425 = math.rsqrt %424 : vector<8x1xf32>
    %426 = vector.broadcast %425 : vector<8x1xf32> to vector<8x32xf32>
    %427 = arith.mulf %417, %426 : vector<8x32xf32>
    %428 = vector.broadcast %409 : vector<1x32xf32> to vector<8x32xf32>
    %429 = arith.mulf %427, %428 : vector<8x32xf32>
    %430 = vector.broadcast %411 : vector<1x32xf32> to vector<8x32xf32>
    %431 = arith.addf %429, %430 : vector<8x32xf32>
    %432 = arith.truncf %431 : vector<8x32xf32> to vector<8x32xbf16>
    %c0_322 = arith.constant 0 : index
    %c0_323 = arith.constant 0 : index
    %c0_324 = arith.constant 0 : index
    %433 = vector.load %arg17[%c0_322, %c0_323, %c0_324] : memref<1x32x64xbf16, #tpu.memory_space<vmem>>, vector<1x32x64xbf16>
    %434 = vector.shape_cast %433 : vector<1x32x64xbf16> to vector<32x64xbf16>
    %cst_325 = arith.constant dense<0.000000e+00> : vector<8x64xf32>
    %435 = tpu.matmul %432, %434, %cst_325 {dimension_numbers = #tpu.dot_dimension_numbers<[1], [0], [0], [1], [0, 0, 1, 1], [], []>} : vector<8x32xbf16>, vector<32x64xbf16>, vector<8x64xf32> -> vector<8x64xf32>
    %c0_326 = arith.constant 0 : index
    %c0_327 = arith.constant 0 : index
    %c0_328 = arith.constant 0 : index
    %436 = vector.load %arg18[%c0_326, %c0_327, %c0_328] : memref<1x1x64xf32, #tpu.memory_space<vmem>>, vector<1x1x64xf32>
    %437 = vector.shape_cast %436 : vector<1x1x64xf32> to vector<1x64xf32>
    %438 = vector.broadcast %437 : vector<1x64xf32> to vector<8x64xf32>
    %439 = arith.addf %435, %438 : vector<8x64xf32>
    %cst_329 = arith.constant 5.000000e-01 : f32
    %440 = vector.broadcast %cst_329 : f32 to vector<8x64xf32>
    %441 = arith.mulf %440, %439 : vector<8x64xf32>
    %cst_330 = arith.constant 0.707106769 : f32
    %442 = vector.broadcast %cst_330 : f32 to vector<8x64xf32>
    %443 = arith.mulf %439, %442 : vector<8x64xf32>
    %444 = math.erf %443 : vector<8x64xf32>
    %cst_331 = arith.constant 1.000000e+00 : f32
    %445 = vector.broadcast %cst_331 : f32 to vector<8x64xf32>
    %446 = arith.addf %445, %444 : vector<8x64xf32>
    %447 = arith.mulf %441, %446 : vector<8x64xf32>
    %448 = arith.truncf %447 : vector<8x64xf32> to vector<8x64xbf16>
    %c0_332 = arith.constant 0 : index
    %c0_333 = arith.constant 0 : index
    %c0_334 = arith.constant 0 : index
    %449 = vector.load %arg19[%c0_332, %c0_333, %c0_334] : memref<1x64x32xbf16, #tpu.memory_space<vmem>>, vector<1x64x32xbf16>
    %450 = vector.shape_cast %449 : vector<1x64x32xbf16> to vector<64x32xbf16>
    %cst_335 = arith.constant dense<0.000000e+00> : vector<8x32xf32>
    %451 = tpu.matmul %448, %450, %cst_335 {dimension_numbers = #tpu.dot_dimension_numbers<[1], [0], [0], [1], [0, 0, 1, 1], [], []>} : vector<8x64xbf16>, vector<64x32xbf16>, vector<8x32xf32> -> vector<8x32xf32>
    %c0_336 = arith.constant 0 : index
    %c0_337 = arith.constant 0 : index
    %c0_338 = arith.constant 0 : index
    %452 = vector.load %arg20[%c0_336, %c0_337, %c0_338] : memref<1x1x32xf32, #tpu.memory_space<vmem>>, vector<1x1x32xf32>
    %453 = vector.shape_cast %452 : vector<1x1x32xf32> to vector<1x32xf32>
    %454 = vector.broadcast %453 : vector<1x32xf32> to vector<8x32xf32>
    %455 = arith.addf %451, %454 : vector<8x32xf32>
    %456 = arith.addf %455, %431 : vector<8x32xf32>
    %c0_339 = arith.constant 0 : index
    %c0_340 = arith.constant 0 : index
    %c0_341 = arith.constant 0 : index
    %457 = vector.load %arg21[%c0_339, %c0_340, %c0_341] : memref<1x1x32xf32, #tpu.memory_space<vmem>>, vector<1x1x32xf32>
    %458 = vector.shape_cast %457 : vector<1x1x32xf32> to vector<1x32xf32>
    %c0_342 = arith.constant 0 : index
    %c0_343 = arith.constant 0 : index
    %c0_344 = arith.constant 0 : index
    %459 = vector.load %arg22[%c0_342, %c0_343, %c0_344] : memref<1x1x32xf32, #tpu.memory_space<vmem>>, vector<1x1x32xf32>
    %460 = vector.shape_cast %459 : vector<1x1x32xf32> to vector<1x32xf32>
    %cst_345 = arith.constant dense<0.000000e+00> : vector<8xf32>
    %461 = vector.multi_reduction <add>, %456, %cst_345 [1] : vector<8x32xf32> to vector<8xf32>
    %462 = vector.shape_cast %461 : vector<8xf32> to vector<8x1xf32>
    %cst_346 = arith.constant 3.200000e+01 : f32
    %463 = vector.broadcast %cst_346 : f32 to vector<8x1xf32>
    %464 = arith.divf %462, %463 : vector<8x1xf32>
    %465 = vector.broadcast %464 : vector<8x1xf32> to vector<8x32xf32>
    %466 = arith.subf %456, %465 : vector<8x32xf32>
    %467 = arith.mulf %466, %466 : vector<8x32xf32>
    %cst_347 = arith.constant dense<0.000000e+00> : vector<8xf32>
    %468 = vector.multi_reduction <add>, %467, %cst_347 [1] : vector<8x32xf32> to vector<8xf32>
    %469 = vector.shape_cast %468 : vector<8xf32> to vector<8x1xf32>
    %cst_348 = arith.constant 3.200000e+01 : f32
    %470 = vector.broadcast %cst_348 : f32 to vector<8x1xf32>
    %471 = arith.divf %469, %470 : vector<8x1xf32>
    %cst_349 = arith.constant 9.99999996E-13 : f32
    %472 = vector.broadcast %cst_349 : f32 to vector<8x1xf32>
    %473 = arith.addf %471, %472 : vector<8x1xf32>
    %474 = math.rsqrt %473 : vector<8x1xf32>
    %475 = vector.broadcast %474 : vector<8x1xf32> to vector<8x32xf32>
    %476 = arith.mulf %466, %475 : vector<8x32xf32>
    %477 = vector.broadcast %458 : vector<1x32xf32> to vector<8x32xf32>
    %478 = arith.mulf %476, %477 : vector<8x32xf32>
    %479 = vector.broadcast %460 : vector<1x32xf32> to vector<8x32xf32>
    %480 = arith.addf %478, %479 : vector<8x32xf32>
    %c0_350 = arith.constant 0 : index
    %c0_351 = arith.constant 0 : index
    %481 = vector.load %arg24[%c0_350, %c0_351] : memref<8x32xf32, #tpu.memory_space<vmem>>, vector<8x32xf32>
    tpu.vector_store %arg24[%c0_350, %c0_351], %480 {strides = array<i32>} : memref<8x32xf32, #tpu.memory_space<vmem>>, vector<8x32xf32>,
    %c1_i32 = arith.constant 1 : i32
    %482 = arith.cmpi eq, %arg1, %c1_i32 : i32
    %483 = arith.extui %482 : i1 to i32
    %c0_i32_352 = arith.constant 0 : i32
    %484 = arith.cmpi ne, %483, %c0_i32_352 : i32
    scf.if %484 {
      %c0_353 = arith.constant 0 : index
      %c0_354 = arith.constant 0 : index
      %c0_355 = arith.constant 0 : index
      %485 = vector.load %arg23[%c0_353, %c0_354, %c0_355] : memref<1x8x32xf32, #tpu.memory_space<vmem>>, vector<1x8x32xf32>
      %486 = vector.shape_cast %485 : vector<1x8x32xf32> to vector<8x32xf32>
      %487 = vector.shape_cast %480 : vector<8x32xf32> to vector<1x8x32xf32>
      tpu.vector_store %arg23[%c0_353, %c0_354, %c0_355], %487 {strides = array<i32>} : memref<1x8x32xf32, #tpu.memory_space<vmem>>, vector<1x8x32xf32>,
    } else {
    }
    return
  }
  func.func @transform_0(%arg0: i32, %arg1: i32) -> (i32, i32) {
    %c0_i32 = arith.constant 0 : i32
    %c0_i32_0 = arith.constant 0 : i32
    %c0_i32_1 = arith.constant 0 : i32
    return %c0_i32, %c0_i32_0 : i32, i32
  }
  func.func @transform_1(%arg0: i32, %arg1: i32) -> (i32, i32, i32) {
    %c0_i32 = arith.constant 0 : i32
    %c0_i32_0 = arith.constant 0 : i32
    %c0_i32_1 = arith.constant 0 : i32
    return %arg0, %c0_i32, %c0_i32_0 : i32, i32, i32
  }
  func.func @transform_2(%arg0: i32, %arg1: i32) -> (i32, i32, i32) {
    %c0_i32 = arith.constant 0 : i32
    %c0_i32_0 = arith.constant 0 : i32
    %c0_i32_1 = arith.constant 0 : i32
    return %arg0, %c0_i32, %c0_i32_0 : i32, i32, i32
  }
  func.func @transform_3(%arg0: i32, %arg1: i32) -> (i32, i32, i32, i32) {
    %c0_i32 = arith.constant 0 : i32
    %c0_i32_0 = arith.constant 0 : i32
    %c0_i32_1 = arith.constant 0 : i32
    %c0_i32_2 = arith.constant 0 : i32
    return %arg1, %c0_i32, %c0_i32_0, %c0_i32_1 : i32, i32, i32, i32
  }
  func.func @transform_4(%arg0: i32, %arg1: i32) -> (i32, i32, i32, i32) {
    %c0_i32 = arith.constant 0 : i32
    %c0_i32_0 = arith.constant 0 : i32
    %c0_i32_1 = arith.constant 0 : i32
    %c0_i32_2 = arith.constant 0 : i32
    return %arg1, %c0_i32, %c0_i32_0, %c0_i32_1 : i32, i32, i32, i32
  }
  func.func @transform_5(%arg0: i32, %arg1: i32) -> (i32, i32, i32, i32) {
    %c0_i32 = arith.constant 0 : i32
    %c0_i32_0 = arith.constant 0 : i32
    %c0_i32_1 = arith.constant 0 : i32
    %c0_i32_2 = arith.constant 0 : i32
    return %arg1, %c0_i32, %c0_i32_0, %c0_i32_1 : i32, i32, i32, i32
  }
  func.func @transform_6(%arg0: i32, %arg1: i32) -> (i32, i32, i32) {
    %c0_i32 = arith.constant 0 : i32
    %c0_i32_0 = arith.constant 0 : i32
    %c0_i32_1 = arith.constant 0 : i32
    return %arg1, %c0_i32, %c0_i32_0 : i32, i32, i32
  }
  func.func @transform_7(%arg0: i32, %arg1: i32) -> (i32, i32, i32) {
    %c0_i32 = arith.constant 0 : i32
    %c0_i32_0 = arith.constant 0 : i32
    %c0_i32_1 = arith.constant 0 : i32
    return %arg1, %c0_i32, %c0_i32_0 : i32, i32, i32
  }
  func.func @transform_8(%arg0: i32, %arg1: i32) -> (i32, i32, i32) {
    %c0_i32 = arith.constant 0 : i32
    %c0_i32_0 = arith.constant 0 : i32
    %c0_i32_1 = arith.constant 0 : i32
    return %arg1, %c0_i32, %c0_i32_0 : i32, i32, i32
  }
  func.func @transform_9(%arg0: i32, %arg1: i32) -> (i32, i32, i32, i32) {
    %c0_i32 = arith.constant 0 : i32
    %c0_i32_0 = arith.constant 0 : i32
    %c0_i32_1 = arith.constant 0 : i32
    %c0_i32_2 = arith.constant 0 : i32
    return %arg1, %c0_i32, %c0_i32_0, %c0_i32_1 : i32, i32, i32, i32
  }
  func.func @transform_10(%arg0: i32, %arg1: i32) -> (i32, i32, i32, i32) {
    %c0_i32 = arith.constant 0 : i32
    %c0_i32_0 = arith.constant 0 : i32
    %c0_i32_1 = arith.constant 0 : i32
    %c0_i32_2 = arith.constant 0 : i32
    return %arg1, %c0_i32, %c0_i32_0, %c0_i32_1 : i32, i32, i32, i32
  }
  func.func @transform_11(%arg0: i32, %arg1: i32) -> (i32, i32, i32, i32) {
    %c0_i32 = arith.constant 0 : i32
    %c0_i32_0 = arith.constant 0 : i32
    %c0_i32_1 = arith.constant 0 : i32
    %c0_i32_2 = arith.constant 0 : i32
    return %arg1, %c0_i32, %c0_i32_0, %c0_i32_1 : i32, i32, i32, i32
  }
  func.func @transform_12(%arg0: i32, %arg1: i32) -> (i32, i32, i32) {
    %c0_i32 = arith.constant 0 : i32
    %c0_i32_0 = arith.constant 0 : i32
    %c0_i32_1 = arith.constant 0 : i32
    return %arg1, %c0_i32, %c0_i32_0 : i32, i32, i32
  }
  func.func @transform_13(%arg0: i32, %arg1: i32) -> (i32, i32, i32) {
    %c0_i32 = arith.constant 0 : i32
    %c0_i32_0 = arith.constant 0 : i32
    %c0_i32_1 = arith.constant 0 : i32
    return %arg1, %c0_i32, %c0_i32_0 : i32, i32, i32
  }
  func.func @transform_14(%arg0: i32, %arg1: i32) -> (i32, i32, i32) {
    %c0_i32 = arith.constant 0 : i32
    %c0_i32_0 = arith.constant 0 : i32
    %c0_i32_1 = arith.constant 0 : i32
    return %arg1, %c0_i32, %c0_i32_0 : i32, i32, i32
  }
  func.func @transform_15(%arg0: i32, %arg1: i32) -> (i32, i32, i32) {
    %c0_i32 = arith.constant 0 : i32
    %c0_i32_0 = arith.constant 0 : i32
    %c0_i32_1 = arith.constant 0 : i32
    return %arg1, %c0_i32, %c0_i32_0 : i32, i32, i32
  }
  func.func @transform_16(%arg0: i32, %arg1: i32) -> (i32, i32, i32) {
    %c0_i32 = arith.constant 0 : i32
    %c0_i32_0 = arith.constant 0 : i32
    %c0_i32_1 = arith.constant 0 : i32
    return %arg1, %c0_i32, %c0_i32_0 : i32, i32, i32
  }
  func.func @transform_17(%arg0: i32, %arg1: i32) -> (i32, i32, i32) {
    %c0_i32 = arith.constant 0 : i32
    %c0_i32_0 = arith.constant 0 : i32
    %c0_i32_1 = arith.constant 0 : i32
    return %arg1, %c0_i32, %c0_i32_0 : i32, i32, i32
  }
  func.func @transform_18(%arg0: i32, %arg1: i32) -> (i32, i32, i32) {
    %c0_i32 = arith.constant 0 : i32
    %c0_i32_0 = arith.constant 0 : i32
    %c0_i32_1 = arith.constant 0 : i32
    return %arg1, %c0_i32, %c0_i32_0 : i32, i32, i32
  }
  func.func @transform_19(%arg0: i32, %arg1: i32) -> (i32, i32, i32) {
    %c0_i32 = arith.constant 0 : i32
    %c0_i32_0 = arith.constant 0 : i32
    %c0_i32_1 = arith.constant 0 : i32
    return %arg1, %c0_i32, %c0_i32_0 : i32, i32, i32
  }
  func.func @transform_20(%arg0: i32, %arg1: i32) -> (i32, i32, i32) {
    %c0_i32 = arith.constant 0 : i32
    %c0_i32_0 = arith.constant 0 : i32
    %c0_i32_1 = arith.constant 0 : i32
    return %arg1, %c0_i32, %c0_i32_0 : i32, i32, i32
  }
  func.func @transform_21(%arg0: i32, %arg1: i32) -> (i32, i32, i32) {
    %c0_i32 = arith.constant 0 : i32
    %c0_i32_0 = arith.constant 0 : i32
    %c0_i32_1 = arith.constant 0 : i32
    return %arg0, %c0_i32, %c0_i32_0 : i32, i32, i32
  }
}

</mosaic_0001>

<llo_original>
// kernel: tpu_custom_call.1
$region0: #{tpu_custom_call.1}
  #allocation0 [shape = 'u32[]', space=smem, size = 0x4, offset = 0x4, fixed_abs, tag = 'smem constant byte address 0x4 - core index']
  #allocation1 [shape = 'u32[72,128]{1,0:T(1,128)}', space=vmem, size = 0x9000, scoped, tag = 'internal scratch']
  #allocation2 [shape = 'f32[8,32]{1,0:T(8,128)}', space=vmem, size = 0x1000, scoped, tag = 'scratch operand']
  %s0 = inlined_call_operand.vmem [shape: f32[8,32], index: 0, kind: input, shape index: {}]
  %s1 = inlined_call_operand.vmem [shape: f32[2,16,32], index: 1, kind: input, shape index: {}]
  %s2 = inlined_call_operand.vmem [shape: f32[2,1,16], index: 2, kind: input, shape index: {}]
  %s3 = inlined_call_operand.vmem [shape: bf16[2,12,32,8], index: 3, kind: input, shape index: {}]
  %s4 = inlined_call_operand.vmem [shape: f32[2,12,1,8], index: 4, kind: input, shape index: {}]
  %s5 = inlined_call_operand.vmem [shape: bf16[2,4,8,32], index: 5, kind: input, shape index: {}]
  %s6 = inlined_call_operand.vmem [shape: f32[2,1,32], index: 6, kind: input, shape index: {}]
  %s7 = inlined_call_operand.vmem [shape: f32[2,1,32], index: 7, kind: input, shape index: {}]
  %s8 = inlined_call_operand.vmem [shape: f32[2,1,32], index: 8, kind: input, shape index: {}]
  %s9 = inlined_call_operand.vmem [shape: bf16[2,12,32,8], index: 9, kind: input, shape index: {}]
  %s10 = inlined_call_operand.vmem [shape: f32[2,12,1,8], index: 10, kind: input, shape index: {}]
  %s11 = inlined_call_operand.vmem [shape: bf16[2,4,8,32], index: 11, kind: input, shape index: {}]
  %s12 = inlined_call_operand.vmem [shape: f32[2,1,32], index: 12, kind: input, shape index: {}]
  %s13 = inlined_call_operand.vmem [shape: f32[2,1,32], index: 13, kind: input, shape index: {}]
  %s14 = inlined_call_operand.vmem [shape: f32[2,1,32], index: 14, kind: input, shape index: {}]
  %s15 = inlined_call_operand.vmem [shape: bf16[2,32,64], index: 15, kind: input, shape index: {}]
  %s16 = inlined_call_operand.vmem [shape: f32[2,1,64], index: 16, kind: input, shape index: {}]
  %s17 = inlined_call_operand.vmem [shape: bf16[2,64,32], index: 17, kind: input, shape index: {}]
  %s18 = inlined_call_operand.vmem [shape: f32[2,1,32], index: 18, kind: input, shape index: {}]
  %s19 = inlined_call_operand.vmem [shape: f32[2,1,32], index: 19, kind: input, shape index: {}]
  %s20 = inlined_call_operand.vmem [shape: f32[2,1,32], index: 20, kind: input, shape index: {}]
  %s21 = inlined_call_operand.hbm [shape: f32[2,8,32], index: 21, kind: output, shape index: {}]
  %s22 = sld [smem:[#allocation0]]
  $region125: #{tpu_custom_call.1} parent=0
    _
  %s24 = ssub.s32 1, %s22
  %s25 = scalar_select 0, %s24, %s22
  $region1: #{tpu_custom_call.1} parent=0
    #allocation3 [shape = 'u8[8192]{0}', space=vmem, size = 0x2000, scoped, tag = 'output window, operand 0']
    #allocation4 [shape = 's32[2]{0}', space=sflag, size = 0x8, scoped, tag = 'scoped memory for tpu_custom_call.1']
    %26 = vsyncpa [#allocation4], 0
    %s27 = scalar_lea.sflag [#allocation4], 1
    %28 = vsyncpa %s27, 0
    loop: start=0, step=1, limit=6
    $region2: #{tpu_custom_call.1} parent=1 // loop_pre_header
      _
    $region3: #{tpu_custom_call.1} parent=1 // loop_header
      %s30 = sphi 0, %s34
      %p31 = scmp.ge.s32.totalorder %s30, 6
      %s37 = sphi 0, %s49
      %s38 = sphi 0, %s45
      %s39 = sphi 0, %s37
      %s40 = sphi 0, %s38
      %s41 = sphi 0, %s39
      %s42 = sphi 0, %s40
      %s50 = sphi 0, %s50
      %s52 = sphi 0, %s50
      %s53 = sphi 0, %s52
      %s67 = sphi 0, %s53
      %s73 = sphi 0, %s75
      %s76 = sphi 0, %s73
      %s77 = sphi 0, %s76
      %s93 = sphi 0, %s77
      %s99 = sphi 0, %s101
      %s102 = sphi 0, %s99
      %s103 = sphi 0, %s102
      %s119 = sphi 0, %s103
      %s125 = sphi 0, %s127
      %s128 = sphi 0, %s125
      %s129 = sphi 0, %s128
      %s145 = sphi 0, %s129
      %s151 = sphi 0, %s153
      %s154 = sphi 0, %s151
      %s155 = sphi 0, %s154
      %s171 = sphi 0, %s155
      %s177 = sphi 0, %s179
      %s180 = sphi 0, %s177
      %s181 = sphi 0, %s180
      %s197 = sphi 0, %s181
      %s203 = sphi 0, %s205
      %s206 = sphi 0, %s203
      %s207 = sphi 0, %s206
      %s223 = sphi 0, %s207
      %s229 = sphi 0, %s231
      %s232 = sphi 0, %s229
      %s233 = sphi 0, %s232
      %s249 = sphi 0, %s233
      %s255 = sphi 0, %s257
      %s258 = sphi 0, %s255
      %s259 = sphi 0, %s258
      %s275 = sphi 0, %s259
      %s281 = sphi 0, %s283
      %s284 = sphi 0, %s281
      %s285 = sphi 0, %s284
      %s301 = sphi 0, %s285
      %s307 = sphi 0, %s309
      %s310 = sphi 0, %s307
      %s311 = sphi 0, %s310
      %s327 = sphi 0, %s311
      %s333 = sphi 0, %s335
      %s336 = sphi 0, %s333
      %s337 = sphi 0, %s336
      %s353 = sphi 0, %s337
      %s359 = sphi 0, %s361
      %s362 = sphi 0, %s359
      %s363 = sphi 0, %s362
      %s379 = sphi 0, %s363
      %s385 = sphi 0, %s387
      %s388 = sphi 0, %s385
      %s389 = sphi 0, %s388
      %s405 = sphi 0, %s389
      %s411 = sphi 0, %s413
      %s414 = sphi 0, %s411
      %s415 = sphi 0, %s414
      %s431 = sphi 0, %s415
      %s437 = sphi 0, %s439
      %s440 = sphi 0, %s437
      %s441 = sphi 0, %s440
      %s457 = sphi 0, %s441
      %s463 = sphi 0, %s465
      %s466 = sphi 0, %s463
      %s467 = sphi 0, %s466
      %s483 = sphi 0, %s467
      %s489 = sphi 0, %s491
      %s492 = sphi 0, %s489
      %s493 = sphi 0, %s492
      %s509 = sphi 0, %s493
      %s515 = sphi 0, %s517
      %s518 = sphi 0, %s515
      %s519 = sphi 0, %s518
      %s535 = sphi 0, %s519
      %s541 = sphi 0, %s543
      %s544 = sphi 0, %s541
      %s545 = sphi 0, %s544
      %s561 = sphi 0, %s545
      %s567 = sphi 0, %s569
      %s570 = sphi 0, %s567
      %s571 = sphi 0, %s570
      %s587 = sphi 0, %s571
      %s593 = sphi 0, %s595
      %s596 = sphi 0, %s593
      %s597 = sphi 0, %s596
      %s613 = sphi 0, %s597
    $region4: #{tpu_custom_call.1} parent=1 // loop_header_branch
      %33 = sbr.rel (%p31) target = $region8
    $region5: #{tpu_custom_call.1} parent=1 // loop_body
      %s35 = ssub.s32 %s30, 1
      %s36 = ssub.s32 %s30, 2
      %s43 = sadd.s32 1, %s38
      %p44 = scmp.ge.s32.totalorder %s43, 2
      %s45 = scalar_select %p44, 0, %s43
      %s46 = sadd.s32 1, %s37
      %s47 = scalar_select %p44, %s46, %s37
      %p48 = scmp.ge.s32.totalorder %s47, 2
      %s49 = scalar_select %p48, 0, %s47
      %s51 = sadd.s32 %s50, 1
      %p54 = scmp.eq.s32.totalorder %s30, 3
      %p55 = scmp.ne.s32.totalorder %s50, %s52
      %p56 = scmp.eq.s32.totalorder %s30, 0
      %p57 = por %p55, %p56
      %p58 = scmp.ne.s32.totalorder %s50, %s52
      %p59 = scmp.eq.s32.totalorder %s35, 3
      %p60 = por %p58, %p59
      %p61 = scmp.ne.s32.totalorder %s52, %s53
      %p62 = scmp.eq.s32.totalorder %s35, 0
      %p63 = por %p61, %p62
      %p64 = scmp.ne.s32.totalorder %s52, %s53
      %p65 = scmp.eq.s32.totalorder %s36, 3
      %p66 = por %p64, %p65
      %p68 = scmp.ne.s32.totalorder %s53, %s67
      %p69 = scmp.eq.s32.totalorder %s36, 0
      %p70 = por %p68, %p69
      %s71 = ssub.s32 %s37, %s49
      %p72 = scmp.eq.s32.totalorder %s71, 0
      %s74 = sadd.s32 %s73, 1
      %s75 = scalar_select %p72, %s73, %s74
      %p78 = pneg %p72
      %p79 = scmp.eq.s32.totalorder %s30, 3
      %p80 = por %p78, %p79
      %p81 = scmp.ne.s32.totalorder %s73, %s76
      %p82 = scmp.eq.s32.totalorder %s30, 0
      %p83 = por %p81, %p82
      %p84 = scmp.ne.s32.totalorder %s73, %s76
      %p85 = scmp.eq.s32.totalorder %s35, 3
      %p86 = por %p84, %p85
      %p87 = scmp.ne.s32.totalorder %s76, %s77
      %p88 = scmp.eq.s32.totalorder %s35, 0
      %p89 = por %p87, %p88
      %p90 = scmp.ne.s32.totalorder %s76, %s77
      %p91 = scmp.eq.s32.totalorder %s36, 3
      %p92 = por %p90, %p91
      %p94 = scmp.ne.s32.totalorder %s77, %s93
      %p95 = scmp.eq.s32.totalorder %s36, 0
      %p96 = por %p94, %p95
      %s97 = ssub.s32 %s37, %s49
      %p98 = scmp.eq.s32.totalorder %s97, 0
      %s100 = sadd.s32 %s99, 1
      %s101 = scalar_select %p98, %s99, %s100
      %p104 = pneg %p98
      %p105 = scmp.eq.s32.totalorder %s30, 3
      %p106 = por %p104, %p105
      %p107 = scmp.ne.s32.totalorder %s99, %s102
      %p108 = scmp.eq.s32.totalorder %s30, 0
      %p109 = por %p107, %p108
      %p110 = scmp.ne.s32.totalorder %s99, %s102
      %p111 = scmp.eq.s32.totalorder %s35, 3
      %p112 = por %p110, %p111
      %p113 = scmp.ne.s32.totalorder %s102, %s103
      %p114 = scmp.eq.s32.totalorder %s35, 0
      %p115 = por %p113, %p114
      %p116 = scmp.ne.s32.totalorder %s102, %s103
      %p117 = scmp.eq.s32.totalorder %s36, 3
      %p118 = por %p116, %p117
      %p120 = scmp.ne.s32.totalorder %s103, %s119
      %p121 = scmp.eq.s32.totalorder %s36, 0
      %p122 = por %p120, %p121
      %s123 = ssub.s32 %s38, %s45
      %p124 = scmp.eq.s32.totalorder %s123, 0
      %s126 = sadd.s32 %s125, 1
      %s127 = scalar_select %p124, %s125, %s126
      %p130 = pneg %p124
      %p131 = scmp.eq.s32.totalorder %s30, 3
      %p132 = por %p130, %p131
      %p133 = scmp.ne.s32.totalorder %s125, %s128
      %p134 = scmp.eq.s32.totalorder %s30, 0
      %p135 = por %p133, %p134
      %p136 = scmp.ne.s32.totalorder %s125, %s128
      %p137 = scmp.eq.s32.totalorder %s35, 3
      %p138 = por %p136, %p137
      %p139 = scmp.ne.s32.totalorder %s128, %s129
      %p140 = scmp.eq.s32.totalorder %s35, 0
      %p141 = por %p139, %p140
      %p142 = scmp.ne.s32.totalorder %s128, %s129
      %p143 = scmp.eq.s32.totalorder %s36, 3
      %p144 = por %p142, %p143
      %p146 = scmp.ne.s32.totalorder %s129, %s145
      %p147 = scmp.eq.s32.totalorder %s36, 0
      %p148 = por %p146, %p147
      %s149 = ssub.s32 %s38, %s45
      %p150 = scmp.eq.s32.totalorder %s149, 0
      %s152 = sadd.s32 %s151, 1
      %s153 = scalar_select %p150, %s151, %s152
      %p156 = pneg %p150
      %p157 = scmp.eq.s32.totalorder %s30, 3
      %p158 = por %p156, %p157
      %p159 = scmp.ne.s32.totalorder %s151, %s154
      %p160 = scmp.eq.s32.totalorder %s30, 0
      %p161 = por %p159, %p160
      %p162 = scmp.ne.s32.totalorder %s151, %s154
      %p163 = scmp.eq.s32.totalorder %s35, 3
      %p164 = por %p162, %p163
      %p165 = scmp.ne.s32.totalorder %s154, %s155
      %p166 = scmp.eq.s32.totalorder %s35, 0
      %p167 = por %p165, %p166
      %p168 = scmp.ne.s32.totalorder %s154, %s155
      %p169 = scmp.eq.s32.totalorder %s36, 3
      %p170 = por %p168, %p169
      %p172 = scmp.ne.s32.totalorder %s155, %s171
      %p173 = scmp.eq.s32.totalorder %s36, 0
      %p174 = por %p172, %p173
      %s175 = ssub.s32 %s38, %s45
      %p176 = scmp.eq.s32.totalorder %s175, 0
      %s178 = sadd.s32 %s177, 1
      %s179 = scalar_select %p176, %s177, %s178
      %p182 = pneg %p176
      %p183 = scmp.eq.s32.totalorder %s30, 3
      %p184 = por %p182, %p183
      %p185 = scmp.ne.s32.totalorder %s177, %s180
      %p186 = scmp.eq.s32.totalorder %s30, 0
      %p187 = por %p185, %p186
      %p188 = scmp.ne.s32.totalorder %s177, %s180
      %p189 = scmp.eq.s32.totalorder %s35, 3
      %p190 = por %p188, %p189
      %p191 = scmp.ne.s32.totalorder %s180, %s181
      %p192 = scmp.eq.s32.totalorder %s35, 0
      %p193 = por %p191, %p192
      %p194 = scmp.ne.s32.totalorder %s180, %s181
      %p195 = scmp.eq.s32.totalorder %s36, 3
      %p196 = por %p194, %p195
      %p198 = scmp.ne.s32.totalorder %s181, %s197
      %p199 = scmp.eq.s32.totalorder %s36, 0
      %p200 = por %p198, %p199
      %s201 = ssub.s32 %s38, %s45
      %p202 = scmp.eq.s32.totalorder %s201, 0
      %s204 = sadd.s32 %s203, 1
      %s205 = scalar_select %p202, %s203, %s204
      %p208 = pneg %p202
      %p209 = scmp.eq.s32.totalorder %s30, 3
      %p210 = por %p208, %p209
      %p211 = scmp.ne.s32.totalorder %s203, %s206
      %p212 = scmp.eq.s32.totalorder %s30, 0
      %p213 = por %p211, %p212
      %p214 = scmp.ne.s32.totalorder %s203, %s206
      %p215 = scmp.eq.s32.totalorder %s35, 3
      %p216 = por %p214, %p215
      %p217 = scmp.ne.s32.totalorder %s206, %s207
      %p218 = scmp.eq.s32.totalorder %s35, 0
      %p219 = por %p217, %p218
      %p220 = scmp.ne.s32.totalorder %s206, %s207
      %p221 = scmp.eq.s32.totalorder %s36, 3
      %p222 = por %p220, %p221
      %p224 = scmp.ne.s32.totalorder %s207, %s223
      %p225 = scmp.eq.s32.totalorder %s36, 0
      %p226 = por %p224, %p225
      %s227 = ssub.s32 %s38, %s45
      %p228 = scmp.eq.s32.totalorder %s227, 0
      %s230 = sadd.s32 %s229, 1
      %s231 = scalar_select %p228, %s229, %s230
      %p234 = pneg %p228
      %p235 = scmp.eq.s32.totalorder %s30, 3
      %p236 = por %p234, %p235
      %p237 = scmp.ne.s32.totalorder %s229, %s232
      %p238 = scmp.eq.s32.totalorder %s30, 0
      %p239 = por %p237, %p238
      %p240 = scmp.ne.s32.totalorder %s229, %s232
      %p241 = scmp.eq.s32.totalorder %s35, 3
      %p242 = por %p240, %p241
      %p243 = scmp.ne.s32.totalorder %s232, %s233
      %p244 = scmp.eq.s32.totalorder %s35, 0
      %p245 = por %p243, %p244
      %p246 = scmp.ne.s32.totalorder %s232, %s233
      %p247 = scmp.eq.s32.totalorder %s36, 3
      %p248 = por %p246, %p247
      %p250 = scmp.ne.s32.totalorder %s233, %s249
      %p251 = scmp.eq.s32.totalorder %s36, 0
      %p252 = por %p250, %p251
      %s253 = ssub.s32 %s38, %s45
      %p254 = scmp.eq.s32.totalorder %s253, 0
      %s256 = sadd.s32 %s255, 1
      %s257 = scalar_select %p254, %s255, %s256
      %p260 = pneg %p254
      %p261 = scmp.eq.s32.totalorder %s30, 3
      %p262 = por %p260, %p261
      %p263 = scmp.ne.s32.totalorder %s255, %s258
      %p264 = scmp.eq.s32.totalorder %s30, 0
      %p265 = por %p263, %p264
      %p266 = scmp.ne.s32.totalorder %s255, %s258
      %p267 = scmp.eq.s32.totalorder %s35, 3
      %p268 = por %p266, %p267
      %p269 = scmp.ne.s32.totalorder %s258, %s259
      %p270 = scmp.eq.s32.totalorder %s35, 0
      %p271 = por %p269, %p270
      %p272 = scmp.ne.s32.totalorder %s258, %s259
      %p273 = scmp.eq.s32.totalorder %s36, 3
      %p274 = por %p272, %p273
      %p276 = scmp.ne.s32.totalorder %s259, %s275
      %p277 = scmp.eq.s32.totalorder %s36, 0
      %p278 = por %p276, %p277
      %s279 = ssub.s32 %s38, %s45
      %p280 = scmp.eq.s32.totalorder %s279, 0
      %s282 = sadd.s32 %s281, 1
      %s283 = scalar_select %p280, %s281, %s282
      %p286 = pneg %p280
      %p287 = scmp.eq.s32.totalorder %s30, 3
      %p288 = por %p286, %p287
      %p289 = scmp.ne.s32.totalorder %s281, %s284
      %p290 = scmp.eq.s32.totalorder %s30, 0
      %p291 = por %p289, %p290
      %p292 = scmp.ne.s32.totalorder %s281, %s284
      %p293 = scmp.eq.s32.totalorder %s35, 3
      %p294 = por %p292, %p293
      %p295 = scmp.ne.s32.totalorder %s284, %s285
      %p296 = scmp.eq.s32.totalorder %s35, 0
      %p297 = por %p295, %p296
      %p298 = scmp.ne.s32.totalorder %s284, %s285
      %p299 = scmp.eq.s32.totalorder %s36, 3
      %p300 = por %p298, %p299
      %p302 = scmp.ne.s32.totalorder %s285, %s301
      %p303 = scmp.eq.s32.totalorder %s36, 0
      %p304 = por %p302, %p303
      %s305 = ssub.s32 %s38, %s45
      %p306 = scmp.eq.s32.totalorder %s305, 0
      %s308 = sadd.s32 %s307, 1
      %s309 = scalar_select %p306, %s307, %s308
      %p312 = pneg %p306
      %p313 = scmp.eq.s32.totalorder %s30, 3
      %p314 = por %p312, %p313
      %p315 = scmp.ne.s32.totalorder %s307, %s310
      %p316 = scmp.eq.s32.totalorder %s30, 0
      %p317 = por %p315, %p316
      %p318 = scmp.ne.s32.totalorder %s307, %s310
      %p319 = scmp.eq.s32.totalorder %s35, 3
      %p320 = por %p318, %p319
      %p321 = scmp.ne.s32.totalorder %s310, %s311
      %p322 = scmp.eq.s32.totalorder %s35, 0
      %p323 = por %p321, %p322
      %p324 = scmp.ne.s32.totalorder %s310, %s311
      %p325 = scmp.eq.s32.totalorder %s36, 3
      %p326 = por %p324, %p325
      %p328 = scmp.ne.s32.totalorder %s311, %s327
      %p329 = scmp.eq.s32.totalorder %s36, 0
      %p330 = por %p328, %p329
      %s331 = ssub.s32 %s38, %s45
      %p332 = scmp.eq.s32.totalorder %s331, 0
      %s334 = sadd.s32 %s333, 1
      %s335 = scalar_select %p332, %s333, %s334
      %p338 = pneg %p332
      %p339 = scmp.eq.s32.totalorder %s30, 3
      %p340 = por %p338, %p339
      %p341 = scmp.ne.s32.totalorder %s333, %s336
      %p342 = scmp.eq.s32.totalorder %s30, 0
      %p343 = por %p341, %p342
      %p344 = scmp.ne.s32.totalorder %s333, %s336
      %p345 = scmp.eq.s32.totalorder %s35, 3
      %p346 = por %p344, %p345
      %p347 = scmp.ne.s32.totalorder %s336, %s337
      %p348 = scmp.eq.s32.totalorder %s35, 0
      %p349 = por %p347, %p348
      %p350 = scmp.ne.s32.totalorder %s336, %s337
      %p351 = scmp.eq.s32.totalorder %s36, 3
      %p352 = por %p350, %p351
      %p354 = scmp.ne.s32.totalorder %s337, %s353
      %p355 = scmp.eq.s32.totalorder %s36, 0
      %p356 = por %p354, %p355
      %s357 = ssub.s32 %s38, %s45
      %p358 = scmp.eq.s32.totalorder %s357, 0
      %s360 = sadd.s32 %s359, 1
      %s361 = scalar_select %p358, %s359, %s360
      %p364 = pneg %p358
      %p365 = scmp.eq.s32.totalorder %s30, 3
      %p366 = por %p364, %p365
      %p367 = scmp.ne.s32.totalorder %s359, %s362
      %p368 = scmp.eq.s32.totalorder %s30, 0
      %p369 = por %p367, %p368
      %p370 = scmp.ne.s32.totalorder %s359, %s362
      %p371 = scmp.eq.s32.totalorder %s35, 3
      %p372 = por %p370, %p371
      %p373 = scmp.ne.s32.totalorder %s362, %s363
      %p374 = scmp.eq.s32.totalorder %s35, 0
      %p375 = por %p373, %p374
      %p376 = scmp.ne.s32.totalorder %s362, %s363
      %p377 = scmp.eq.s32.totalorder %s36, 3
      %p378 = por %p376, %p377
      %p380 = scmp.ne.s32.totalorder %s363, %s379
      %p381 = scmp.eq.s32.totalorder %s36, 0
      %p382 = por %p380, %p381
      %s383 = ssub.s32 %s38, %s45
      %p384 = scmp.eq.s32.totalorder %s383, 0
      %s386 = sadd.s32 %s385, 1
      %s387 = scalar_select %p384, %s385, %s386
      %p390 = pneg %p384
      %p391 = scmp.eq.s32.totalorder %s30, 3
      %p392 = por %p390, %p391
      %p393 = scmp.ne.s32.totalorder %s385, %s388
      %p394 = scmp.eq.s32.totalorder %s30, 0
      %p395 = por %p393, %p394
      %p396 = scmp.ne.s32.totalorder %s385, %s388
      %p397 = scmp.eq.s32.totalorder %s35, 3
      %p398 = por %p396, %p397
      %p399 = scmp.ne.s32.totalorder %s388, %s389
      %p400 = scmp.eq.s32.totalorder %s35, 0
      %p401 = por %p399, %p400
      %p402 = scmp.ne.s32.totalorder %s388, %s389
      %p403 = scmp.eq.s32.totalorder %s36, 3
      %p404 = por %p402, %p403
      %p406 = scmp.ne.s32.totalorder %s389, %s405
      %p407 = scmp.eq.s32.totalorder %s36, 0
      %p408 = por %p406, %p407
      %s409 = ssub.s32 %s38, %s45
      %p410 = scmp.eq.s32.totalorder %s409, 0
      %s412 = sadd.s32 %s411, 1
      %s413 = scalar_select %p410, %s411, %s412
      %p416 = pneg %p410
      %p417 = scmp.eq.s32.totalorder %s30, 3
      %p418 = por %p416, %p417
      %p419 = scmp.ne.s32.totalorder %s411, %s414
      %p420 = scmp.eq.s32.totalorder %s30, 0
      %p421 = por %p419, %p420
      %p422 = scmp.ne.s32.totalorder %s411, %s414
      %p423 = scmp.eq.s32.totalorder %s35, 3
      %p424 = por %p422, %p423
      %p425 = scmp.ne.s32.totalorder %s414, %s415
      %p426 = scmp.eq.s32.totalorder %s35, 0
      %p427 = por %p425, %p426
      %p428 = scmp.ne.s32.totalorder %s414, %s415
      %p429 = scmp.eq.s32.totalorder %s36, 3
      %p430 = por %p428, %p429
      %p432 = scmp.ne.s32.totalorder %s415, %s431
      %p433 = scmp.eq.s32.totalorder %s36, 0
      %p434 = por %p432, %p433
      %s435 = ssub.s32 %s38, %s45
      %p436 = scmp.eq.s32.totalorder %s435, 0
      %s438 = sadd.s32 %s437, 1
      %s439 = scalar_select %p436, %s437, %s438
      %p442 = pneg %p436
      %p443 = scmp.eq.s32.totalorder %s30, 3
      %p444 = por %p442, %p443
      %p445 = scmp.ne.s32.totalorder %s437, %s440
      %p446 = scmp.eq.s32.totalorder %s30, 0
      %p447 = por %p445, %p446
      %p448 = scmp.ne.s32.totalorder %s437, %s440
      %p449 = scmp.eq.s32.totalorder %s35, 3
      %p450 = por %p448, %p449
      %p451 = scmp.ne.s32.totalorder %s440, %s441
      %p452 = scmp.eq.s32.totalorder %s35, 0
      %p453 = por %p451, %p452
      %p454 = scmp.ne.s32.totalorder %s440, %s441
      %p455 = scmp.eq.s32.totalorder %s36, 3
      %p456 = por %p454, %p455
      %p458 = scmp.ne.s32.totalorder %s441, %s457
      %p459 = scmp.eq.s32.totalorder %s36, 0
      %p460 = por %p458, %p459
      %s461 = ssub.s32 %s38, %s45
      %p462 = scmp.eq.s32.totalorder %s461, 0
      %s464 = sadd.s32 %s463, 1
      %s465 = scalar_select %p462, %s463, %s464
      %p468 = pneg %p462
      %p469 = scmp.eq.s32.totalorder %s30, 3
      %p470 = por %p468, %p469
      %p471 = scmp.ne.s32.totalorder %s463, %s466
      %p472 = scmp.eq.s32.totalorder %s30, 0
      %p473 = por %p471, %p472
      %p474 = scmp.ne.s32.totalorder %s463, %s466
      %p475 = scmp.eq.s32.totalorder %s35, 3
      %p476 = por %p474, %p475
      %p477 = scmp.ne.s32.totalorder %s466, %s467
      %p478 = scmp.eq.s32.totalorder %s35, 0
      %p479 = por %p477, %p478
      %p480 = scmp.ne.s32.totalorder %s466, %s467
      %p481 = scmp.eq.s32.totalorder %s36, 3
      %p482 = por %p480, %p481
      %p484 = scmp.ne.s32.totalorder %s467, %s483
      %p485 = scmp.eq.s32.totalorder %s36, 0
      %p486 = por %p484, %p485
      %s487 = ssub.s32 %s38, %s45
      %p488 = scmp.eq.s32.totalorder %s487, 0
      %s490 = sadd.s32 %s489, 1
      %s491 = scalar_select %p488, %s489, %s490
      %p494 = pneg %p488
      %p495 = scmp.eq.s32.totalorder %s30, 3
      %p496 = por %p494, %p495
      %p497 = scmp.ne.s32.totalorder %s489, %s492
      %p498 = scmp.eq.s32.totalorder %s30, 0
      %p499 = por %p497, %p498
      %p500 = scmp.ne.s32.totalorder %s489, %s492
      %p501 = scmp.eq.s32.totalorder %s35, 3
      %p502 = por %p500, %p501
      %p503 = scmp.ne.s32.totalorder %s492, %s493
      %p504 = scmp.eq.s32.totalorder %s35, 0
      %p505 = por %p503, %p504
      %p506 = scmp.ne.s32.totalorder %s492, %s493
      %p507 = scmp.eq.s32.totalorder %s36, 3
      %p508 = por %p506, %p507
      %p510 = scmp.ne.s32.totalorder %s493, %s509
      %p511 = scmp.eq.s32.totalorder %s36, 0
      %p512 = por %p510, %p511
      %s513 = ssub.s32 %s38, %s45
      %p514 = scmp.eq.s32.totalorder %s513, 0
      %s516 = sadd.s32 %s515, 1
      %s517 = scalar_select %p514, %s515, %s516
      %p520 = pneg %p514
      %p521 = scmp.eq.s32.totalorder %s30, 3
      %p522 = por %p520, %p521
      %p523 = scmp.ne.s32.totalorder %s515, %s518
      %p524 = scmp.eq.s32.totalorder %s30, 0
      %p525 = por %p523, %p524
      %p526 = scmp.ne.s32.totalorder %s515, %s518
      %p527 = scmp.eq.s32.totalorder %s35, 3
      %p528 = por %p526, %p527
      %p529 = scmp.ne.s32.totalorder %s518, %s519
      %p530 = scmp.eq.s32.totalorder %s35, 0
      %p531 = por %p529, %p530
      %p532 = scmp.ne.s32.totalorder %s518, %s519
      %p533 = scmp.eq.s32.totalorder %s36, 3
      %p534 = por %p532, %p533
      %p536 = scmp.ne.s32.totalorder %s519, %s535
      %p537 = scmp.eq.s32.totalorder %s36, 0
      %p538 = por %p536, %p537
      %s539 = ssub.s32 %s38, %s45
      %p540 = scmp.eq.s32.totalorder %s539, 0
      %s542 = sadd.s32 %s541, 1
      %s543 = scalar_select %p540, %s541, %s542
      %p546 = pneg %p540
      %p547 = scmp.eq.s32.totalorder %s30, 3
      %p548 = por %p546, %p547
      %p549 = scmp.ne.s32.totalorder %s541, %s544
      %p550 = scmp.eq.s32.totalorder %s30, 0
      %p551 = por %p549, %p550
      %p552 = scmp.ne.s32.totalorder %s541, %s544
      %p553 = scmp.eq.s32.totalorder %s35, 3
      %p554 = por %p552, %p553
      %p555 = scmp.ne.s32.totalorder %s544, %s545
      %p556 = scmp.eq.s32.totalorder %s35, 0
      %p557 = por %p555, %p556
      %p558 = scmp.ne.s32.totalorder %s544, %s545
      %p559 = scmp.eq.s32.totalorder %s36, 3
      %p560 = por %p558, %p559
      %p562 = scmp.ne.s32.totalorder %s545, %s561
      %p563 = scmp.eq.s32.totalorder %s36, 0
      %p564 = por %p562, %p563
      %s565 = ssub.s32 %s38, %s45
      %p566 = scmp.eq.s32.totalorder %s565, 0
      %s568 = sadd.s32 %s567, 1
      %s569 = scalar_select %p566, %s567, %s568
      %p572 = pneg %p566
      %p573 = scmp.eq.s32.totalorder %s30, 3
      %p574 = por %p572, %p573
      %p575 = scmp.ne.s32.totalorder %s567, %s570
      %p576 = scmp.eq.s32.totalorder %s30, 0
      %p577 = por %p575, %p576
      %p578 = scmp.ne.s32.totalorder %s567, %s570
      %p579 = scmp.eq.s32.totalorder %s35, 3
      %p580 = por %p578, %p579
      %p581 = scmp.ne.s32.totalorder %s570, %s571
      %p582 = scmp.eq.s32.totalorder %s35, 0
      %p583 = por %p581, %p582
      %p584 = scmp.ne.s32.totalorder %s570, %s571
      %p585 = scmp.eq.s32.totalorder %s36, 3
      %p586 = por %p584, %p585
      %p588 = scmp.ne.s32.totalorder %s571, %s587
      %p589 = scmp.eq.s32.totalorder %s36, 0
      %p590 = por %p588, %p589
      %s591 = ssub.s32 %s37, %s49
      %p592 = scmp.eq.s32.totalorder %s591, 0
      %s594 = sadd.s32 %s593, 1
      %s595 = scalar_select %p592, %s593, %s594
      %p598 = pneg %p592
      %p599 = scmp.eq.s32.totalorder %s30, 3
      %p600 = por %p598, %p599
      %p601 = scmp.ne.s32.totalorder %s593, %s596
      %p602 = scmp.eq.s32.totalorder %s30, 0
      %p603 = por %p601, %p602
      %p604 = scmp.ne.s32.totalorder %s593, %s596
      %p605 = scmp.eq.s32.totalorder %s35, 3
      %p606 = por %p604, %p605
      %p607 = scmp.ne.s32.totalorder %s596, %s597
      %p608 = scmp.eq.s32.totalorder %s35, 0
      %p609 = por %p607, %p608
      %p610 = scmp.ne.s32.totalorder %s596, %s597
      %p611 = scmp.eq.s32.totalorder %s36, 3
      %p612 = por %p610, %p611
      %p614 = scmp.ne.s32.totalorder %s597, %s613
      %p615 = scmp.eq.s32.totalorder %s36, 0
      %p616 = por %p614, %p615
      %p617 = scmp.le.s32.totalorder 1, %s30
      %p618 = scmp.lt.s32.totalorder %s30, 5
      %p619 = pnand %p617, %p618
      %p620 = pneg %p619
      // Predicated region
      $region9: #{tpu_custom_call.1} parent=5 // pred_check
        _
      $region10: #{tpu_custom_call.1} parent=5 // pred_check_branch
        %622 = sbr.rel (%p619) target = $region12
      $region11: #{tpu_custom_call.1} parent=5 // pred_region
        %s623 = ssub.s32 %s30, 1
        // Predicated region
        $region13: #{tpu_custom_call.1} parent=11 // pred_check
          %p624 = pneg %p63
        $region14: #{tpu_custom_call.1} parent=11 // pred_check_branch
          %626 = sbr.rel (%p624) target = $region16
        $region15: #{tpu_custom_call.1} parent=11 // pred_region
          _
        $region16: #{tpu_custom_call.1} parent=11 // pred_fallthru
          _
      $region12: #{tpu_custom_call.1} parent=5 // pred_fallthru
        _
      %p627 = scmp.lt.s32.totalorder %s30, 4
      // Predicated region
      $region17: #{tpu_custom_call.1} parent=5 // pred_check
        %p628 = pneg %p627
      $region18: #{tpu_custom_call.1} parent=5 // pred_check_branch
        %630 = sbr.rel (%p628) target = $region20
      $region19: #{tpu_custom_call.1} parent=5 // pred_region
        // Predicated region
        $region21: #{tpu_custom_call.1} parent=19 // pred_check
          %p631 = pneg %p83
        $region22: #{tpu_custom_call.1} parent=19 // pred_check_branch
          %633 = sbr.rel (%p631) target = $region24
        $region23: #{tpu_custom_call.1} parent=19 // pred_region
          %p634 = scmp.lt.s32.totalorder %s37, 1
          %s635 = scalar_select %p634, %s37, 1
          %s636 = smul.addr %s635, 2
          %s637 = smul.addr %s636, 8
          %s638 = scalar_lea.vmem %s1, %s637
        $region24: #{tpu_custom_call.1} parent=19 // pred_fallthru
          _
        // Predicated region
        $region25: #{tpu_custom_call.1} parent=19 // pred_check
          %p639 = pneg %p109
        $region26: #{tpu_custom_call.1} parent=19 // pred_check_branch
          %641 = sbr.rel (%p639) target = $region28
        $region27: #{tpu_custom_call.1} parent=19 // pred_region
          %p642 = scmp.lt.s32.totalorder %s37, 1
          %s643 = scalar_select %p642, %s37, 1
          %s644 = scalar_lea.vmem %s2, %s643
        $region28: #{tpu_custom_call.1} parent=19 // pred_fallthru
          _
        // Predicated region
        $region29: #{tpu_custom_call.1} parent=19 // pred_check
          %p645 = pneg %p135
        $region30: #{tpu_custom_call.1} parent=19 // pred_check_branch
          %647 = sbr.rel (%p645) target = $region32
        $region31: #{tpu_custom_call.1} parent=19 // pred_region
          %p648 = scmp.lt.s32.totalorder %s38, 1
          %s649 = scalar_select %p648, %s38, 1
          %s650 = smul.addr %s649, 48
          %s651 = smul.addr %s650, 4
          %s652 = scalar_lea.vmem %s3, %s651
        $region32: #{tpu_custom_call.1} parent=19 // pred_fallthru
          _
        // Predicated region
        $region33: #{tpu_custom_call.1} parent=19 // pred_check
          %p653 = pneg %p161
        $region34: #{tpu_custom_call.1} parent=19 // pred_check_branch
          %655 = sbr.rel (%p653) target = $region36
        $region35: #{tpu_custom_call.1} parent=19 // pred_region
          %p656 = scmp.lt.s32.totalorder %s38, 1
          %s657 = scalar_select %p656, %s38, 1
          %s658 = smul.addr %s657, 12
          %s659 = scalar_lea.vmem %s4, %s658
        $region36: #{tpu_custom_call.1} parent=19 // pred_fallthru
          _
        // Predicated region
        $region37: #{tpu_custom_call.1} parent=19 // pred_check
          %p660 = pneg %p187
        $region38: #{tpu_custom_call.1} parent=19 // pred_check_branch
          %662 = sbr.rel (%p660) target = $region40
        $region39: #{tpu_custom_call.1} parent=19 // pred_region
          %p663 = scmp.lt.s32.totalorder %s38, 1
          %s664 = scalar_select %p663, %s38, 1
          %s665 = smul.addr %s664, 4
          %s666 = smul.addr %s665, 4
          %s667 = scalar_lea.vmem %s5, %s666
        $region40: #{tpu_custom_call.1} parent=19 // pred_fallthru
          _
        // Predicated region
        $region41: #{tpu_custom_call.1} parent=19 // pred_check
          %p668 = pneg %p213
        $region42: #{tpu_custom_call.1} parent=19 // pred_check_branch
          %670 = sbr.rel (%p668) target = $region44
        $region43: #{tpu_custom_call.1} parent=19 // pred_region
          %p671 = scmp.lt.s32.totalorder %s38, 1
          %s672 = scalar_select %p671, %s38, 1
          %s673 = scalar_lea.vmem %s6, %s672
        $region44: #{tpu_custom_call.1} parent=19 // pred_fallthru
          _
        // Predicated region
        $region45: #{tpu_custom_call.1} parent=19 // pred_check
          %p674 = pneg %p239
        $region46: #{tpu_custom_call.1} parent=19 // pred_check_branch
          %676 = sbr.rel (%p674) target = $region48
        $region47: #{tpu_custom_call.1} parent=19 // pred_region
          %p677 = scmp.lt.s32.totalorder %s38, 1
          %s678 = scalar_select %p677, %s38, 1
          %s679 = scalar_lea.vmem %s7, %s678
        $region48: #{tpu_custom_call.1} parent=19 // pred_fallthru
          _
        // Predicated region
        $region49: #{tpu_custom_call.1} parent=19 // pred_check
          %p680 = pneg %p265
        $region50: #{tpu_custom_call.1} parent=19 // pred_check_branch
          %682 = sbr.rel (%p680) target = $region52
        $region51: #{tpu_custom_call.1} parent=19 // pred_region
          %p683 = scmp.lt.s32.totalorder %s38, 1
          %s684 = scalar_select %p683, %s38, 1
          %s685 = scalar_lea.vmem %s8, %s684
        $region52: #{tpu_custom_call.1} parent=19 // pred_fallthru
          _
        // Predicated region
        $region53: #{tpu_custom_call.1} parent=19 // pred_check
          %p686 = pneg %p291
        $region54: #{tpu_custom_call.1} parent=19 // pred_check_branch
          %688 = sbr.rel (%p686) target = $region56
        $region55: #{tpu_custom_call.1} parent=19 // pred_region
          %p689 = scmp.lt.s32.totalorder %s38, 1
          %s690 = scalar_select %p689, %s38, 1
          %s691 = smul.addr %s690, 48
          %s692 = smul.addr %s691, 4
          %s693 = scalar_lea.vmem %s9, %s692
        $region56: #{tpu_custom_call.1} parent=19 // pred_fallthru
          _
        // Predicated region
        $region57: #{tpu_custom_call.1} parent=19 // pred_check
          %p694 = pneg %p317
        $region58: #{tpu_custom_call.1} parent=19 // pred_check_branch
          %696 = sbr.rel (%p694) target = $region60
        $region59: #{tpu_custom_call.1} parent=19 // pred_region
          %p697 = scmp.lt.s32.totalorder %s38, 1
          %s698 = scalar_select %p697, %s38, 1
          %s699 = smul.addr %s698, 12
          %s700 = scalar_lea.vmem %s10, %s699
        $region60: #{tpu_custom_call.1} parent=19 // pred_fallthru
          _
        // Predicated region
        $region61: #{tpu_custom_call.1} parent=19 // pred_check
          %p701 = pneg %p343
        $region62: #{tpu_custom_call.1} parent=19 // pred_check_branch
          %703 = sbr.rel (%p701) target = $region64
        $region63: #{tpu_custom_call.1} parent=19 // pred_region
          %p704 = scmp.lt.s32.totalorder %s38, 1
          %s705 = scalar_select %p704, %s38, 1
          %s706 = smul.addr %s705, 4
          %s707 = smul.addr %s706, 4
          %s708 = scalar_lea.vmem %s11, %s707
        $region64: #{tpu_custom_call.1} parent=19 // pred_fallthru
          _
        // Predicated region
        $region65: #{tpu_custom_call.1} parent=19 // pred_check
          %p709 = pneg %p369
        $region66: #{tpu_custom_call.1} parent=19 // pred_check_branch
          %711 = sbr.rel (%p709) target = $region68
        $region67: #{tpu_custom_call.1} parent=19 // pred_region
          %p712 = scmp.lt.s32.totalorder %s38, 1
          %s713 = scalar_select %p712, %s38, 1
          %s714 = scalar_lea.vmem %s12, %s713
        $region68: #{tpu_custom_call.1} parent=19 // pred_fallthru
          _
        // Predicated region
        $region69: #{tpu_custom_call.1} parent=19 // pred_check
          %p715 = pneg %p395
        $region70: #{tpu_custom_call.1} parent=19 // pred_check_branch
          %717 = sbr.rel (%p715) target = $region72
        $region71: #{tpu_custom_call.1} parent=19 // pred_region
          %p718 = scmp.lt.s32.totalorder %s38, 1
          %s719 = scalar_select %p718, %s38, 1
          %s720 = scalar_lea.vmem %s13, %s719
        $region72: #{tpu_custom_call.1} parent=19 // pred_fallthru
          _
        // Predicated region
        $region73: #{tpu_custom_call.1} parent=19 // pred_check
          %p721 = pneg %p421
        $region74: #{tpu_custom_call.1} parent=19 // pred_check_branch
          %723 = sbr.rel (%p721) target = $region76
        $region75: #{tpu_custom_call.1} parent=19 // pred_region
          %p724 = scmp.lt.s32.totalorder %s38, 1
          %s725 = scalar_select %p724, %s38, 1
          %s726 = scalar_lea.vmem %s14, %s725
        $region76: #{tpu_custom_call.1} parent=19 // pred_fallthru
          _
        // Predicated region
        $region77: #{tpu_custom_call.1} parent=19 // pred_check
          %p727 = pneg %p447
        $region78: #{tpu_custom_call.1} parent=19 // pred_check_branch
          %729 = sbr.rel (%p727) target = $region80
        $region79: #{tpu_custom_call.1} parent=19 // pred_region
          %p730 = scmp.lt.s32.totalorder %s38, 1
          %s731 = scalar_select %p730, %s38, 1
          %s732 = smul.addr %s731, 4
          %s733 = smul.addr %s732, 4
          %s734 = scalar_lea.vmem %s15, %s733
        $region80: #{tpu_custom_call.1} parent=19 // pred_fallthru
          _
        // Predicated region
        $region81: #{tpu_custom_call.1} parent=19 // pred_check
          %p735 = pneg %p473
        $region82: #{tpu_custom_call.1} parent=19 // pred_check_branch
          %737 = sbr.rel (%p735) target = $region84
        $region83: #{tpu_custom_call.1} parent=19 // pred_region
          %p738 = scmp.lt.s32.totalorder %s38, 1
          %s739 = scalar_select %p738, %s38, 1
          %s740 = scalar_lea.vmem %s16, %s739
        $region84: #{tpu_custom_call.1} parent=19 // pred_fallthru
          _
        // Predicated region
        $region85: #{tpu_custom_call.1} parent=19 // pred_check
          %p741 = pneg %p499
        $region86: #{tpu_custom_call.1} parent=19 // pred_check_branch
          %743 = sbr.rel (%p741) target = $region88
        $region87: #{tpu_custom_call.1} parent=19 // pred_region
          %p744 = scmp.lt.s32.totalorder %s38, 1
          %s745 = scalar_select %p744, %s38, 1
          %s746 = smul.addr %s745, 8
          %s747 = smul.addr %s746, 4
          %s748 = scalar_lea.vmem %s17, %s747
        $region88: #{tpu_custom_call.1} parent=19 // pred_fallthru
          _
        // Predicated region
        $region89: #{tpu_custom_call.1} parent=19 // pred_check
          %p749 = pneg %p525
        $region90: #{tpu_custom_call.1} parent=19 // pred_check_branch
          %751 = sbr.rel (%p749) target = $region92
        $region91: #{tpu_custom_call.1} parent=19 // pred_region
          %p752 = scmp.lt.s32.totalorder %s38, 1
          %s753 = scalar_select %p752, %s38, 1
          %s754 = scalar_lea.vmem %s18, %s753
        $region92: #{tpu_custom_call.1} parent=19 // pred_fallthru
          _
        // Predicated region
        $region93: #{tpu_custom_call.1} parent=19 // pred_check
          %p755 = pneg %p551
        $region94: #{tpu_custom_call.1} parent=19 // pred_check_branch
          %757 = sbr.rel (%p755) target = $region96
        $region95: #{tpu_custom_call.1} parent=19 // pred_region
          %p758 = scmp.lt.s32.totalorder %s38, 1
          %s759 = scalar_select %p758, %s38, 1
          %s760 = scalar_lea.vmem %s19, %s759
        $region96: #{tpu_custom_call.1} parent=19 // pred_fallthru
          _
        // Predicated region
        $region97: #{tpu_custom_call.1} parent=19 // pred_check
          %p761 = pneg %p577
        $region98: #{tpu_custom_call.1} parent=19 // pred_check_branch
          %763 = sbr.rel (%p761) target = $region100
        $region99: #{tpu_custom_call.1} parent=19 // pred_region
          %p764 = scmp.lt.s32.totalorder %s38, 1
          %s765 = scalar_select %p764, %s38, 1
          %s766 = scalar_lea.vmem %s20, %s765
        $region100: #{tpu_custom_call.1} parent=19 // pred_fallthru
          _
      $region20: #{tpu_custom_call.1} parent=5 // pred_fallthru
        _
      %p767 = scmp.le.s32.totalorder 1, %s30
      %p768 = scmp.lt.s32.totalorder %s30, 5
      %p769 = pnand %p767, %p768
      %p770 = pneg %p769
      // Predicated region
      $region101: #{tpu_custom_call.1} parent=5 // pred_check
        _
      $region102: #{tpu_custom_call.1} parent=5 // pred_check_branch
        %772 = sbr.rel (%p769) target = $region104
      $region103: #{tpu_custom_call.1} parent=5 // pred_region
        %s773 = ssub.s32 %s30, 1
        %p774 = pneg %p63
        %p775 = pneg %p60
        %p776 = scmp.lt.s32.totalorder %s39, 1
        %s777 = scalar_select %p776, %s39, 1
        %s778 = smul.addr %s777, 2
        %s779 = smul.addr %s778, 8
        %s780 = scalar_lea.vmem %s1, %s779
        %p781 = pneg %p89
        %p782 = pneg %p86
        %p783 = scmp.lt.s32.totalorder %s39, 1
        %s784 = scalar_select %p783, %s39, 1
        %s785 = scalar_lea.vmem %s2, %s784
        %p786 = pneg %p115
        %p787 = pneg %p112
        %p788 = scmp.lt.s32.totalorder %s40, 1
        %s789 = scalar_select %p788, %s40, 1
        %s790 = smul.addr %s789, 48
        %s791 = smul.addr %s790, 4
        %s792 = scalar_lea.vmem %s3, %s791
        %p793 = pneg %p141
        %p794 = pneg %p138
        %p795 = scmp.lt.s32.totalorder %s40, 1
        %s796 = scalar_select %p795, %s40, 1
        %s797 = smul.addr %s796, 12
        %s798 = scalar_lea.vmem %s4, %s797
        %p799 = pneg %p167
        %p800 = pneg %p164
        %p801 = scmp.lt.s32.totalorder %s40, 1
        %s802 = scalar_select %p801, %s40, 1
        %s803 = smul.addr %s802, 4
        %s804 = smul.addr %s803, 4
        %s805 = scalar_lea.vmem %s5, %s804
        %p806 = pneg %p193
        %p807 = pneg %p190
        %p808 = scmp.lt.s32.totalorder %s40, 1
        %s809 = scalar_select %p808, %s40, 1
        %s810 = scalar_lea.vmem %s6, %s809
        %p811 = pneg %p219
        %p812 = pneg %p216
        %p813 = scmp.lt.s32.totalorder %s40, 1
        %s814 = scalar_select %p813, %s40, 1
        %s815 = scalar_lea.vmem %s7, %s814
        %p816 = pneg %p245
        %p817 = pneg %p242
        %p818 = scmp.lt.s32.totalorder %s40, 1
        %s819 = scalar_select %p818, %s40, 1
        %s820 = scalar_lea.vmem %s8, %s819
        %p821 = pneg %p271
        %p822 = pneg %p268
        %p823 = scmp.lt.s32.totalorder %s40, 1
        %s824 = scalar_select %p823, %s40, 1
        %s825 = smul.addr %s824, 48
        %s826 = smul.addr %s825, 4
        %s827 = scalar_lea.vmem %s9, %s826
        %p828 = pneg %p297
        %p829 = pneg %p294
        %p830 = scmp.lt.s32.totalorder %s40, 1
        %s831 = scalar_select %p830, %s40, 1
        %s832 = smul.addr %s831, 12
        %s833 = scalar_lea.vmem %s10, %s832
        %p834 = pneg %p323
        %p835 = pneg %p320
        %p836 = scmp.lt.s32.totalorder %s40, 1
        %s837 = scalar_select %p836, %s40, 1
        %s838 = smul.addr %s837, 4
        %s839 = smul.addr %s838, 4
        %s840 = scalar_lea.vmem %s11, %s839
        %p841 = pneg %p349
        %p842 = pneg %p346
        %p843 = scmp.lt.s32.totalorder %s40, 1
        %s844 = scalar_select %p843, %s40, 1
        %s845 = scalar_lea.vmem %s12, %s844
        %p846 = pneg %p375
        %p847 = pneg %p372
        %p848 = scmp.lt.s32.totalorder %s40, 1
        %s849 = scalar_select %p848, %s40, 1
        %s850 = scalar_lea.vmem %s13, %s849
        %p851 = pneg %p401
        %p852 = pneg %p398
        %p853 = scmp.lt.s32.totalorder %s40, 1
        %s854 = scalar_select %p853, %s40, 1
        %s855 = scalar_lea.vmem %s14, %s854
        %p856 = pneg %p427
        %p857 = pneg %p424
        %p858 = scmp.lt.s32.totalorder %s40, 1
        %s859 = scalar_select %p858, %s40, 1
        %s860 = smul.addr %s859, 4
        %s861 = smul.addr %s860, 4
        %s862 = scalar_lea.vmem %s15, %s861
        %p863 = pneg %p453
        %p864 = pneg %p450
        %p865 = scmp.lt.s32.totalorder %s40, 1
        %s866 = scalar_select %p865, %s40, 1
        %s867 = scalar_lea.vmem %s16, %s866
        %p868 = pneg %p479
        %p869 = pneg %p476
        %p870 = scmp.lt.s32.totalorder %s40, 1
        %s871 = scalar_select %p870, %s40, 1
        %s872 = smul.addr %s871, 8
        %s873 = smul.addr %s872, 4
        %s874 = scalar_lea.vmem %s17, %s873
        %p875 = pneg %p505
        %p876 = pneg %p502
        %p877 = scmp.lt.s32.totalorder %s40, 1
        %s878 = scalar_select %p877, %s40, 1
        %s879 = scalar_lea.vmem %s18, %s878
        %p880 = pneg %p531
        %p881 = pneg %p528
        %p882 = scmp.lt.s32.totalorder %s40, 1
        %s883 = scalar_select %p882, %s40, 1
        %s884 = scalar_lea.vmem %s19, %s883
        %p885 = pneg %p557
        %p886 = pneg %p554
        %p887 = scmp.lt.s32.totalorder %s40, 1
        %s888 = scalar_select %p887, %s40, 1
        %s889 = scalar_lea.vmem %s20, %s888
        %p890 = pneg %p583
        %p891 = pneg %p580
        %p892 = pneg %p609
        %p893 = pneg %p606
        %s894 = sand.u32 %s596, 1
        %s895 = scalar_lea.sflag [#allocation4], %s894
        %s896 = sand.u32 %s596, 1
        %s897 = smul.addr %s896, 8
        %s898 = scalar_lea.vmem [#allocation3], %s897
        %p899 = scmp.lt.s32.totalorder %s39, 1
        %s900 = scalar_select %p899, %s39, 1
        %s901 = smul.addr %s900, 2
        %s902 = smul.addr %s901, 8
        %s903 = scalar_lea.vmem %s1, %s902
        %p904 = scmp.lt.s32.totalorder %s39, 1
        %s905 = scalar_select %p904, %s39, 1
        %s906 = scalar_lea.vmem %s2, %s905
        %p907 = scmp.lt.s32.totalorder %s40, 1
        %s908 = scalar_select %p907, %s40, 1
        %s909 = smul.addr %s908, 48
        %s910 = smul.addr %s909, 4
        %s911 = scalar_lea.vmem %s3, %s910
        %p912 = scmp.lt.s32.totalorder %s40, 1
        %s913 = scalar_select %p912, %s40, 1
        %s914 = smul.addr %s913, 12
        %s915 = scalar_lea.vmem %s4, %s914
        %p916 = scmp.lt.s32.totalorder %s40, 1
        %s917 = scalar_select %p916, %s40, 1
        %s918 = smul.addr %s917, 4
        %s919 = smul.addr %s918, 4
        %s920 = scalar_lea.vmem %s5, %s919
        %p921 = scmp.lt.s32.totalorder %s40, 1
        %s922 = scalar_select %p921, %s40, 1
        %s923 = scalar_lea.vmem %s6, %s922
        %p924 = scmp.lt.s32.totalorder %s40, 1
        %s925 = scalar_select %p924, %s40, 1
        %s926 = scalar_lea.vmem %s7, %s925
        %p927 = scmp.lt.s32.totalorder %s40, 1
        %s928 = scalar_select %p927, %s40, 1
        %s929 = scalar_lea.vmem %s8, %s928
        %p930 = scmp.lt.s32.totalorder %s40, 1
        %s931 = scalar_select %p930, %s40, 1
        %s932 = smul.addr %s931, 48
        %s933 = smul.addr %s932, 4
        %s934 = scalar_lea.vmem %s9, %s933
        %p935 = scmp.lt.s32.totalorder %s40, 1
        %s936 = scalar_select %p935, %s40, 1
        %s937 = smul.addr %s936, 12
        %s938 = scalar_lea.vmem %s10, %s937
        %p939 = scmp.lt.s32.totalorder %s40, 1
        %s940 = scalar_select %p939, %s40, 1
        %s941 = smul.addr %s940, 4
        %s942 = smul.addr %s941, 4
        %s943 = scalar_lea.vmem %s11, %s942
        %p944 = scmp.lt.s32.totalorder %s40, 1
        %s945 = scalar_select %p944, %s40, 1
        %s946 = scalar_lea.vmem %s12, %s945
        %p947 = scmp.lt.s32.totalorder %s40, 1
        %s948 = scalar_select %p947, %s40, 1
        %s949 = scalar_lea.vmem %s13, %s948
        %p950 = scmp.lt.s32.totalorder %s40, 1
        %s951 = scalar_select %p950, %s40, 1
        %s952 = scalar_lea.vmem %s14, %s951
        %p953 = scmp.lt.s32.totalorder %s40, 1
        %s954 = scalar_select %p953, %s40, 1
        %s955 = smul.addr %s954, 4
        %s956 = smul.addr %s955, 4
        %s957 = scalar_lea.vmem %s15, %s956
        %p958 = scmp.lt.s32.totalorder %s40, 1
        %s959 = scalar_select %p958, %s40, 1
        %s960 = scalar_lea.vmem %s16, %s959
        %p961 = scmp.lt.s32.totalorder %s40, 1
        %s962 = scalar_select %p961, %s40, 1
        %s963 = smul.addr %s962, 8
        %s964 = smul.addr %s963, 4
        %s965 = scalar_lea.vmem %s17, %s964
        %p966 = scmp.lt.s32.totalorder %s40, 1
        %s967 = scalar_select %p966, %s40, 1
        %s968 = scalar_lea.vmem %s18, %s967
        %p969 = scmp.lt.s32.totalorder %s40, 1
        %s970 = scalar_select %p969, %s40, 1
        %s971 = scalar_lea.vmem %s19, %s970
        %p972 = scmp.lt.s32.totalorder %s40, 1
        %s973 = scalar_select %p972, %s40, 1
        %s974 = scalar_lea.vmem %s20, %s973
        %p976 = scmp.eq.s32.totalorder %s40, 0
        // Predicated region
        $region105: #{tpu_custom_call.1} parent=103 // pred_check
          %p977 = pneg %p976
        $region106: #{tpu_custom_call.1} parent=103 // pred_check_branch
          %979 = sbr.rel (%p977) target = $region108
        $region107: #{tpu_custom_call.1} parent=103 // pred_region
          %v980 = vld [vmem:[%s0] sm:$0xff]
          %vm981 = vcmask 261120
          %982 = vst.msk [vmem:[#allocation2] sm:$0xff] %vm981, %v980
        $region108: #{tpu_custom_call.1} parent=103 // pred_fallthru
          _
        %v983 = vld [vmem:[#allocation2] sm:$0xff]
        %v984 = vld [vmem:[%s903] sm:$0xff]
        %v985 = vld [vmem:[%s903 + $0x8] sm:$0xff]
        %v986 = vpack.c.bf16 %v983, %v983
        %v987 = vld [vmem:[%s911] sm:$0xf]
        %v988 = vld [vmem:[%s911 + $0x4] sm:$0xf]
        %v989 = vld [vmem:[%s911 + $0x8] sm:$0xf]
        %v990 = vld [vmem:[%s911 + $0xc] sm:$0xf]
        %v991 = vld [vmem:[%s915] sm:$0x1]
        %v993 = vperm.slane %v991, 0
        %v999 = vunpack.c.l.b16 %v987
        %v1000 = vunpack.c.l.b16 %v988
        %v1001 = vunpack.c.l.b16 %v989
        %v1002 = vunpack.c.l.b16 %v990
        %v1003 = vpack.c.b16 %v1000, %v999
        %v1004 = vpack.c.b16 %v1002, %v1001
        %vm1007 = vcmask 261120
        %v1009 = vsel %vm1007, %v986, 0
        %1011 = vmatpush.bf16.msra.mxu0 0
        %1012 = vmatpush.bf16.msra.mxu0 0
        %1013 = vmatpush.bf16.msra.mxu0 0
        %1014 = vmatpush.bf16.msra.mxu0 0
        %1015 = vmatpush.bf16.msra.mxu0 0
        %1016 = vmatpush.bf16.msra.mxu0 0
        %1017 = vmatpush.bf16.msra.mxu0 %v1004
        %1018 = vmatpush.bf16.msra.mxu0 %v1003
        %1019 = vmatmul.bf16.gmra.mxu0 %v1009
        %v1020 = vpop.f32.mrf.mxu0
        %v1021 = vadd.f32 %v993, %v1020
        %v1022 = vpop.f32.mrf.mxu0
        %1023 = vdwg.mxu0
        %s1024 = scalar_lea.vmem %s911, 64
        %v1025 = vld [vmem:[%s1024] sm:$0xf]
        %v1026 = vld [vmem:[%s1024 + $0x4] sm:$0xf]
        %v1027 = vld [vmem:[%s1024 + $0x8] sm:$0xf]
        %v1028 = vld [vmem:[%s1024 + $0xc] sm:$0xf]
        %s1029 = scalar_lea.vmem %s915, 4
        %v1030 = vld [vmem:[%s1029] sm:$0x1]
        %v1032 = vperm.slane %v1030, 0
        %v1038 = vunpack.c.l.b16 %v1025
        %v1039 = vunpack.c.l.b16 %v1026
        %v1040 = vunpack.c.l.b16 %v1027
        %v1041 = vunpack.c.l.b16 %v1028
        %v1042 = vpack.c.b16 %v1039, %v1038
        %v1043 = vpack.c.b16 %v1041, %v1040
        %1046 = vmatpush.bf16.msra.mxu0 0
        %1047 = vmatpush.bf16.msra.mxu0 0
        %1048 = vmatpush.bf16.msra.mxu0 0
        %1049 = vmatpush.bf16.msra.mxu0 0
        %1050 = vmatpush.bf16.msra.mxu0 0
        %1051 = vmatpush.bf16.msra.mxu0 0
        %1052 = vmatpush.bf16.msra.mxu0 %v1043
        %1053 = vmatpush.bf16.msra.mxu0 %v1042
        %1054 = vmatmul.bf16.gmra.mxu0 %v1009
        %v1055 = vpop.f32.mrf.mxu0
        %v1056 = vadd.f32 %v1032, %v1055
        %v1057 = vpop.f32.mrf.mxu0
        %1058 = vdwg.mxu0
        %s1059 = scalar_lea.vmem %s911, 128
        %v1060 = vld [vmem:[%s1059] sm:$0xf]
        %v1061 = vld [vmem:[%s1059 + $0x4] sm:$0xf]
        %v1062 = vld [vmem:[%s1059 + $0x8] sm:$0xf]
        %v1063 = vld [vmem:[%s1059 + $0xc] sm:$0xf]
        %s1064 = scalar_lea.vmem %s915, 8
        %v1065 = vld [vmem:[%s1064] sm:$0x1]
        %v1067 = vperm.slane %v1065, 0
        %v1073 = vunpack.c.l.b16 %v1060
        %v1074 = vunpack.c.l.b16 %v1061
        %v1075 = vunpack.c.l.b16 %v1062
        %v1076 = vunpack.c.l.b16 %v1063
        %v1077 = vpack.c.b16 %v1074, %v1073
        %v1078 = vpack.c.b16 %v1076, %v1075
        %1081 = vmatpush.bf16.msra.mxu0 0
        %1082 = vmatpush.bf16.msra.mxu0 0
        %1083 = vmatpush.bf16.msra.mxu0 0
        %1084 = vmatpush.bf16.msra.mxu0 0
        %1085 = vmatpush.bf16.msra.mxu0 0
        %1086 = vmatpush.bf16.msra.mxu0 0
        %1087 = vmatpush.bf16.msra.mxu0 %v1078
        %1088 = vmatpush.bf16.msra.mxu0 %v1077
        %1089 = vmatmul.bf16.gmra.mxu0 %v1009
        %v1090 = vpop.f32.mrf.mxu0
        %v1091 = vadd.f32 %v1067, %v1090
        %v1092 = vpop.f32.mrf.mxu0
        %1093 = vdwg.mxu0
        %v1094 = vpack.c.bf16 %v1021, %v1021
        %v1095 = vpack.c.bf16 %v1056, %v1056
        %vm1096 = vcmask 64512
        %v1098 = vsel %vm1096, %v1094, 0
        %v1101 = vsel %vm1096, %v1095, 0
        %1103 = vmatpush.bf16.xpose.msra.mxu0 0
        %1104 = vmatpush.bf16.xpose.msra.mxu0 0
        %1105 = vmatpush.bf16.xpose.msra.mxu0 0
        %1106 = vmatpush.bf16.xpose.msra.mxu0 0
        %1107 = vmatpush.bf16.xpose.msra.mxu0 0
        %1108 = vmatpush.bf16.xpose.msra.mxu0 0
        %1109 = vmatpush.bf16.xpose.msra.mxu0 0
        %1110 = vmatpush.bf16.xpose.msra.mxu0 %v1101
        %1111 = vmatmul.bf16.gmra.mxu0 %v1098
        %v1112 = vpop.f32.mrf.mxu0
        %v1113 = vadd.f32 0.0, %v1112
        %v1114 = vpop.f32.mrf.mxu0
        %1115 = vdwg.mxu0
        %v1116 = vmul.f32 %v1113, 0.35355338
        %v1117 = vsel %vm1096, %v1116, -inf
        %1118 = vmax.xlane.f32.xlu0 %v1117
        %v1119 = vpop.xlane.xlu0 %1118
        %v1120 = vsub.f32 %v1116, %v1119
        %v1121 = vmul.f32 %v1120, 1.442695
        %v1122 = vpow.pop %v1121
        %v1123 = vsel %vm1096, %v1122, 0.0
        %1124 = vadd.xlane.f32.xlu0 %v1123
        %v1125 = vpop.xlane.xlu0 %1124
        %v1126 = vrcp.pop %v1125
        %v1127 = vmul.f32 %v1122, %v1126
        %v1128 = vpack.c.bf16 %v1127, %v1127
        %v1129 = vpack.c.bf16 %v1091, %v1091
        %v1131 = vsel %vm1096, %v1128, 0
        %vm1133 = vcmask 1043456
        %v1135 = vsel %vm1133, %v1129, 0
        %1137 = vmatpush.bf16.msra.mxu0 0
        %1138 = vmatpush.bf16.msra.mxu0 0
        %1139 = vmatpush.bf16.msra.mxu0 0
        %1140 = vmatpush.bf16.msra.mxu0 0
        %1141 = vmatpush.bf16.msra.mxu0 0
        %1142 = vmatpush.bf16.msra.mxu0 0
        %1143 = vmatpush.bf16.msra.mxu0 0
        %1144 = vmatpush.bf16.msra.mxu0 %v1135
        %1145 = vmatmul.bf16.gmra.mxu0 %v1131
        %v1146 = vpop.f32.mrf.mxu0
        %v1147 = vadd.f32 0.0, %v1146
        %v1148 = vpop.f32.mrf.mxu0
        %1149 = vdwg.mxu0
        %v1150 = vpack.c.bf16 %v1147, %v1147
        %v1151 = vld [vmem:[%s920] sm:$0xf]
        %s1152 = scalar_lea.vmem %s911, 16
        %v1153 = vld [vmem:[%s1152] sm:$0xf]
        %v1154 = vld [vmem:[%s1152 + $0x4] sm:$0xf]
        %v1155 = vld [vmem:[%s1152 + $0x8] sm:$0xf]
        %v1156 = vld [vmem:[%s1152 + $0xc] sm:$0xf]
        %s1157 = scalar_lea.vmem %s915, 1
        %v1158 = vld [vmem:[%s1157] sm:$0x1]
        %v1160 = vperm.slane %v1158, 0
        %v1166 = vunpack.c.l.b16 %v1153
        %v1167 = vunpack.c.l.b16 %v1154
        %v1168 = vunpack.c.l.b16 %v1155
        %v1169 = vunpack.c.l.b16 %v1156
        %v1170 = vpack.c.b16 %v1167, %v1166
        %v1171 = vpack.c.b16 %v1169, %v1168
        %1174 = vmatpush.bf16.msra.mxu0 0
        %1175 = vmatpush.bf16.msra.mxu0 0
        %1176 = vmatpush.bf16.msra.mxu0 0
        %1177 = vmatpush.bf16.msra.mxu0 0
        %1178 = vmatpush.bf16.msra.mxu0 0
        %1179 = vmatpush.bf16.msra.mxu0 0
        %1180 = vmatpush.bf16.msra.mxu0 %v1171
        %1181 = vmatpush.bf16.msra.mxu0 %v1170
        %1182 = vmatmul.bf16.gmra.mxu0 %v1009
        %v1183 = vpop.f32.mrf.mxu0
        %v1184 = vadd.f32 %v1160, %v1183
        %v1185 = vpop.f32.mrf.mxu0
        %1186 = vdwg.mxu0
        %s1187 = scalar_lea.vmem %s911, 80
        %v1188 = vld [vmem:[%s1187] sm:$0xf]
        %v1189 = vld [vmem:[%s1187 + $0x4] sm:$0xf]
        %v1190 = vld [vmem:[%s1187 + $0x8] sm:$0xf]
        %v1191 = vld [vmem:[%s1187 + $0xc] sm:$0xf]
        %s1192 = scalar_lea.vmem %s915, 5
        %v1193 = vld [vmem:[%s1192] sm:$0x1]
        %v1195 = vperm.slane %v1193, 0
        %v1201 = vunpack.c.l.b16 %v1188
        %v1202 = vunpack.c.l.b16 %v1189
        %v1203 = vunpack.c.l.b16 %v1190
        %v1204 = vunpack.c.l.b16 %v1191
        %v1205 = vpack.c.b16 %v1202, %v1201
        %v1206 = vpack.c.b16 %v1204, %v1203
        %1209 = vmatpush.bf16.msra.mxu0 0
        %1210 = vmatpush.bf16.msra.mxu0 0
        %1211 = vmatpush.bf16.msra.mxu0 0
        %1212 = vmatpush.bf16.msra.mxu0 0
        %1213 = vmatpush.bf16.msra.mxu0 0
        %1214 = vmatpush.bf16.msra.mxu0 0
        %1215 = vmatpush.bf16.msra.mxu0 %v1206
        %1216 = vmatpush.bf16.msra.mxu0 %v1205
        %1217 = vmatmul.bf16.gmra.mxu0 %v1009
        %v1218 = vpop.f32.mrf.mxu0
        %v1219 = vadd.f32 %v1195, %v1218
        %v1220 = vpop.f32.mrf.mxu0
        %1221 = vdwg.mxu0
        %s1222 = scalar_lea.vmem %s911, 144
        %v1223 = vld [vmem:[%s1222] sm:$0xf]
        %v1224 = vld [vmem:[%s1222 + $0x4] sm:$0xf]
        %v1225 = vld [vmem:[%s1222 + $0x8] sm:$0xf]
        %v1226 = vld [vmem:[%s1222 + $0xc] sm:$0xf]
        %s1227 = scalar_lea.vmem %s915, 9
        %v1228 = vld [vmem:[%s1227] sm:$0x1]
        %v1230 = vperm.slane %v1228, 0
        %v1236 = vunpack.c.l.b16 %v1223
        %v1237 = vunpack.c.l.b16 %v1224
        %v1238 = vunpack.c.l.b16 %v1225
        %v1239 = vunpack.c.l.b16 %v1226
        %v1240 = vpack.c.b16 %v1237, %v1236
        %v1241 = vpack.c.b16 %v1239, %v1238
        %1244 = vmatpush.bf16.msra.mxu0 0
        %1245 = vmatpush.bf16.msra.mxu0 0
        %1246 = vmatpush.bf16.msra.mxu0 0
        %1247 = vmatpush.bf16.msra.mxu0 0
        %1248 = vmatpush.bf16.msra.mxu0 0
        %1249 = vmatpush.bf16.msra.mxu0 0
        %1250 = vmatpush.bf16.msra.mxu0 %v1241
        %1251 = vmatpush.bf16.msra.mxu0 %v1240
        %1252 = vmatmul.bf16.gmra.mxu0 %v1009
        %v1253 = vpop.f32.mrf.mxu0
        %v1254 = vadd.f32 %v1230, %v1253
        %v1255 = vpop.f32.mrf.mxu0
        %1256 = vdwg.mxu0
        %v1257 = vpack.c.bf16 %v1184, %v1184
        %v1258 = vpack.c.bf16 %v1219, %v1219
        %v1260 = vsel %vm1096, %v1257, 0
        %v1263 = vsel %vm1096, %v1258, 0
        %1265 = vmatpush.bf16.xpose.msra.mxu0 0
        %1266 = vmatpush.bf16.xpose.msra.mxu0 0
        %1267 = vmatpush.bf16.xpose.msra.mxu0 0
        %1268 = vmatpush.bf16.xpose.msra.mxu0 0
        %1269 = vmatpush.bf16.xpose.msra.mxu0 0
        %1270 = vmatpush.bf16.xpose.msra.mxu0 0
        %1271 = vmatpush.bf16.xpose.msra.mxu0 0
        %1272 = vmatpush.bf16.xpose.msra.mxu0 %v1263
        %1273 = vmatmul.bf16.gmra.mxu0 %v1260
        %v1274 = vpop.f32.mrf.mxu0
        %v1275 = vadd.f32 0.0, %v1274
        %v1276 = vpop.f32.mrf.mxu0
        %1277 = vdwg.mxu0
        %v1278 = vmul.f32 %v1275, 0.35355338
        %v1279 = vsel %vm1096, %v1278, -inf
        %1280 = vmax.xlane.f32.xlu0 %v1279
        %v1281 = vpop.xlane.xlu0 %1280
        %v1282 = vsub.f32 %v1278, %v1281
        %v1283 = vmul.f32 %v1282, 1.442695
        %v1284 = vpow.pop %v1283
        %v1285 = vsel %vm1096, %v1284, 0.0
        %1286 = vadd.xlane.f32.xlu0 %v1285
        %v1287 = vpop.xlane.xlu0 %1286
        %v1288 = vrcp.pop %v1287
        %v1289 = vmul.f32 %v1284, %v1288
        %v1290 = vpack.c.bf16 %v1289, %v1289
        %v1291 = vpack.c.bf16 %v1254, %v1254
        %v1293 = vsel %vm1096, %v1290, 0
        %v1296 = vsel %vm1133, %v1291, 0
        %1298 = vmatpush.bf16.msra.mxu0 0
        %1299 = vmatpush.bf16.msra.mxu0 0
        %1300 = vmatpush.bf16.msra.mxu0 0
        %1301 = vmatpush.bf16.msra.mxu0 0
        %1302 = vmatpush.bf16.msra.mxu0 0
        %1303 = vmatpush.bf16.msra.mxu0 0
        %1304 = vmatpush.bf16.msra.mxu0 0
        %1305 = vmatpush.bf16.msra.mxu0 %v1296
        %1306 = vmatmul.bf16.gmra.mxu0 %v1293
        %v1307 = vpop.f32.mrf.mxu0
        %v1308 = vadd.f32 0.0, %v1307
        %v1309 = vpop.f32.mrf.mxu0
        %1310 = vdwg.mxu0
        %v1311 = vpack.c.bf16 %v1308, %v1308
        %s1312 = scalar_lea.vmem %s920, 4
        %v1313 = vld [vmem:[%s1312] sm:$0xf]
        %v1315 = vsel %vm1096, %v1311, 0
        %v1318 = vsel %vm1133, %v1313, 0
        %1320 = vmatpush.bf16.msra.mxu0 0
        %1321 = vmatpush.bf16.msra.mxu0 0
        %1322 = vmatpush.bf16.msra.mxu0 0
        %1323 = vmatpush.bf16.msra.mxu0 0
        %1324 = vmatpush.bf16.msra.mxu0 0
        %1325 = vmatpush.bf16.msra.mxu0 0
        %1326 = vmatpush.bf16.msra.mxu0 0
        %1327 = vmatpush.bf16.msra.mxu0 %v1318
        %1328 = vmatmul.bf16.gmra.mxu0 %v1315
        %v1329 = vpop.f32.mrf.mxu0
        %v1330 = vadd.f32 0.0, %v1329
        %v1331 = vpop.f32.mrf.mxu0
        %1332 = vdwg.mxu0
        %v1334 = vsel %vm1096, %v1150, 0
        %v1337 = vsel %vm1133, %v1151, 0
        %1339 = vmatpush.bf16.msra.mxu0 0
        %1340 = vmatpush.bf16.msra.mxu0 0
        %1341 = vmatpush.bf16.msra.mxu0 0
        %1342 = vmatpush.bf16.msra.mxu0 0
        %1343 = vmatpush.bf16.msra.mxu0 0
        %1344 = vmatpush.bf16.msra.mxu0 0
        %1345 = vmatpush.bf16.msra.mxu0 0
        %1346 = vmatpush.bf16.msra.mxu0 %v1337
        %1347 = vmatmul.bf16.gmra.mxu0 %v1334
        %v1348 = vpop.f32.mrf.mxu0
        %v1349 = vadd.f32 %v1330, %v1348
        %v1350 = vpop.f32.mrf.mxu0
        %1351 = vdwg.mxu0
        %s1352 = scalar_lea.vmem %s911, 32
        %v1353 = vld [vmem:[%s1352] sm:$0xf]
        %v1354 = vld [vmem:[%s1352 + $0x4] sm:$0xf]
        %v1355 = vld [vmem:[%s1352 + $0x8] sm:$0xf]
        %v1356 = vld [vmem:[%s1352 + $0xc] sm:$0xf]
        %s1357 = scalar_lea.vmem %s915, 2
        %v1358 = vld [vmem:[%s1357] sm:$0x1]
        %v1360 = vperm.slane %v1358, 0
        %v1366 = vunpack.c.l.b16 %v1353
        %v1367 = vunpack.c.l.b16 %v1354
        %v1368 = vunpack.c.l.b16 %v1355
        %v1369 = vunpack.c.l.b16 %v1356
        %v1370 = vpack.c.b16 %v1367, %v1366
        %v1371 = vpack.c.b16 %v1369, %v1368
        %1374 = vmatpush.bf16.msra.mxu0 0
        %1375 = vmatpush.bf16.msra.mxu0 0
        %1376 = vmatpush.bf16.msra.mxu0 0
        %1377 = vmatpush.bf16.msra.mxu0 0
        %1378 = vmatpush.bf16.msra.mxu0 0
        %1379 = vmatpush.bf16.msra.mxu0 0
        %1380 = vmatpush.bf16.msra.mxu0 %v1371
        %1381 = vmatpush.bf16.msra.mxu0 %v1370
        %1382 = vmatmul.bf16.gmra.mxu0 %v1009
        %v1383 = vpop.f32.mrf.mxu0
        %v1384 = vadd.f32 %v1360, %v1383
        %v1385 = vpop.f32.mrf.mxu0
        %1386 = vdwg.mxu0
        %s1387 = scalar_lea.vmem %s911, 96
        %v1388 = vld [vmem:[%s1387] sm:$0xf]
        %v1389 = vld [vmem:[%s1387 + $0x4] sm:$0xf]
        %v1390 = vld [vmem:[%s1387 + $0x8] sm:$0xf]
        %v1391 = vld [vmem:[%s1387 + $0xc] sm:$0xf]
        %s1392 = scalar_lea.vmem %s915, 6
        %v1393 = vld [vmem:[%s1392] sm:$0x1]
        %v1395 = vperm.slane %v1393, 0
        %v1401 = vunpack.c.l.b16 %v1388
        %v1402 = vunpack.c.l.b16 %v1389
        %v1403 = vunpack.c.l.b16 %v1390
        %v1404 = vunpack.c.l.b16 %v1391
        %v1405 = vpack.c.b16 %v1402, %v1401
        %v1406 = vpack.c.b16 %v1404, %v1403
        %1409 = vmatpush.bf16.msra.mxu0 0
        %1410 = vmatpush.bf16.msra.mxu0 0
        %1411 = vmatpush.bf16.msra.mxu0 0
        %1412 = vmatpush.bf16.msra.mxu0 0
        %1413 = vmatpush.bf16.msra.mxu0 0
        %1414 = vmatpush.bf16.msra.mxu0 0
        %1415 = vmatpush.bf16.msra.mxu0 %v1406
        %1416 = vmatpush.bf16.msra.mxu0 %v1405
        %1417 = vmatmul.bf16.gmra.mxu0 %v1009
        %v1418 = vpop.f32.mrf.mxu0
        %v1419 = vadd.f32 %v1395, %v1418
        %v1420 = vpop.f32.mrf.mxu0
        %1421 = vdwg.mxu0
        %s1422 = scalar_lea.vmem %s911, 160
        %v1423 = vld [vmem:[%s1422] sm:$0xf]
        %v1424 = vld [vmem:[%s1422 + $0x4] sm:$0xf]
        %v1425 = vld [vmem:[%s1422 + $0x8] sm:$0xf]
        %v1426 = vld [vmem:[%s1422 + $0xc] sm:$0xf]
        %s1427 = scalar_lea.vmem %s915, 10
        %v1428 = vld [vmem:[%s1427] sm:$0x1]
        %v1430 = vperm.slane %v1428, 0
        %v1436 = vunpack.c.l.b16 %v1423
        %v1437 = vunpack.c.l.b16 %v1424
        %v1438 = vunpack.c.l.b16 %v1425
        %v1439 = vunpack.c.l.b16 %v1426
        %v1440 = vpack.c.b16 %v1437, %v1436
        %v1441 = vpack.c.b16 %v1439, %v1438
        %1444 = vmatpush.bf16.msra.mxu0 0
        %1445 = vmatpush.bf16.msra.mxu0 0
        %1446 = vmatpush.bf16.msra.mxu0 0
        %1447 = vmatpush.bf16.msra.mxu0 0
        %1448 = vmatpush.bf16.msra.mxu0 0
        %1449 = vmatpush.bf16.msra.mxu0 0
        %1450 = vmatpush.bf16.msra.mxu0 %v1441
        %1451 = vmatpush.bf16.msra.mxu0 %v1440
        %1452 = vmatmul.bf16.gmra.mxu0 %v1009
        %v1453 = vpop.f32.mrf.mxu0
        %v1454 = vadd.f32 %v1430, %v1453
        %v1455 = vpop.f32.mrf.mxu0
        %1456 = vdwg.mxu0
        %v1457 = vpack.c.bf16 %v1384, %v1384
        %v1458 = vpack.c.bf16 %v1419, %v1419
        %v1460 = vsel %vm1096, %v1457, 0
        %v1463 = vsel %vm1096, %v1458, 0
        %1465 = vmatpush.bf16.xpose.msra.mxu0 0
        %1466 = vmatpush.bf16.xpose.msra.mxu0 0
        %1467 = vmatpush.bf16.xpose.msra.mxu0 0
        %1468 = vmatpush.bf16.xpose.msra.mxu0 0
        %1469 = vmatpush.bf16.xpose.msra.mxu0 0
        %1470 = vmatpush.bf16.xpose.msra.mxu0 0
        %1471 = vmatpush.bf16.xpose.msra.mxu0 0
        %1472 = vmatpush.bf16.xpose.msra.mxu0 %v1463
        %1473 = vmatmul.bf16.gmra.mxu0 %v1460
        %v1474 = vpop.f32.mrf.mxu0
        %v1475 = vadd.f32 0.0, %v1474
        %v1476 = vpop.f32.mrf.mxu0
        %1477 = vdwg.mxu0
        %v1478 = vmul.f32 %v1475, 0.35355338
        %v1479 = vsel %vm1096, %v1478, -inf
        %1480 = vmax.xlane.f32.xlu0 %v1479
        %v1481 = vpop.xlane.xlu0 %1480
        %v1482 = vsub.f32 %v1478, %v1481
        %v1483 = vmul.f32 %v1482, 1.442695
        %v1484 = vpow.pop %v1483
        %v1485 = vsel %vm1096, %v1484, 0.0
        %1486 = vadd.xlane.f32.xlu0 %v1485
        %v1487 = vpop.xlane.xlu0 %1486
        %v1488 = vrcp.pop %v1487
        %v1489 = vmul.f32 %v1484, %v1488
        %v1490 = vpack.c.bf16 %v1489, %v1489
        %v1491 = vpack.c.bf16 %v1454, %v1454
        %v1493 = vsel %vm1096, %v1490, 0
        %v1496 = vsel %vm1133, %v1491, 0
        %1498 = vmatpush.bf16.msra.mxu0 0
        %1499 = vmatpush.bf16.msra.mxu0 0
        %1500 = vmatpush.bf16.msra.mxu0 0
        %1501 = vmatpush.bf16.msra.mxu0 0
        %1502 = vmatpush.bf16.msra.mxu0 0
        %1503 = vmatpush.bf16.msra.mxu0 0
        %1504 = vmatpush.bf16.msra.mxu0 0
        %1505 = vmatpush.bf16.msra.mxu0 %v1496
        %1506 = vmatmul.bf16.gmra.mxu0 %v1493
        %v1507 = vpop.f32.mrf.mxu0
        %v1508 = vadd.f32 0.0, %v1507
        %v1509 = vpop.f32.mrf.mxu0
        %1510 = vdwg.mxu0
        %v1511 = vpack.c.bf16 %v1508, %v1508
        %s1512 = scalar_lea.vmem %s920, 8
        %v1513 = vld [vmem:[%s1512] sm:$0xf]
        %v1515 = vsel %vm1096, %v1511, 0
        %v1518 = vsel %vm1133, %v1513, 0
        %1520 = vmatpush.bf16.msra.mxu0 0
        %1521 = vmatpush.bf16.msra.mxu0 0
        %1522 = vmatpush.bf16.msra.mxu0 0
        %1523 = vmatpush.bf16.msra.mxu0 0
        %1524 = vmatpush.bf16.msra.mxu0 0
        %1525 = vmatpush.bf16.msra.mxu0 0
        %1526 = vmatpush.bf16.msra.mxu0 0
        %1527 = vmatpush.bf16.msra.mxu0 %v1518
        %1528 = vmatmul.bf16.gmra.mxu0 %v1515
        %v1529 = vpop.f32.mrf.mxu0
        %v1530 = vadd.f32 0.0, %v1529
        %v1531 = vpop.f32.mrf.mxu0
        %1532 = vdwg.mxu0
        %v1533 = vadd.f32 %v1349, %v1530
        %s1534 = scalar_lea.vmem %s911, 48
        %v1535 = vld [vmem:[%s1534] sm:$0xf]
        %v1536 = vld [vmem:[%s1534 + $0x4] sm:$0xf]
        %v1537 = vld [vmem:[%s1534 + $0x8] sm:$0xf]
        %v1538 = vld [vmem:[%s1534 + $0xc] sm:$0xf]
        %s1539 = scalar_lea.vmem %s915, 3
        %v1540 = vld [vmem:[%s1539] sm:$0x1]
        %v1542 = vperm.slane %v1540, 0
        %v1548 = vunpack.c.l.b16 %v1535
        %v1549 = vunpack.c.l.b16 %v1536
        %v1550 = vunpack.c.l.b16 %v1537
        %v1551 = vunpack.c.l.b16 %v1538
        %v1552 = vpack.c.b16 %v1549, %v1548
        %v1553 = vpack.c.b16 %v1551, %v1550
        %1556 = vmatpush.bf16.msra.mxu0 0
        %1557 = vmatpush.bf16.msra.mxu0 0
        %1558 = vmatpush.bf16.msra.mxu0 0
        %1559 = vmatpush.bf16.msra.mxu0 0
        %1560 = vmatpush.bf16.msra.mxu0 0
        %1561 = vmatpush.bf16.msra.mxu0 0
        %1562 = vmatpush.bf16.msra.mxu0 %v1553
        %1563 = vmatpush.bf16.msra.mxu0 %v1552
        %1564 = vmatmul.bf16.gmra.mxu0 %v1009
        %v1565 = vpop.f32.mrf.mxu0
        %v1566 = vadd.f32 %v1542, %v1565
        %v1567 = vpop.f32.mrf.mxu0
        %1568 = vdwg.mxu0
        %s1569 = scalar_lea.vmem %s911, 112
        %v1570 = vld [vmem:[%s1569] sm:$0xf]
        %v1571 = vld [vmem:[%s1569 + $0x4] sm:$0xf]
        %v1572 = vld [vmem:[%s1569 + $0x8] sm:$0xf]
        %v1573 = vld [vmem:[%s1569 + $0xc] sm:$0xf]
        %s1574 = scalar_lea.vmem %s915, 7
        %v1575 = vld [vmem:[%s1574] sm:$0x1]
        %v1577 = vperm.slane %v1575, 0
        %v1583 = vunpack.c.l.b16 %v1570
        %v1584 = vunpack.c.l.b16 %v1571
        %v1585 = vunpack.c.l.b16 %v1572
        %v1586 = vunpack.c.l.b16 %v1573
        %v1587 = vpack.c.b16 %v1584, %v1583
        %v1588 = vpack.c.b16 %v1586, %v1585
        %1591 = vmatpush.bf16.msra.mxu0 0
        %1592 = vmatpush.bf16.msra.mxu0 0
        %1593 = vmatpush.bf16.msra.mxu0 0
        %1594 = vmatpush.bf16.msra.mxu0 0
        %1595 = vmatpush.bf16.msra.mxu0 0
        %1596 = vmatpush.bf16.msra.mxu0 0
        %1597 = vmatpush.bf16.msra.mxu0 %v1588
        %1598 = vmatpush.bf16.msra.mxu0 %v1587
        %1599 = vmatmul.bf16.gmra.mxu0 %v1009
        %v1600 = vpop.f32.mrf.mxu0
        %v1601 = vadd.f32 %v1577, %v1600
        %v1602 = vpop.f32.mrf.mxu0
        %1603 = vdwg.mxu0
        %s1604 = scalar_lea.vmem %s911, 176
        %v1605 = vld [vmem:[%s1604] sm:$0xf]
        %v1606 = vld [vmem:[%s1604 + $0x4] sm:$0xf]
        %v1607 = vld [vmem:[%s1604 + $0x8] sm:$0xf]
        %v1608 = vld [vmem:[%s1604 + $0xc] sm:$0xf]
        %s1609 = scalar_lea.vmem %s915, 11
        %v1610 = vld [vmem:[%s1609] sm:$0x1]
        %v1612 = vperm.slane %v1610, 0
        %v1618 = vunpack.c.l.b16 %v1605
        %v1619 = vunpack.c.l.b16 %v1606
        %v1620 = vunpack.c.l.b16 %v1607
        %v1621 = vunpack.c.l.b16 %v1608
        %v1622 = vpack.c.b16 %v1619, %v1618
        %v1623 = vpack.c.b16 %v1621, %v1620
        %1626 = vmatpush.bf16.msra.mxu0 0
        %1627 = vmatpush.bf16.msra.mxu0 0
        %1628 = vmatpush.bf16.msra.mxu0 0
        %1629 = vmatpush.bf16.msra.mxu0 0
        %1630 = vmatpush.bf16.msra.mxu0 0
        %1631 = vmatpush.bf16.msra.mxu0 0
        %1632 = vmatpush.bf16.msra.mxu0 %v1623
        %1633 = vmatpush.bf16.msra.mxu0 %v1622
        %1634 = vmatmul.bf16.gmra.mxu0 %v1009
        %v1635 = vpop.f32.mrf.mxu0
        %v1636 = vadd.f32 %v1612, %v1635
        %v1637 = vpop.f32.mrf.mxu0
        %1638 = vdwg.mxu0
        %v1639 = vpack.c.bf16 %v1566, %v1566
        %v1640 = vpack.c.bf16 %v1601, %v1601
        %v1642 = vsel %vm1096, %v1639, 0
        %v1645 = vsel %vm1096, %v1640, 0
        %1647 = vmatpush.bf16.xpose.msra.mxu0 0
        %1648 = vmatpush.bf16.xpose.msra.mxu0 0
        %1649 = vmatpush.bf16.xpose.msra.mxu0 0
        %1650 = vmatpush.bf16.xpose.msra.mxu0 0
        %1651 = vmatpush.bf16.xpose.msra.mxu0 0
        %1652 = vmatpush.bf16.xpose.msra.mxu0 0
        %1653 = vmatpush.bf16.xpose.msra.mxu0 0
        %1654 = vmatpush.bf16.xpose.msra.mxu0 %v1645
        %1655 = vmatmul.bf16.gmra.mxu0 %v1642
        %v1656 = vpop.f32.mrf.mxu0
        %v1657 = vadd.f32 0.0, %v1656
        %v1658 = vpop.f32.mrf.mxu0
        %1659 = vdwg.mxu0
        %v1660 = vmul.f32 %v1657, 0.35355338
        %v1661 = vsel %vm1096, %v1660, -inf
        %1662 = vmax.xlane.f32.xlu0 %v1661
        %v1663 = vpop.xlane.xlu0 %1662
        %v1664 = vsub.f32 %v1660, %v1663
        %v1665 = vmul.f32 %v1664, 1.442695
        %v1666 = vpow.pop %v1665
        %v1667 = vsel %vm1096, %v1666, 0.0
        %1668 = vadd.xlane.f32.xlu0 %v1667
        %v1669 = vpop.xlane.xlu0 %1668
        %v1670 = vrcp.pop %v1669
        %v1671 = vmul.f32 %v1666, %v1670
        %v1672 = vpack.c.bf16 %v1671, %v1671
        %v1673 = vpack.c.bf16 %v1636, %v1636
        %v1675 = vsel %vm1096, %v1672, 0
        %v1678 = vsel %vm1133, %v1673, 0
        %1680 = vmatpush.bf16.msra.mxu0 0
        %1681 = vmatpush.bf16.msra.mxu0 0
        %1682 = vmatpush.bf16.msra.mxu0 0
        %1683 = vmatpush.bf16.msra.mxu0 0
        %1684 = vmatpush.bf16.msra.mxu0 0
        %1685 = vmatpush.bf16.msra.mxu0 0
        %1686 = vmatpush.bf16.msra.mxu0 0
        %1687 = vmatpush.bf16.msra.mxu0 %v1678
        %1688 = vmatmul.bf16.gmra.mxu0 %v1675
        %v1689 = vpop.f32.mrf.mxu0
        %v1690 = vadd.f32 0.0, %v1689
        %v1691 = vpop.f32.mrf.mxu0
        %1692 = vdwg.mxu0
        %v1693 = vpack.c.bf16 %v1690, %v1690
        %s1694 = scalar_lea.vmem %s920, 12
        %v1695 = vld [vmem:[%s1694] sm:$0xf]
        %v1697 = vsel %vm1096, %v1693, 0
        %v1700 = vsel %vm1133, %v1695, 0
        %1702 = vmatpush.bf16.msra.mxu0 0
        %1703 = vmatpush.bf16.msra.mxu0 0
        %1704 = vmatpush.bf16.msra.mxu0 0
        %1705 = vmatpush.bf16.msra.mxu0 0
        %1706 = vmatpush.bf16.msra.mxu0 0
        %1707 = vmatpush.bf16.msra.mxu0 0
        %1708 = vmatpush.bf16.msra.mxu0 0
        %1709 = vmatpush.bf16.msra.mxu0 %v1700
        %1710 = vmatmul.bf16.gmra.mxu0 %v1697
        %v1711 = vpop.f32.mrf.mxu0
        %v1712 = vadd.f32 0.0, %v1711
        %v1713 = vpop.f32.mrf.mxu0
        %1714 = vdwg.mxu0
        %v1715 = vadd.f32 %v1533, %v1712
        %v1716 = vld [vmem:[%s923] sm:$0x1]
        %v1718 = vperm.slane %v1716, 0
        %v1720 = vadd.f32 %v1715, %v1718
        %v1721 = vadd.f32 %v1720, %v983
        %v1722 = vld [vmem:[%s926] sm:$0x1]
        %v1723 = vld [vmem:[%s929] sm:$0x1]
        %v1724 = vsel %vm1007, %v1721, 0.0
        %1725 = vadd.xlane.f32.xlu0 %v1724
        %v1726 = vpop.xlane.xlu0 %1725
        %v1727 = vrcp.pop 32.0
        %v1728 = vmul.f32 32.0, %v1727
        %v1729 = vsub.f32 1.0, %v1728
        %v1730 = vmul.f32 %v1727, %v1729
        %v1731 = vadd.f32 %v1727, %v1730
        %vm1732 = vweird.f32 %v1727
        %v1733 = vsel %vm1732, %v1727, %v1731
        %v1734 = vmul.f32 %v1726, %v1733
        %v1735 = vsub.f32 %v1721, %v1734
        %v1736 = vmul.f32 %v1735, %v1735
        %v1737 = vsel %vm1007, %v1736, 0.0
        %1738 = vadd.xlane.f32.xlu0 %v1737
        %v1739 = vpop.xlane.xlu0 %1738
        %v1740 = vmul.f32 %v1739, %v1733
        %v1741 = vadd.f32 %v1740, 1e-12
        %v1742 = vrsqrt.pop %v1741
        %v1743 = vmul.f32 %v1742, %v1741
        %v1744 = vmul.f32 %v1743, %v1742
        %v1745 = vmul.f32 0.5, %v1744
        %v1746 = vsub.f32 1.5, %v1745
        %v1747 = vmul.f32 %v1742, %v1746
        %vm1748 = vweird.f32 %v1741
        %vm1749 = vweird.f32 %v1742
        %vm1750 = vmor %vm1748, %vm1749
        %v1751 = vsel %vm1750, %v1742, %v1747
        %v1752 = vmul.f32 %v1735, %v1751
        %v1754 = vperm.slane %v1722, 0
        %v1756 = vmul.f32 %v1752, %v1754
        %v1758 = vperm.slane %v1723, 0
        %v1760 = vadd.f32 %v1756, %v1758
        %v1761 = vld [vmem:[%s906] sm:$0x1]
        %v1762 = vpack.c.bf16 %v1760, %v1760
        %v1763 = vpack.c.bf16 %v985, %v984
        %v1764 = vld [vmem:[%s934] sm:$0xf]
        %v1765 = vld [vmem:[%s934 + $0x4] sm:$0xf]
        %v1766 = vld [vmem:[%s934 + $0x8] sm:$0xf]
        %v1767 = vld [vmem:[%s934 + $0xc] sm:$0xf]
        %v1768 = vld [vmem:[%s938] sm:$0x1]
        %v1770 = vperm.slane %v1768, 0
        %v1776 = vunpack.c.l.b16 %v1764
        %v1777 = vunpack.c.l.b16 %v1765
        %v1778 = vunpack.c.l.b16 %v1766
        %v1779 = vunpack.c.l.b16 %v1767
        %v1780 = vpack.c.b16 %v1777, %v1776
        %v1781 = vpack.c.b16 %v1779, %v1778
        %v1785 = vsel %vm1007, %v1762, 0
        %1787 = vmatpush.bf16.msra.mxu0 0
        %1788 = vmatpush.bf16.msra.mxu0 0
        %1789 = vmatpush.bf16.msra.mxu0 0
        %1790 = vmatpush.bf16.msra.mxu0 0
        %1791 = vmatpush.bf16.msra.mxu0 0
        %1792 = vmatpush.bf16.msra.mxu0 0
        %1793 = vmatpush.bf16.msra.mxu0 %v1781
        %1794 = vmatpush.bf16.msra.mxu0 %v1780
        %1795 = vmatmul.bf16.gmra.mxu0 %v1785
        %v1796 = vpop.f32.mrf.mxu0
        %v1797 = vadd.f32 %v1770, %v1796
        %v1798 = vpop.f32.mrf.mxu0
        %1799 = vdwg.mxu0
        %s1800 = scalar_lea.vmem %s934, 64
        %v1801 = vld [vmem:[%s1800] sm:$0xf]
        %v1802 = vld [vmem:[%s1800 + $0x4] sm:$0xf]
        %v1803 = vld [vmem:[%s1800 + $0x8] sm:$0xf]
        %v1804 = vld [vmem:[%s1800 + $0xc] sm:$0xf]
        %s1805 = scalar_lea.vmem %s938, 4
        %v1806 = vld [vmem:[%s1805] sm:$0x1]
        %v1808 = vperm.slane %v1806, 0
        %v1814 = vunpack.c.l.b16 %v1801
        %v1815 = vunpack.c.l.b16 %v1802
        %v1816 = vunpack.c.l.b16 %v1803
        %v1817 = vunpack.c.l.b16 %v1804
        %v1818 = vpack.c.b16 %v1815, %v1814
        %v1819 = vpack.c.b16 %v1817, %v1816
        %v1823 = vsel %vm1007, %v1763, 0
        %1825 = vmatpush.bf16.msra.mxu0 0
        %1826 = vmatpush.bf16.msra.mxu0 0
        %1827 = vmatpush.bf16.msra.mxu0 0
        %1828 = vmatpush.bf16.msra.mxu0 0
        %1829 = vmatpush.bf16.msra.mxu0 0
        %1830 = vmatpush.bf16.msra.mxu0 0
        %1831 = vmatpush.bf16.msra.mxu0 %v1819
        %1832 = vmatpush.bf16.msra.mxu0 %v1818
        %1833 = vmatmul.bf16.gmra.mxu0 %v1823
        %v1834 = vpop.f32.mrf.mxu0
        %v1835 = vadd.f32 %v1808, %v1834
        %v1836 = vpop.f32.mrf.mxu0
        %v1837 = vadd.f32 %v1808, %v1836
        %1838 = vdwg.mxu0
        %s1839 = scalar_lea.vmem %s934, 128
        %v1840 = vld [vmem:[%s1839] sm:$0xf]
        %v1841 = vld [vmem:[%s1839 + $0x4] sm:$0xf]
        %v1842 = vld [vmem:[%s1839 + $0x8] sm:$0xf]
        %v1843 = vld [vmem:[%s1839 + $0xc] sm:$0xf]
        %s1844 = scalar_lea.vmem %s938, 8
        %v1845 = vld [vmem:[%s1844] sm:$0x1]
        %v1847 = vperm.slane %v1845, 0
        %v1853 = vunpack.c.l.b16 %v1840
        %v1854 = vunpack.c.l.b16 %v1841
        %v1855 = vunpack.c.l.b16 %v1842
        %v1856 = vunpack.c.l.b16 %v1843
        %v1857 = vpack.c.b16 %v1854, %v1853
        %v1858 = vpack.c.b16 %v1856, %v1855
        %1861 = vmatpush.bf16.msra.mxu0 0
        %1862 = vmatpush.bf16.msra.mxu0 0
        %1863 = vmatpush.bf16.msra.mxu0 0
        %1864 = vmatpush.bf16.msra.mxu0 0
        %1865 = vmatpush.bf16.msra.mxu0 0
        %1866 = vmatpush.bf16.msra.mxu0 0
        %1867 = vmatpush.bf16.msra.mxu0 %v1858
        %1868 = vmatpush.bf16.msra.mxu0 %v1857
        %1869 = vmatmul.bf16.gmra.mxu0 %v1823
        %v1870 = vpop.f32.mrf.mxu0
        %v1871 = vadd.f32 %v1847, %v1870
        %v1872 = vpop.f32.mrf.mxu0
        %v1873 = vadd.f32 %v1847, %v1872
        %1874 = vdwg.mxu0
        %v1875 = vpack.c.bf16 %v1797, %v1797
        %v1876 = vpack.c.bf16 %v1837, %v1835
        %v1878 = vsel %vm1096, %v1875, 0
        %v1881 = vsel %vm1096, %v1876, 0
        %1883 = vmatpush.bf16.xpose.msra.mxu0 0
        %1884 = vmatpush.bf16.xpose.msra.mxu0 0
        %1885 = vmatpush.bf16.xpose.msra.mxu0 0
        %1886 = vmatpush.bf16.xpose.msra.mxu0 0
        %1887 = vmatpush.bf16.xpose.msra.mxu0 0
        %1888 = vmatpush.bf16.xpose.msra.mxu0 0
        %1889 = vmatpush.bf16.xpose.msra.mxu0 0
        %1890 = vmatpush.bf16.xpose.msra.mxu0 %v1881
        %1891 = vmatmul.bf16.gmra.mxu0 %v1878
        %v1892 = vpop.f32.mrf.mxu0
        %v1893 = vadd.f32 0.0, %v1892
        %v1894 = vpop.f32.mrf.mxu0
        %1895 = vdwg.mxu0
        %v1896 = vmul.f32 %v1893, 0.35355338
        %v1898 = vperm.slane %v1761, 0
        %v1900 = vadd.f32 %v1896, %v1898
        %vm1901 = vcmask 130048
        %v1902 = vsel %vm1901, %v1900, -inf
        %1903 = vmax.xlane.f32.xlu0 %v1902
        %v1904 = vpop.xlane.xlu0 %1903
        %v1905 = vsub.f32 %v1900, %v1904
        %v1906 = vmul.f32 %v1905, 1.442695
        %v1907 = vpow.pop %v1906
        %v1908 = vsel %vm1901, %v1907, 0.0
        %1909 = vadd.xlane.f32.xlu0 %v1908
        %v1910 = vpop.xlane.xlu0 %1909
        %v1911 = vrcp.pop %v1910
        %v1912 = vmul.f32 %v1907, %v1911
        %v1913 = vpack.c.bf16 %v1912, %v1912
        %v1914 = vpack.c.bf16 %v1873, %v1871
        %v1916 = vsel %vm1901, %v1913, 0
        %1918 = vmatpush.bf16.msra.mxu0 0
        %1919 = vmatpush.bf16.msra.mxu0 0
        %1920 = vmatpush.bf16.msra.mxu0 0
        %1921 = vmatpush.bf16.msra.mxu0 0
        %1922 = vmatpush.bf16.msra.mxu0 0
        %1923 = vmatpush.bf16.msra.mxu0 0
        %1924 = vmatpush.bf16.msra.mxu0 0
        %1925 = vmatpush.bf16.msra.mxu0 %v1914
        %1926 = vmatmul.bf16.gmra.mxu0 %v1916
        %v1927 = vpop.f32.mrf.mxu0
        %v1928 = vadd.f32 0.0, %v1927
        %v1929 = vpop.f32.mrf.mxu0
        %1930 = vdwg.mxu0
        %v1931 = vpack.c.bf16 %v1928, %v1928
        %v1932 = vld [vmem:[%s943] sm:$0xf]
        %s1933 = scalar_lea.vmem %s934, 16
        %v1934 = vld [vmem:[%s1933] sm:$0xf]
        %v1935 = vld [vmem:[%s1933 + $0x4] sm:$0xf]
        %v1936 = vld [vmem:[%s1933 + $0x8] sm:$0xf]
        %v1937 = vld [vmem:[%s1933 + $0xc] sm:$0xf]
        %s1938 = scalar_lea.vmem %s938, 1
        %v1939 = vld [vmem:[%s1938] sm:$0x1]
        %v1941 = vperm.slane %v1939, 0
        %v1947 = vunpack.c.l.b16 %v1934
        %v1948 = vunpack.c.l.b16 %v1935
        %v1949 = vunpack.c.l.b16 %v1936
        %v1950 = vunpack.c.l.b16 %v1937
        %v1951 = vpack.c.b16 %v1948, %v1947
        %v1952 = vpack.c.b16 %v1950, %v1949
        %1955 = vmatpush.bf16.msra.mxu0 0
        %1956 = vmatpush.bf16.msra.mxu0 0
        %1957 = vmatpush.bf16.msra.mxu0 0
        %1958 = vmatpush.bf16.msra.mxu0 0
        %1959 = vmatpush.bf16.msra.mxu0 0
        %1960 = vmatpush.bf16.msra.mxu0 0
        %1961 = vmatpush.bf16.msra.mxu0 %v1952
        %1962 = vmatpush.bf16.msra.mxu0 %v1951
        %1963 = vmatmul.bf16.gmra.mxu0 %v1785
        %v1964 = vpop.f32.mrf.mxu0
        %v1965 = vadd.f32 %v1941, %v1964
        %v1966 = vpop.f32.mrf.mxu0
        %1967 = vdwg.mxu0
        %s1968 = scalar_lea.vmem %s934, 80
        %v1969 = vld [vmem:[%s1968] sm:$0xf]
        %v1970 = vld [vmem:[%s1968 + $0x4] sm:$0xf]
        %v1971 = vld [vmem:[%s1968 + $0x8] sm:$0xf]
        %v1972 = vld [vmem:[%s1968 + $0xc] sm:$0xf]
        %s1973 = scalar_lea.vmem %s938, 5
        %v1974 = vld [vmem:[%s1973] sm:$0x1]
        %v1976 = vperm.slane %v1974, 0
        %v1982 = vunpack.c.l.b16 %v1969
        %v1983 = vunpack.c.l.b16 %v1970
        %v1984 = vunpack.c.l.b16 %v1971
        %v1985 = vunpack.c.l.b16 %v1972
        %v1986 = vpack.c.b16 %v1983, %v1982
        %v1987 = vpack.c.b16 %v1985, %v1984
        %1990 = vmatpush.bf16.msra.mxu0 0
        %1991 = vmatpush.bf16.msra.mxu0 0
        %1992 = vmatpush.bf16.msra.mxu0 0
        %1993 = vmatpush.bf16.msra.mxu0 0
        %1994 = vmatpush.bf16.msra.mxu0 0
        %1995 = vmatpush.bf16.msra.mxu0 0
        %1996 = vmatpush.bf16.msra.mxu0 %v1987
        %1997 = vmatpush.bf16.msra.mxu0 %v1986
        %1998 = vmatmul.bf16.gmra.mxu0 %v1823
        %v1999 = vpop.f32.mrf.mxu0
        %v2000 = vadd.f32 %v1976, %v1999
        %v2001 = vpop.f32.mrf.mxu0
        %v2002 = vadd.f32 %v1976, %v2001
        %2003 = vdwg.mxu0
        %s2004 = scalar_lea.vmem %s934, 144
        %v2005 = vld [vmem:[%s2004] sm:$0xf]
        %v2006 = vld [vmem:[%s2004 + $0x4] sm:$0xf]
        %v2007 = vld [vmem:[%s2004 + $0x8] sm:$0xf]
        %v2008 = vld [vmem:[%s2004 + $0xc] sm:$0xf]
        %s2009 = scalar_lea.vmem %s938, 9
        %v2010 = vld [vmem:[%s2009] sm:$0x1]
        %v2012 = vperm.slane %v2010, 0
        %v2018 = vunpack.c.l.b16 %v2005
        %v2019 = vunpack.c.l.b16 %v2006
        %v2020 = vunpack.c.l.b16 %v2007
        %v2021 = vunpack.c.l.b16 %v2008
        %v2022 = vpack.c.b16 %v2019, %v2018
        %v2023 = vpack.c.b16 %v2021, %v2020
        %2026 = vmatpush.bf16.msra.mxu0 0
        %2027 = vmatpush.bf16.msra.mxu0 0
        %2028 = vmatpush.bf16.msra.mxu0 0
        %2029 = vmatpush.bf16.msra.mxu0 0
        %2030 = vmatpush.bf16.msra.mxu0 0
        %2031 = vmatpush.bf16.msra.mxu0 0
        %2032 = vmatpush.bf16.msra.mxu0 %v2023
        %2033 = vmatpush.bf16.msra.mxu0 %v2022
        %2034 = vmatmul.bf16.gmra.mxu0 %v1823
        %v2035 = vpop.f32.mrf.mxu0
        %v2036 = vadd.f32 %v2012, %v2035
        %v2037 = vpop.f32.mrf.mxu0
        %v2038 = vadd.f32 %v2012, %v2037
        %2039 = vdwg.mxu0
        %v2040 = vpack.c.bf16 %v1965, %v1965
        %v2041 = vpack.c.bf16 %v2002, %v2000
        %v2043 = vsel %vm1096, %v2040, 0
        %v2046 = vsel %vm1096, %v2041, 0
        %2048 = vmatpush.bf16.xpose.msra.mxu0 0
        %2049 = vmatpush.bf16.xpose.msra.mxu0 0
        %2050 = vmatpush.bf16.xpose.msra.mxu0 0
        %2051 = vmatpush.bf16.xpose.msra.mxu0 0
        %2052 = vmatpush.bf16.xpose.msra.mxu0 0
        %2053 = vmatpush.bf16.xpose.msra.mxu0 0
        %2054 = vmatpush.bf16.xpose.msra.mxu0 0
        %2055 = vmatpush.bf16.xpose.msra.mxu0 %v2046
        %2056 = vmatmul.bf16.gmra.mxu0 %v2043
        %v2057 = vpop.f32.mrf.mxu0
        %v2058 = vadd.f32 0.0, %v2057
        %v2059 = vpop.f32.mrf.mxu0
        %2060 = vdwg.mxu0
        %v2061 = vmul.f32 %v2058, 0.35355338
        %v2062 = vadd.f32 %v2061, %v1898
        %v2063 = vsel %vm1901, %v2062, -inf
        %2064 = vmax.xlane.f32.xlu0 %v2063
        %v2065 = vpop.xlane.xlu0 %2064
        %v2066 = vsub.f32 %v2062, %v2065
        %v2067 = vmul.f32 %v2066, 1.442695
        %v2068 = vpow.pop %v2067
        %v2069 = vsel %vm1901, %v2068, 0.0
        %2070 = vadd.xlane.f32.xlu0 %v2069
        %v2071 = vpop.xlane.xlu0 %2070
        %v2072 = vrcp.pop %v2071
        %v2073 = vmul.f32 %v2068, %v2072
        %v2074 = vpack.c.bf16 %v2073, %v2073
        %v2075 = vpack.c.bf16 %v2038, %v2036
        %v2077 = vsel %vm1901, %v2074, 0
        %2079 = vmatpush.bf16.msra.mxu0 0
        %2080 = vmatpush.bf16.msra.mxu0 0
        %2081 = vmatpush.bf16.msra.mxu0 0
        %2082 = vmatpush.bf16.msra.mxu0 0
        %2083 = vmatpush.bf16.msra.mxu0 0
        %2084 = vmatpush.bf16.msra.mxu0 0
        %2085 = vmatpush.bf16.msra.mxu0 0
        %2086 = vmatpush.bf16.msra.mxu0 %v2075
        %2087 = vmatmul.bf16.gmra.mxu0 %v2077
        %v2088 = vpop.f32.mrf.mxu0
        %v2089 = vadd.f32 0.0, %v2088
        %v2090 = vpop.f32.mrf.mxu0
        %2091 = vdwg.mxu0
        %v2092 = vpack.c.bf16 %v2089, %v2089
        %s2093 = scalar_lea.vmem %s943, 4
        %v2094 = vld [vmem:[%s2093] sm:$0xf]
        %v2096 = vsel %vm1096, %v2092, 0
        %v2099 = vsel %vm1133, %v2094, 0
        %2101 = vmatpush.bf16.msra.mxu0 0
        %2102 = vmatpush.bf16.msra.mxu0 0
        %2103 = vmatpush.bf16.msra.mxu0 0
        %2104 = vmatpush.bf16.msra.mxu0 0
        %2105 = vmatpush.bf16.msra.mxu0 0
        %2106 = vmatpush.bf16.msra.mxu0 0
        %2107 = vmatpush.bf16.msra.mxu0 0
        %2108 = vmatpush.bf16.msra.mxu0 %v2099
        %2109 = vmatmul.bf16.gmra.mxu0 %v2096
        %v2110 = vpop.f32.mrf.mxu0
        %v2111 = vadd.f32 0.0, %v2110
        %v2112 = vpop.f32.mrf.mxu0
        %2113 = vdwg.mxu0
        %v2115 = vsel %vm1096, %v1931, 0
        %v2118 = vsel %vm1133, %v1932, 0
        %2120 = vmatpush.bf16.msra.mxu0 0
        %2121 = vmatpush.bf16.msra.mxu0 0
        %2122 = vmatpush.bf16.msra.mxu0 0
        %2123 = vmatpush.bf16.msra.mxu0 0
        %2124 = vmatpush.bf16.msra.mxu0 0
        %2125 = vmatpush.bf16.msra.mxu0 0
        %2126 = vmatpush.bf16.msra.mxu0 0
        %2127 = vmatpush.bf16.msra.mxu0 %v2118
        %2128 = vmatmul.bf16.gmra.mxu0 %v2115
        %v2129 = vpop.f32.mrf.mxu0
        %v2130 = vadd.f32 %v2111, %v2129
        %v2131 = vpop.f32.mrf.mxu0
        %2132 = vdwg.mxu0
        %s2133 = scalar_lea.vmem %s934, 32
        %v2134 = vld [vmem:[%s2133] sm:$0xf]
        %v2135 = vld [vmem:[%s2133 + $0x4] sm:$0xf]
        %v2136 = vld [vmem:[%s2133 + $0x8] sm:$0xf]
        %v2137 = vld [vmem:[%s2133 + $0xc] sm:$0xf]
        %s2138 = scalar_lea.vmem %s938, 2
        %v2139 = vld [vmem:[%s2138] sm:$0x1]
        %v2141 = vperm.slane %v2139, 0
        %v2147 = vunpack.c.l.b16 %v2134
        %v2148 = vunpack.c.l.b16 %v2135
        %v2149 = vunpack.c.l.b16 %v2136
        %v2150 = vunpack.c.l.b16 %v2137
        %v2151 = vpack.c.b16 %v2148, %v2147
        %v2152 = vpack.c.b16 %v2150, %v2149
        %2155 = vmatpush.bf16.msra.mxu0 0
        %2156 = vmatpush.bf16.msra.mxu0 0
        %2157 = vmatpush.bf16.msra.mxu0 0
        %2158 = vmatpush.bf16.msra.mxu0 0
        %2159 = vmatpush.bf16.msra.mxu0 0
        %2160 = vmatpush.bf16.msra.mxu0 0
        %2161 = vmatpush.bf16.msra.mxu0 %v2152
        %2162 = vmatpush.bf16.msra.mxu0 %v2151
        %2163 = vmatmul.bf16.gmra.mxu0 %v1785
        %v2164 = vpop.f32.mrf.mxu0
        %v2165 = vadd.f32 %v2141, %v2164
        %v2166 = vpop.f32.mrf.mxu0
        %2167 = vdwg.mxu0
        %s2168 = scalar_lea.vmem %s934, 96
        %v2169 = vld [vmem:[%s2168] sm:$0xf]
        %v2170 = vld [vmem:[%s2168 + $0x4] sm:$0xf]
        %v2171 = vld [vmem:[%s2168 + $0x8] sm:$0xf]
        %v2172 = vld [vmem:[%s2168 + $0xc] sm:$0xf]
        %s2173 = scalar_lea.vmem %s938, 6
        %v2174 = vld [vmem:[%s2173] sm:$0x1]
        %v2176 = vperm.slane %v2174, 0
        %v2182 = vunpack.c.l.b16 %v2169
        %v2183 = vunpack.c.l.b16 %v2170
        %v2184 = vunpack.c.l.b16 %v2171
        %v2185 = vunpack.c.l.b16 %v2172
        %v2186 = vpack.c.b16 %v2183, %v2182
        %v2187 = vpack.c.b16 %v2185, %v2184
        %2190 = vmatpush.bf16.msra.mxu0 0
        %2191 = vmatpush.bf16.msra.mxu0 0
        %2192 = vmatpush.bf16.msra.mxu0 0
        %2193 = vmatpush.bf16.msra.mxu0 0
        %2194 = vmatpush.bf16.msra.mxu0 0
        %2195 = vmatpush.bf16.msra.mxu0 0
        %2196 = vmatpush.bf16.msra.mxu0 %v2187
        %2197 = vmatpush.bf16.msra.mxu0 %v2186
        %2198 = vmatmul.bf16.gmra.mxu0 %v1823
        %v2199 = vpop.f32.mrf.mxu0
        %v2200 = vadd.f32 %v2176, %v2199
        %v2201 = vpop.f32.mrf.mxu0
        %v2202 = vadd.f32 %v2176, %v2201
        %2203 = vdwg.mxu0
        %s2204 = scalar_lea.vmem %s934, 160
        %v2205 = vld [vmem:[%s2204] sm:$0xf]
        %v2206 = vld [vmem:[%s2204 + $0x4] sm:$0xf]
        %v2207 = vld [vmem:[%s2204 + $0x8] sm:$0xf]
        %v2208 = vld [vmem:[%s2204 + $0xc] sm:$0xf]
        %s2209 = scalar_lea.vmem %s938, 10
        %v2210 = vld [vmem:[%s2209] sm:$0x1]
        %v2212 = vperm.slane %v2210, 0
        %v2218 = vunpack.c.l.b16 %v2205
        %v2219 = vunpack.c.l.b16 %v2206
        %v2220 = vunpack.c.l.b16 %v2207
        %v2221 = vunpack.c.l.b16 %v2208
        %v2222 = vpack.c.b16 %v2219, %v2218
        %v2223 = vpack.c.b16 %v2221, %v2220
        %2226 = vmatpush.bf16.msra.mxu0 0
        %2227 = vmatpush.bf16.msra.mxu0 0
        %2228 = vmatpush.bf16.msra.mxu0 0
        %2229 = vmatpush.bf16.msra.mxu0 0
        %2230 = vmatpush.bf16.msra.mxu0 0
        %2231 = vmatpush.bf16.msra.mxu0 0
        %2232 = vmatpush.bf16.msra.mxu0 %v2223
        %2233 = vmatpush.bf16.msra.mxu0 %v2222
        %2234 = vmatmul.bf16.gmra.mxu0 %v1823
        %v2235 = vpop.f32.mrf.mxu0
        %v2236 = vadd.f32 %v2212, %v2235
        %v2237 = vpop.f32.mrf.mxu0
        %v2238 = vadd.f32 %v2212, %v2237
        %2239 = vdwg.mxu0
        %v2240 = vpack.c.bf16 %v2165, %v2165
        %v2241 = vpack.c.bf16 %v2202, %v2200
        %v2243 = vsel %vm1096, %v2240, 0
        %v2246 = vsel %vm1096, %v2241, 0
        %2248 = vmatpush.bf16.xpose.msra.mxu0 0
        %2249 = vmatpush.bf16.xpose.msra.mxu0 0
        %2250 = vmatpush.bf16.xpose.msra.mxu0 0
        %2251 = vmatpush.bf16.xpose.msra.mxu0 0
        %2252 = vmatpush.bf16.xpose.msra.mxu0 0
        %2253 = vmatpush.bf16.xpose.msra.mxu0 0
        %2254 = vmatpush.bf16.xpose.msra.mxu0 0
        %2255 = vmatpush.bf16.xpose.msra.mxu0 %v2246
        %2256 = vmatmul.bf16.gmra.mxu0 %v2243
        %v2257 = vpop.f32.mrf.mxu0
        %v2258 = vadd.f32 0.0, %v2257
        %v2259 = vpop.f32.mrf.mxu0
        %2260 = vdwg.mxu0
        %v2261 = vmul.f32 %v2258, 0.35355338
        %v2262 = vadd.f32 %v2261, %v1898
        %v2263 = vsel %vm1901, %v2262, -inf
        %2264 = vmax.xlane.f32.xlu0 %v2263
        %v2265 = vpop.xlane.xlu0 %2264
        %v2266 = vsub.f32 %v2262, %v2265
        %v2267 = vmul.f32 %v2266, 1.442695
        %v2268 = vpow.pop %v2267
        %v2269 = vsel %vm1901, %v2268, 0.0
        %2270 = vadd.xlane.f32.xlu0 %v2269
        %v2271 = vpop.xlane.xlu0 %2270
        %v2272 = vrcp.pop %v2271
        %v2273 = vmul.f32 %v2268, %v2272
        %v2274 = vpack.c.bf16 %v2273, %v2273
        %v2275 = vpack.c.bf16 %v2238, %v2236
        %v2277 = vsel %vm1901, %v2274, 0
        %2279 = vmatpush.bf16.msra.mxu0 0
        %2280 = vmatpush.bf16.msra.mxu0 0
        %2281 = vmatpush.bf16.msra.mxu0 0
        %2282 = vmatpush.bf16.msra.mxu0 0
        %2283 = vmatpush.bf16.msra.mxu0 0
        %2284 = vmatpush.bf16.msra.mxu0 0
        %2285 = vmatpush.bf16.msra.mxu0 0
        %2286 = vmatpush.bf16.msra.mxu0 %v2275
        %2287 = vmatmul.bf16.gmra.mxu0 %v2277
        %v2288 = vpop.f32.mrf.mxu0
        %v2289 = vadd.f32 0.0, %v2288
        %v2290 = vpop.f32.mrf.mxu0
        %2291 = vdwg.mxu0
        %v2292 = vpack.c.bf16 %v2289, %v2289
        %s2293 = scalar_lea.vmem %s943, 8
        %v2294 = vld [vmem:[%s2293] sm:$0xf]
        %v2296 = vsel %vm1096, %v2292, 0
        %v2299 = vsel %vm1133, %v2294, 0
        %2301 = vmatpush.bf16.msra.mxu0 0
        %2302 = vmatpush.bf16.msra.mxu0 0
        %2303 = vmatpush.bf16.msra.mxu0 0
        %2304 = vmatpush.bf16.msra.mxu0 0
        %2305 = vmatpush.bf16.msra.mxu0 0
        %2306 = vmatpush.bf16.msra.mxu0 0
        %2307 = vmatpush.bf16.msra.mxu0 0
        %2308 = vmatpush.bf16.msra.mxu0 %v2299
        %2309 = vmatmul.bf16.gmra.mxu0 %v2296
        %v2310 = vpop.f32.mrf.mxu0
        %v2311 = vadd.f32 0.0, %v2310
        %v2312 = vpop.f32.mrf.mxu0
        %2313 = vdwg.mxu0
        %v2314 = vadd.f32 %v2130, %v2311
        %s2315 = scalar_lea.vmem %s934, 48
        %v2316 = vld [vmem:[%s2315] sm:$0xf]
        %v2317 = vld [vmem:[%s2315 + $0x4] sm:$0xf]
        %v2318 = vld [vmem:[%s2315 + $0x8] sm:$0xf]
        %v2319 = vld [vmem:[%s2315 + $0xc] sm:$0xf]
        %s2320 = scalar_lea.vmem %s938, 3
        %v2321 = vld [vmem:[%s2320] sm:$0x1]
        %v2323 = vperm.slane %v2321, 0
        %v2329 = vunpack.c.l.b16 %v2316
        %v2330 = vunpack.c.l.b16 %v2317
        %v2331 = vunpack.c.l.b16 %v2318
        %v2332 = vunpack.c.l.b16 %v2319
        %v2333 = vpack.c.b16 %v2330, %v2329
        %v2334 = vpack.c.b16 %v2332, %v2331
        %2337 = vmatpush.bf16.msra.mxu0 0
        %2338 = vmatpush.bf16.msra.mxu0 0
        %2339 = vmatpush.bf16.msra.mxu0 0
        %2340 = vmatpush.bf16.msra.mxu0 0
        %2341 = vmatpush.bf16.msra.mxu0 0
        %2342 = vmatpush.bf16.msra.mxu0 0
        %2343 = vmatpush.bf16.msra.mxu0 %v2334
        %2344 = vmatpush.bf16.msra.mxu0 %v2333
        %2345 = vmatmul.bf16.gmra.mxu0 %v1785
        %v2346 = vpop.f32.mrf.mxu0
        %v2347 = vadd.f32 %v2323, %v2346
        %v2348 = vpop.f32.mrf.mxu0
        %2349 = vdwg.mxu0
        %s2350 = scalar_lea.vmem %s934, 112
        %v2351 = vld [vmem:[%s2350] sm:$0xf]
        %v2352 = vld [vmem:[%s2350 + $0x4] sm:$0xf]
        %v2353 = vld [vmem:[%s2350 + $0x8] sm:$0xf]
        %v2354 = vld [vmem:[%s2350 + $0xc] sm:$0xf]
        %s2355 = scalar_lea.vmem %s938, 7
        %v2356 = vld [vmem:[%s2355] sm:$0x1]
        %v2358 = vperm.slane %v2356, 0
        %v2364 = vunpack.c.l.b16 %v2351
        %v2365 = vunpack.c.l.b16 %v2352
        %v2366 = vunpack.c.l.b16 %v2353
        %v2367 = vunpack.c.l.b16 %v2354
        %v2368 = vpack.c.b16 %v2365, %v2364
        %v2369 = vpack.c.b16 %v2367, %v2366
        %2372 = vmatpush.bf16.msra.mxu0 0
        %2373 = vmatpush.bf16.msra.mxu0 0
        %2374 = vmatpush.bf16.msra.mxu0 0
        %2375 = vmatpush.bf16.msra.mxu0 0
        %2376 = vmatpush.bf16.msra.mxu0 0
        %2377 = vmatpush.bf16.msra.mxu0 0
        %2378 = vmatpush.bf16.msra.mxu0 %v2369
        %2379 = vmatpush.bf16.msra.mxu0 %v2368
        %2380 = vmatmul.bf16.gmra.mxu0 %v1823
        %v2381 = vpop.f32.mrf.mxu0
        %v2382 = vadd.f32 %v2358, %v2381
        %v2383 = vpop.f32.mrf.mxu0
        %v2384 = vadd.f32 %v2358, %v2383
        %2385 = vdwg.mxu0
        %s2386 = scalar_lea.vmem %s934, 176
        %v2387 = vld [vmem:[%s2386] sm:$0xf]
        %v2388 = vld [vmem:[%s2386 + $0x4] sm:$0xf]
        %v2389 = vld [vmem:[%s2386 + $0x8] sm:$0xf]
        %v2390 = vld [vmem:[%s2386 + $0xc] sm:$0xf]
        %s2391 = scalar_lea.vmem %s938, 11
        %v2392 = vld [vmem:[%s2391] sm:$0x1]
        %v2394 = vperm.slane %v2392, 0
        %v2400 = vunpack.c.l.b16 %v2387
        %v2401 = vunpack.c.l.b16 %v2388
        %v2402 = vunpack.c.l.b16 %v2389
        %v2403 = vunpack.c.l.b16 %v2390
        %v2404 = vpack.c.b16 %v2401, %v2400
        %v2405 = vpack.c.b16 %v2403, %v2402
        %2408 = vmatpush.bf16.msra.mxu0 0
        %2409 = vmatpush.bf16.msra.mxu0 0
        %2410 = vmatpush.bf16.msra.mxu0 0
        %2411 = vmatpush.bf16.msra.mxu0 0
        %2412 = vmatpush.bf16.msra.mxu0 0
        %2413 = vmatpush.bf16.msra.mxu0 0
        %2414 = vmatpush.bf16.msra.mxu0 %v2405
        %2415 = vmatpush.bf16.msra.mxu0 %v2404
        %2416 = vmatmul.bf16.gmra.mxu0 %v1823
        %v2417 = vpop.f32.mrf.mxu0
        %v2418 = vadd.f32 %v2394, %v2417
        %v2419 = vpop.f32.mrf.mxu0
        %v2420 = vadd.f32 %v2394, %v2419
        %2421 = vdwg.mxu0
        %v2422 = vpack.c.bf16 %v2347, %v2347
        %v2423 = vpack.c.bf16 %v2384, %v2382
        %v2425 = vsel %vm1096, %v2422, 0
        %v2428 = vsel %vm1096, %v2423, 0
        %2430 = vmatpush.bf16.xpose.msra.mxu0 0
        %2431 = vmatpush.bf16.xpose.msra.mxu0 0
        %2432 = vmatpush.bf16.xpose.msra.mxu0 0
        %2433 = vmatpush.bf16.xpose.msra.mxu0 0
        %2434 = vmatpush.bf16.xpose.msra.mxu0 0
        %2435 = vmatpush.bf16.xpose.msra.mxu0 0
        %2436 = vmatpush.bf16.xpose.msra.mxu0 0
        %2437 = vmatpush.bf16.xpose.msra.mxu0 %v2428
        %2438 = vmatmul.bf16.gmra.mxu0 %v2425
        %v2439 = vpop.f32.mrf.mxu0
        %v2440 = vadd.f32 0.0, %v2439
        %v2441 = vpop.f32.mrf.mxu0
        %2442 = vdwg.mxu0
        %v2443 = vmul.f32 %v2440, 0.35355338
        %v2444 = vadd.f32 %v2443, %v1898
        %v2445 = vsel %vm1901, %v2444, -inf
        %2446 = vmax.xlane.f32.xlu0 %v2445
        %v2447 = vpop.xlane.xlu0 %2446
        %v2448 = vsub.f32 %v2444, %v2447
        %v2449 = vmul.f32 %v2448, 1.442695
        %v2450 = vpow.pop %v2449
        %v2451 = vsel %vm1901, %v2450, 0.0
        %2452 = vadd.xlane.f32.xlu0 %v2451
        %v2453 = vpop.xlane.xlu0 %2452
        %v2454 = vrcp.pop %v2453
        %v2455 = vmul.f32 %v2450, %v2454
        %v2456 = vpack.c.bf16 %v2455, %v2455
        %v2457 = vpack.c.bf16 %v2420, %v2418
        %v2459 = vsel %vm1901, %v2456, 0
        %2461 = vmatpush.bf16.msra.mxu0 0
        %2462 = vmatpush.bf16.msra.mxu0 0
        %2463 = vmatpush.bf16.msra.mxu0 0
        %2464 = vmatpush.bf16.msra.mxu0 0
        %2465 = vmatpush.bf16.msra.mxu0 0
        %2466 = vmatpush.bf16.msra.mxu0 0
        %2467 = vmatpush.bf16.msra.mxu0 0
        %2468 = vmatpush.bf16.msra.mxu0 %v2457
        %2469 = vmatmul.bf16.gmra.mxu0 %v2459
        %v2470 = vpop.f32.mrf.mxu0
        %v2471 = vadd.f32 0.0, %v2470
        %v2472 = vpop.f32.mrf.mxu0
        %2473 = vdwg.mxu0
        %v2474 = vpack.c.bf16 %v2471, %v2471
        %s2475 = scalar_lea.vmem %s943, 12
        %v2476 = vld [vmem:[%s2475] sm:$0xf]
        %v2478 = vsel %vm1096, %v2474, 0
        %v2481 = vsel %vm1133, %v2476, 0
        %2483 = vmatpush.bf16.msra.mxu0 0
        %2484 = vmatpush.bf16.msra.mxu0 0
        %2485 = vmatpush.bf16.msra.mxu0 0
        %2486 = vmatpush.bf16.msra.mxu0 0
        %2487 = vmatpush.bf16.msra.mxu0 0
        %2488 = vmatpush.bf16.msra.mxu0 0
        %2489 = vmatpush.bf16.msra.mxu0 0
        %2490 = vmatpush.bf16.msra.mxu0 %v2481
        %2491 = vmatmul.bf16.gmra.mxu0 %v2478
        %v2492 = vpop.f32.mrf.mxu0
        %v2493 = vadd.f32 0.0, %v2492
        %v2494 = vpop.f32.mrf.mxu0
        %2495 = vdwg.mxu0
        %v2496 = vadd.f32 %v2314, %v2493
        %v2497 = vld [vmem:[%s946] sm:$0x1]
        %v2499 = vperm.slane %v2497, 0
        %v2501 = vadd.f32 %v2496, %v2499
        %v2502 = vadd.f32 %v2501, %v1760
        %v2503 = vld [vmem:[%s949] sm:$0x1]
        %v2504 = vld [vmem:[%s952] sm:$0x1]
        %v2505 = vsel %vm1007, %v2502, 0.0
        %2506 = vadd.xlane.f32.xlu0 %v2505
        %v2507 = vpop.xlane.xlu0 %2506
        %v2508 = vmul.f32 %v2507, %v1733
        %v2509 = vsub.f32 %v2502, %v2508
        %v2510 = vmul.f32 %v2509, %v2509
        %v2511 = vsel %vm1007, %v2510, 0.0
        %2512 = vadd.xlane.f32.xlu0 %v2511
        %v2513 = vpop.xlane.xlu0 %2512
        %v2514 = vmul.f32 %v2513, %v1733
        %v2515 = vadd.f32 %v2514, 1e-12
        %v2516 = vrsqrt.pop %v2515
        %v2517 = vmul.f32 %v2516, %v2515
        %v2518 = vmul.f32 %v2517, %v2516
        %v2519 = vmul.f32 0.5, %v2518
        %v2520 = vsub.f32 1.5, %v2519
        %v2521 = vmul.f32 %v2516, %v2520
        %vm2522 = vweird.f32 %v2515
        %vm2523 = vweird.f32 %v2516
        %vm2524 = vmor %vm2522, %vm2523
        %v2525 = vsel %vm2524, %v2516, %v2521
        %v2526 = vmul.f32 %v2509, %v2525
        %v2528 = vperm.slane %v2503, 0
        %v2530 = vmul.f32 %v2526, %v2528
        %v2532 = vperm.slane %v2504, 0
        %v2534 = vadd.f32 %v2530, %v2532
        %v2535 = vpack.c.bf16 %v2534, %v2534
        %v2536 = vld [vmem:[%s957] sm:$0xf]
        %v2537 = vld [vmem:[%s957 + $0x4] sm:$0xf]
        %v2538 = vld [vmem:[%s957 + $0x8] sm:$0xf]
        %v2539 = vld [vmem:[%s957 + $0xc] sm:$0xf]
        %v2540 = vld [vmem:[%s960] sm:$0x1]
        %v2542 = vperm.slane %v2540, 0
        %v2548 = vunpack.c.l.b16 %v2536
        %v2549 = vunpack.c.l.b16 %v2537
        %v2550 = vunpack.c.l.b16 %v2538
        %v2551 = vunpack.c.l.b16 %v2539
        %v2552 = vpack.c.b16 %v2549, %v2548
        %v2553 = vpack.c.b16 %v2551, %v2550
        %v2557 = vsel %vm1007, %v2535, 0
        %2559 = vmatpush.bf16.msra.mxu0 0
        %2560 = vmatpush.bf16.msra.mxu0 0
        %2561 = vmatpush.bf16.msra.mxu0 0
        %2562 = vmatpush.bf16.msra.mxu0 0
        %2563 = vmatpush.bf16.msra.mxu0 0
        %2564 = vmatpush.bf16.msra.mxu0 0
        %2565 = vmatpush.bf16.msra.mxu0 %v2553
        %2566 = vmatpush.bf16.msra.mxu0 %v2552
        %2567 = vmatmul.bf16.gmra.mxu0 %v2557
        %v2568 = vpop.f32.mrf.mxu0
        %v2569 = vadd.f32 %v2542, %v2568
        %v2570 = vpop.f32.mrf.mxu0
        %2571 = vdwg.mxu0
        %v2572 = vmul.f32 %v2569, 0.5
        %v2573 = vmul.f32 %v2569, 0.70710677
        %v2574 = vmul.f32 %v2573, %v2573
        %v2575 = vmin.f32 16.0, %v2574
        %v2576 = vmul.f32 %v2575, 2.1237322e-06
        %v2577 = vadd.f32 %v2576, 0.00028619796
        %v2578 = vmul.f32 %v2575, %v2577
        %v2579 = vadd.f32 %v2578, 0.0036580483
        %v2580 = vmul.f32 %v2575, %v2579
        %v2581 = vadd.f32 %v2580, 0.05243302
        %v2582 = vmul.f32 %v2575, %v2581
        %v2583 = vadd.f32 %v2582, 0.18741608
        %v2584 = vmul.f32 %v2575, %v2583
        %v2585 = vadd.f32 %v2584, 1.1283791
        %v2586 = vmul.f32 %v2573, %v2585
        %v2587 = vmul.f32 %v2575, 3.8918573e-05
        %v2588 = vadd.f32 %v2587, 0.001143296
        %v2589 = vmul.f32 %v2575, %v2588
        %v2590 = vadd.f32 %v2589, 0.014752088
        %v2591 = vmul.f32 %v2575, %v2590
        %v2592 = vadd.f32 %v2591, 0.112945676
        %v2593 = vmul.f32 %v2575, %v2592
        %v2594 = vadd.f32 %v2593, 0.4994258
        %v2595 = vmul.f32 %v2575, %v2594
        %v2596 = vadd.f32 %v2595, 1.0
        %v2597 = vrcp.pop %v2596
        %v2598 = vmul.f32 %v2596, %v2597
        %v2599 = vsub.f32 1.0, %v2598
        %v2600 = vmul.f32 %v2597, %v2599
        %v2601 = vadd.f32 %v2597, %v2600
        %vm2602 = vweird.f32 %v2596
        %vm2603 = vweird.f32 %v2597
        %vm2604 = vmor %vm2602, %vm2603
        %v2605 = vsel %vm2604, %v2597, %v2601
        %v2606 = vand.u32 2147483647, %v2596
        %vm2607 = vcmp.eq.f32.partialorder %v2606, 8.507059e+37
        %v2608 = vand.u32 %v2596, 2147483648
        %v2609 = vor.u32 1.1754944e-38, %v2608
        %v2610 = vsel %vm2607, %v2609, %v2605
        %v2611 = vmul.f32 %v2586, %v2610
        %v2612 = vmin.f32 %v2611, 1.0
        %v2613 = vmax.f32 %v2612, -1.0
        %v2614 = vadd.f32 %v2613, 1.0
        %v2615 = vmul.f32 %v2572, %v2614
        %v2616 = vpack.c.bf16 %v2615, %v2615
        %v2617 = vld [vmem:[%s965] sm:$0xf]
        %v2618 = vld [vmem:[%s965 + $0x4] sm:$0xf]
        %v2619 = vld [vmem:[%s965 + $0x8] sm:$0xf]
        %v2620 = vld [vmem:[%s965 + $0xc] sm:$0xf]
        %v2621 = vld [vmem:[%s965 + $0x10] sm:$0xf]
        %v2622 = vld [vmem:[%s965 + $0x14] sm:$0xf]
        %v2623 = vld [vmem:[%s965 + $0x18] sm:$0xf]
        %v2624 = vld [vmem:[%s965 + $0x1c] sm:$0xf]
        %v2625 = vld [vmem:[%s968] sm:$0x1]
        %v2627 = vperm.slane %v2625, 0
        %v2637 = vunpack.c.l.b16 %v2617
        %v2638 = vunpack.c.l.b16 %v2618
        %v2639 = vunpack.c.l.b16 %v2619
        %v2640 = vunpack.c.l.b16 %v2620
        %v2641 = vunpack.c.l.b16 %v2621
        %v2642 = vunpack.c.l.b16 %v2622
        %v2643 = vunpack.c.l.b16 %v2623
        %v2644 = vunpack.c.l.b16 %v2624
        %v2645 = vpack.c.b16 %v2638, %v2637
        %v2646 = vpack.c.b16 %v2640, %v2639
        %v2647 = vpack.c.b16 %v2642, %v2641
        %v2648 = vpack.c.b16 %v2644, %v2643
        %vm2653 = vcmask 523264
        %v2655 = vsel %vm2653, %v2616, 0
        %2657 = vmatpush.bf16.msra.mxu0 0
        %2658 = vmatpush.bf16.msra.mxu0 0
        %2659 = vmatpush.bf16.msra.mxu0 0
        %2660 = vmatpush.bf16.msra.mxu0 0
        %2661 = vmatpush.bf16.msra.mxu0 %v2648
        %2662 = vmatpush.bf16.msra.mxu0 %v2647
        %2663 = vmatpush.bf16.msra.mxu0 %v2646
        %2664 = vmatpush.bf16.msra.mxu0 %v2645
        %2665 = vmatmul.bf16.gmra.mxu0 %v2655
        %v2666 = vpop.f32.mrf.mxu0
        %v2667 = vadd.f32 %v2627, %v2666
        %v2668 = vpop.f32.mrf.mxu0
        %2669 = vdwg.mxu0
        %v2670 = vadd.f32 %v2667, %v2534
        %v2671 = vld [vmem:[%s971] sm:$0x1]
        %v2672 = vld [vmem:[%s974] sm:$0x1]
        %v2673 = vsel %vm1007, %v2670, 0.0
        %2674 = vadd.xlane.f32.xlu0 %v2673
        %v2675 = vpop.xlane.xlu0 %2674
        %v2676 = vmul.f32 %v2675, %v1733
        %v2677 = vsub.f32 %v2670, %v2676
        %v2678 = vmul.f32 %v2677, %v2677
        %v2679 = vsel %vm1007, %v2678, 0.0
        %2680 = vadd.xlane.f32.xlu0 %v2679
        %v2681 = vpop.xlane.xlu0 %2680
        %v2682 = vmul.f32 %v2681, %v1733
        %v2683 = vadd.f32 %v2682, 1e-12
        %v2684 = vrsqrt.pop %v2683
        %v2685 = vmul.f32 %v2684, %v2683
        %v2686 = vmul.f32 %v2685, %v2684
        %v2687 = vmul.f32 0.5, %v2686
        %v2688 = vsub.f32 1.5, %v2687
        %v2689 = vmul.f32 %v2684, %v2688
        %vm2690 = vweird.f32 %v2683
        %vm2691 = vweird.f32 %v2684
        %vm2692 = vmor %vm2690, %vm2691
        %v2693 = vsel %vm2692, %v2684, %v2689
        %v2694 = vmul.f32 %v2677, %v2693
        %v2696 = vperm.slane %v2671, 0
        %v2698 = vmul.f32 %v2694, %v2696
        %v2700 = vperm.slane %v2672, 0
        %v2702 = vadd.f32 %v2698, %v2700
        %2703 = vst.msk [vmem:[#allocation2] sm:$0xff] %vm1007, %v2702
        %p2704 = scmp.eq.s32.totalorder %s40, 1
        // Predicated region
        $region109: #{tpu_custom_call.1} parent=103 // pred_check
          %p2705 = pneg %p2704
        $region110: #{tpu_custom_call.1} parent=103 // pred_check_branch
          %2707 = sbr.rel (%p2705) target = $region112
        $region111: #{tpu_custom_call.1} parent=103 // pred_region
          %2708 = vst.msk [vmem:[%s898] sm:$0xff] %vm1007, %v2702
        $region112: #{tpu_custom_call.1} parent=103 // pred_fallthru
          _
        %s2709 = sand.u32 %s596, 1
        %s2710 = scalar_lea.sflag [#allocation4], %s2709
        %s2711 = sand.u32 %s596, 1
        %s2712 = smul.addr %s2711, 8
        %s2713 = scalar_lea.vmem [#allocation3], %s2712
        // Predicated region
        $region113: #{tpu_custom_call.1} parent=103 // pred_check
          %p2714 = pneg %p606
        $region114: #{tpu_custom_call.1} parent=103 // pred_check_branch
          %2716 = sbr.rel (%p2714) target = $region116
        $region115: #{tpu_custom_call.1} parent=103 // pred_region
          %2718 = vsyncadd %s2710, 0
          %s2719 = smul.addr %s39, 8
          %s2720 = scalar_lea.hbm %s21, %s2719
          %s2722 = sshll.u32 %s2713, 4
          %s2723 = int_to_ptr.vmem [resolvable:$true] %s2722
          %s2724 = sshll.u32 %s2720, 4
          %s2725 = int_to_ptr.hbm [resolvable:$true] %s2724
          %2727 = dma.vmem_to_hbm [thread:$0]  %s2723, 128, %s2725, %s2710
        $region116: #{tpu_custom_call.1} parent=103 // pred_fallthru
          _
      $region104: #{tpu_custom_call.1} parent=5 // pred_fallthru
        _
      %p2728 = scmp.le.s32.totalorder 2, %s30
      // Predicated region
      $region117: #{tpu_custom_call.1} parent=5 // pred_check
        %p2729 = pneg %p2728
      $region118: #{tpu_custom_call.1} parent=5 // pred_check_branch
        %2731 = sbr.rel (%p2729) target = $region120
      $region119: #{tpu_custom_call.1} parent=5 // pred_region
        %s2732 = ssub.s32 %s30, 2
        // Predicated region
        $region121: #{tpu_custom_call.1} parent=119 // pred_check
          %p2733 = pneg %p612
        $region122: #{tpu_custom_call.1} parent=119 // pred_check_branch
          %2735 = sbr.rel (%p2733) target = $region124
        $region123: #{tpu_custom_call.1} parent=119 // pred_region
          %s2736 = sand.u32 %s597, 1
          %s2737 = scalar_lea.sflag [#allocation4], %s2736
          %s2738 = sand.u32 %s597, 1
          %s2739 = smul.addr %s2738, 8
          %s2740 = scalar_lea.vmem [#allocation3], %s2739
          %2742 = dma.done %s2737, 128
        $region124: #{tpu_custom_call.1} parent=119 // pred_fallthru
          _
      $region120: #{tpu_custom_call.1} parent=5 // pred_fallthru
        _
    $region6: #{tpu_custom_call.1} parent=1 // loop_footer
      %s34 = sadd.s32 1, %s30
    $region7: #{tpu_custom_call.1} parent=1 // loop_footer_branch
      %29 = sbr.rel target = $region3
    $region8: #{tpu_custom_call.1} parent=1 // loop_exit
      _
    %2743 = vsyncpa [#allocation4], 1
    %s2744 = scalar_lea.sflag [#allocation4], 1
    %2745 = vsyncpa %s2744, 1

</llo_original>
